<compile_context>
chip_gen: v7x
topology: tpu7x:2x2x1
jax: 0.10.0
libtpu: 0.0.40
codegen_flags: <defaults>
</compile_context>

<pallas_src>
import jax
import jax.numpy as jnp
from jax.experimental import pallas as pl
from jax.experimental.pallas import tpu as pltpu

# ----------------------------- model hyper-params ---------------------------
B = 2          # batch
T = 8          # sequence length
E = 64         # bert hidden_size == embedding_dim
H = 32         # GRU hidden_dim
OUT = 2        # output_dim
NL = 2         # n_layers (bidirectional, dropout between layers is identity at eval)
NDIR = 2       # bidirectional
VOCAB = 128
G = 3 * H      # gates per direction (PyTorch order: r, z, n)

# Layer 0 consumes E features, layers >0 consume 2H; stacking all layers' input
# weights in a single array requires E == 2H.
assert E == 2 * H, "stacked GRU input weights assume embedding_dim == 2*hidden_dim"


# ------------------------------- Pallas kernel ------------------------------
def gru_sentiment_kernel(emb_ref,      # [B, T, E]           batch-first embeddings
                         w_ihc_ref,    # [NL, E, NDIR*G]     input->gates, both dirs concat
                         b_gx_ref,     # [NL, 1, NDIR*G]     folded bias: (bi_r+bh_r, bi_z+bh_z, bi_n) per dir
                         w_hh_ref,     # [NL, NDIR, H, G]    hidden->gates
                         b_hn_ref,     # [NL, NDIR, 1, H]    b_hn (stays inside r * (.) term)
                         w_out_ref,    # [2H, OUT]
                         b_out_ref,    # [1, OUT]
                         out_ref):     # [B, OUT]

    def gru_cell(gx_t, gh_t, h_prev, bhn):
        # gx_t already contains b_ih (+ b_hh for the r/z columns).
        r = jax.nn.sigmoid(gx_t[:, 0:H] + gh_t[:, 0:H])
        z = jax.nn.sigmoid(gx_t[:, H:2 * H] + gh_t[:, H:2 * H])
        n = jnp.tanh(gx_t[:, 2 * H:3 * H] + r * (gh_t[:, 2 * H:3 * H] + bhn))
        return (1.0 - z) * n + z * h_prev

    # Layer-0 input: per-batch [T, E] rows straight from the batch-first embeddings.
    x_rows = [emb_ref[bb] for bb in range(B)]

    h_f = jnp.zeros((B, H), jnp.float32)
    h_b = jnp.zeros((B, H), jnp.float32)

    for layer in range(NL):                                  # static loop
        w_cat = w_ihc_ref[layer]                             # [IN, 2G]
        bgx = jnp.broadcast_to(b_gx_ref[layer], (T, NDIR * G))
        # Hoisted input projection: all T steps and both directions per batch row,
        # with the gate biases folded in -> nothing but gh remains per step.
        gx_rows = [jnp.dot(x_rows[bb], w_cat, preferred_element_type=jnp.float32) + bgx
                   for bb in range(B)]                       # each [T, 2G]

        wh_f = w_hh_ref[layer, 0]                            # [H, G]
        wh_b = w_hh_ref[layer, 1]
        # Broadcast once per layer (hoisted; JAX does not CSE broadcast_in_dim).
        bhn_f = jnp.broadcast_to(b_hn_ref[layer, 0], (B, H))
        bhn_b = jnp.broadcast_to(b_hn_ref[layer, 1], (B, H))

        h_f = jnp.zeros((B, H), jnp.float32)
        h_b = jnp.zeros((B, H), jnp.float32)
        outs_f = [None] * T
        outs_b = [None] * T

        for s in range(T):                                   # fully unrolled; h_* stay in vregs
            tf, tb = s, T - 1 - s
            # Two independent recurrent matmuls, issued back-to-back (2-way ILP).
            gh_f = jnp.dot(h_f, wh_f, preferred_element_type=jnp.float32)
            gh_b = jnp.dot(h_b, wh_b, preferred_element_type=jnp.float32)
            # Precomputed input gates for this step (off the serial dependency chain).
            gxs_f = jnp.concatenate(
                [gx_rows[bb][tf:tf + 1, 0:G] for bb in range(B)], axis=0)        # [B, G]
            gxs_b = jnp.concatenate(
                [gx_rows[bb][tb:tb + 1, G:2 * G] for bb in range(B)], axis=0)    # [B, G]
            h_f = gru_cell(gxs_f, gh_f, h_f, bhn_f)
            h_b = gru_cell(gxs_b, gh_b, h_b, bhn_b)
            outs_f[tf] = h_f
            outs_b[tb] = h_b

        if layer < NL - 1:
            # Build the next layer's per-batch [T, 2H] inputs in registers
            # (batched value construction; no per-step partial VMEM stores).
            x_rows = [
                jnp.concatenate(
                    [jnp.concatenate([outs_f[t][bb:bb + 1, :],
                                      outs_b[t][bb:bb + 1, :]], axis=1)
                     for t in range(T)],
                    axis=0)
                for bb in range(B)
            ]

    # hidden[-2] = last-layer forward final state, hidden[-1] = backward final state.
    # Dropout is identity at inference.
    hidden = jnp.concatenate([h_f, h_b], axis=-1)            # [B, 2H]
    out_ref[...] = (jnp.dot(hidden, w_out_ref[...],
                            preferred_element_type=jnp.float32)
                    + b_out_ref[...])


# --------------------------------- wrapper ----------------------------------
@jax.jit
def bert_gru_sentiment(embedded, w_ih, w_hh, b_ih, b_hh, w_out, b_out):
    """embedded: [B, T, E] float32 (i.e. bert(text)[0]). Returns [B, OUT]."""
    # Weight prep (one-time, outside the kernel):
    #  - concatenate both directions' input weights along the gate axis,
    #  - fold b_ih (+ b_hh for the r/z gates) into the hoisted gx bias,
    #  - keep b_hn separate (it is multiplied by r inside the cell).
    w_ih_cat = jnp.concatenate([w_ih[:, 0], w_ih[:, 1]], axis=-1)       # [NL, E, 2G]
    b_fold = jnp.concatenate([b_ih[..., :2 * H] + b_hh[..., :2 * H],
                              b_ih[..., 2 * H:]], axis=-1)              # [NL, NDIR, 1, G]
    b_gx = jnp.concatenate([b_fold[:, 0], b_fold[:, 1]], axis=-1)       # [NL, 1, 2G]
    b_hn = b_hh[..., 2 * H:]                                            # [NL, NDIR, 1, H]

    vmem = pl.BlockSpec(memory_space=pltpu.MemorySpace.VMEM)
    return pl.pallas_call(
        gru_sentiment_kernel,
        out_shape=jax.ShapeDtypeStruct((B, OUT), jnp.float32),
        in_specs=[vmem] * 7,
        out_specs=vmem,
    )(embedded, w_ih_cat, b_gx, w_hh, b_hn, w_out, b_out)


# ---------------------------- pure-JAX reference ----------------------------
def reference_forward(embedded, w_ih, w_hh, b_ih, b_hh, w_out, b_out):
    x = embedded                                  # [B, T, IN]
    finals = [None, None]
    for layer in range(NL):
        dir_outs = []
        for d in range(NDIR):
            wi, wh = w_ih[layer, d], w_hh[layer, d]
            bi, bh = b_ih[layer, d], b_hh[layer, d]
            h = jnp.zeros((B, H), jnp.float32)
            seq = [None] * T
            order = range(T) if d == 0 else range(T - 1, -1, -1)
            for t in order:
                gx = x[:, t, :] @ wi + bi
                gh = h @ wh + bh
                r = jax.nn.sigmoid(gx[:, 0:H] + gh[:, 0:H])
                z = jax.nn.sigmoid(gx[:, H:2 * H] + gh[:, H:2 * H])
                n = jnp.tanh(gx[:, 2 * H:3 * H] + r * gh[:, 2 * H:3 * H])
                h = (1.0 - z) * n + z * h
                seq[t] = h
            dir_outs.append(jnp.stack(seq, axis=1))
            if layer == NL - 1:
                finals[d] = h
        x = jnp.concatenate(dir_outs, axis=-1)
    hidden = jnp.concatenate(finals, axis=1)      # [B, 2H]
    return hidden @ w_out + b_out


# ----------------------------------- main ------------------------------------
if __name__ == "__main__":
    key = jax.random.PRNGKey(0)
    ks = jax.random.split(key, 8)

    # TODO(synk): the frozen BERT encoder is not reimplemented; a deterministic
    # token-embedding lookup stands in for `bert(text)[0]`.
    emb_table = 0.1 * jax.random.normal(ks[0], (VOCAB, E), jnp.float32)
    text = jax.random.randint(ks[1], (B, T), 0, VOCAB, jnp.int32)
    embedded = emb_table[text]                    # [B, T, E]

    # GRU parameters (PyTorch shapes are [3H, IN]/[3H, H]; stored pre-transposed).
    w_ih = 0.1 * jax.random.normal(ks[2], (NL, NDIR, E, G), jnp.float32)
    w_hh = 0.1 * jax.random.normal(ks[3], (NL, NDIR, H, G), jnp.float32)
    b_ih = 0.1 * jax.random.normal(ks[4], (NL, NDIR, 1, G), jnp.float32)
    b_hh = 0.1 * jax.random.normal(ks[5], (NL, NDIR, 1, G), jnp.float32)

    # Output linear: nn.Linear(2H, OUT) -> stored as [2H, OUT].
    w_out = 0.1 * jax.random.normal(ks[6], (2 * H, OUT), jnp.float32)
    b_out = 0.1 * jax.random.normal(ks[7], (1, OUT), jnp.float32)

    out = bert_gru_sentiment(embedded, w_ih, w_hh, b_ih, b_hh, w_out, b_out)
    out = jax.block_until_ready(out)

    ref = reference_forward(embedded, w_ih, w_hh, b_ih, b_hh, w_out, b_out)
    assert out.shape == (B, OUT)
    assert jnp.allclose(out, ref, atol=1e-3, rtol=1e-3), (out, ref)

    print("KERNEL_OK")
</pallas_src>

<mosaic_0001>
module attributes {stable_mosaic.version = 11 : i64} {
  func.func @gru_sentiment_kernel(%arg0: memref<2x8x64xf32, #tpu.memory_space<vmem>>, %arg1: memref<2x64x192xf32, #tpu.memory_space<vmem>>, %arg2: memref<2x1x192xf32, #tpu.memory_space<vmem>>, %arg3: memref<2x2x32x96xf32, #tpu.memory_space<vmem>>, %arg4: memref<2x2x1x32xf32, #tpu.memory_space<vmem>>, %arg5: memref<64x2xf32, #tpu.memory_space<vmem>>, %arg6: memref<1x2xf32, #tpu.memory_space<vmem>>, %arg7: memref<2x2xf32, #tpu.memory_space<vmem>>) attributes {dimension_semantics = [], scalar_prefetch = 0 : i64, scratch_operands = 0 : i64, tpu.core_type = #tpu.core_type<tc>} {
    %c0 = arith.constant 0 : index
    %c0_0 = arith.constant 0 : index
    %c0_1 = arith.constant 0 : index
    %0 = vector.load %arg0[%c0, %c0_0, %c0_1] : memref<2x8x64xf32, #tpu.memory_space<vmem>>, vector<1x8x64xf32>
    %1 = vector.shape_cast %0 : vector<1x8x64xf32> to vector<8x64xf32>
    %c1 = arith.constant 1 : index
    %c0_2 = arith.constant 0 : index
    %c0_3 = arith.constant 0 : index
    %2 = vector.load %arg0[%c1, %c0_2, %c0_3] : memref<2x8x64xf32, #tpu.memory_space<vmem>>, vector<1x8x64xf32>
    %3 = vector.shape_cast %2 : vector<1x8x64xf32> to vector<8x64xf32>
    %c0_4 = arith.constant 0 : index
    %c0_5 = arith.constant 0 : index
    %c0_6 = arith.constant 0 : index
    %4 = vector.load %arg1[%c0_4, %c0_5, %c0_6] : memref<2x64x192xf32, #tpu.memory_space<vmem>>, vector<1x64x192xf32>
    %5 = vector.shape_cast %4 : vector<1x64x192xf32> to vector<64x192xf32>
    %c0_7 = arith.constant 0 : index
    %c0_8 = arith.constant 0 : index
    %c0_9 = arith.constant 0 : index
    %6 = vector.load %arg2[%c0_7, %c0_8, %c0_9] : memref<2x1x192xf32, #tpu.memory_space<vmem>>, vector<1x1x192xf32>
    %7 = vector.shape_cast %6 : vector<1x1x192xf32> to vector<1x192xf32>
    %8 = vector.shape_cast %7 : vector<1x192xf32> to vector<1x192xf32>
    %9 = vector.broadcast %8 : vector<1x192xf32> to vector<8x192xf32>
    %cst = arith.constant dense<0.000000e+00> : vector<8x192xf32>
    %10 = tpu.matmul %1, %5, %cst {dimension_numbers = #tpu.dot_dimension_numbers<[1], [0], [0], [1], [0, 0, 1, 1], [], []>} : vector<8x64xf32>, vector<64x192xf32>, vector<8x192xf32> -> vector<8x192xf32>
    %11 = arith.addf %10, %9 : vector<8x192xf32>
    %cst_10 = arith.constant dense<0.000000e+00> : vector<8x192xf32>
    %12 = tpu.matmul %3, %5, %cst_10 {dimension_numbers = #tpu.dot_dimension_numbers<[1], [0], [0], [1], [0, 0, 1, 1], [], []>} : vector<8x64xf32>, vector<64x192xf32>, vector<8x192xf32> -> vector<8x192xf32>
    %13 = arith.addf %12, %9 : vector<8x192xf32>
    %c0_11 = arith.constant 0 : index
    %c0_12 = arith.constant 0 : index
    %c0_13 = arith.constant 0 : index
    %c0_14 = arith.constant 0 : index
    %14 = vector.load %arg3[%c0_11, %c0_12, %c0_13, %c0_14] : memref<2x2x32x96xf32, #tpu.memory_space<vmem>>, vector<1x1x32x96xf32>
    %15 = vector.shape_cast %14 : vector<1x1x32x96xf32> to vector<32x96xf32>
    %c0_15 = arith.constant 0 : index
    %c1_16 = arith.constant 1 : index
    %c0_17 = arith.constant 0 : index
    %c0_18 = arith.constant 0 : index
    %16 = vector.load %arg3[%c0_15, %c1_16, %c0_17, %c0_18] : memref<2x2x32x96xf32, #tpu.memory_space<vmem>>, vector<1x1x32x96xf32>
    %17 = vector.shape_cast %16 : vector<1x1x32x96xf32> to vector<32x96xf32>
    %c0_19 = arith.constant 0 : index
    %c0_20 = arith.constant 0 : index
    %c0_21 = arith.constant 0 : index
    %c0_22 = arith.constant 0 : index
    %18 = vector.load %arg4[%c0_19, %c0_20, %c0_21, %c0_22] : memref<2x2x1x32xf32, #tpu.memory_space<vmem>>, vector<1x1x1x32xf32>
    %19 = vector.shape_cast %18 : vector<1x1x1x32xf32> to vector<1x32xf32>
    %20 = vector.shape_cast %19 : vector<1x32xf32> to vector<1x32xf32>
    %21 = vector.broadcast %20 : vector<1x32xf32> to vector<2x32xf32>
    %c0_23 = arith.constant 0 : index
    %c1_24 = arith.constant 1 : index
    %c0_25 = arith.constant 0 : index
    %c0_26 = arith.constant 0 : index
    %22 = vector.load %arg4[%c0_23, %c1_24, %c0_25, %c0_26] : memref<2x2x1x32xf32, #tpu.memory_space<vmem>>, vector<1x1x1x32xf32>
    %23 = vector.shape_cast %22 : vector<1x1x1x32xf32> to vector<1x32xf32>
    %24 = vector.shape_cast %23 : vector<1x32xf32> to vector<1x32xf32>
    %25 = vector.broadcast %24 : vector<1x32xf32> to vector<2x32xf32>
    %cst_27 = arith.constant 0.000000e+00 : f32
    %26 = vector.broadcast %cst_27 : f32 to vector<2x32xf32>
    %cst_28 = arith.constant 0.000000e+00 : f32
    %27 = vector.broadcast %cst_28 : f32 to vector<2x32xf32>
    %cst_29 = arith.constant dense<0.000000e+00> : vector<2x96xf32>
    %28 = tpu.matmul %26, %15, %cst_29 {dimension_numbers = #tpu.dot_dimension_numbers<[1], [0], [0], [1], [0, 0, 1, 1], [], []>} : vector<2x32xf32>, vector<32x96xf32>, vector<2x96xf32> -> vector<2x96xf32>
    %cst_30 = arith.constant dense<0.000000e+00> : vector<2x96xf32>
    %29 = tpu.matmul %27, %17, %cst_30 {dimension_numbers = #tpu.dot_dimension_numbers<[1], [0], [0], [1], [0, 0, 1, 1], [], []>} : vector<2x32xf32>, vector<32x96xf32>, vector<2x96xf32> -> vector<2x96xf32>
    %30 = vector.extract_strided_slice %11 {offsets = [0, 0], sizes = [1, 96], strides = [1, 1]} : vector<8x192xf32> to vector<1x96xf32>
    %31 = vector.extract_strided_slice %13 {offsets = [0, 0], sizes = [1, 96], strides = [1, 1]} : vector<8x192xf32> to vector<1x96xf32>
    %32 = tpu.concatenate %30, %31 in 0 : vector<1x96xf32>, vector<1x96xf32> -> vector<2x96xf32>
    %33 = vector.extract_strided_slice %11 {offsets = [7, 96], sizes = [1, 96], strides = [1, 1]} : vector<8x192xf32> to vector<1x96xf32>
    %34 = vector.extract_strided_slice %13 {offsets = [7, 96], sizes = [1, 96], strides = [1, 1]} : vector<8x192xf32> to vector<1x96xf32>
    %35 = tpu.concatenate %33, %34 in 0 : vector<1x96xf32>, vector<1x96xf32> -> vector<2x96xf32>
    %36 = vector.extract_strided_slice %32 {offsets = [0, 0], sizes = [2, 32], strides = [1, 1]} : vector<2x96xf32> to vector<2x32xf32>
    %37 = vector.extract_strided_slice %28 {offsets = [0, 0], sizes = [2, 32], strides = [1, 1]} : vector<2x96xf32> to vector<2x32xf32>
    %38 = arith.addf %36, %37 : vector<2x32xf32>
    %39 = arith.negf %38 : vector<2x32xf32>
    %40 = math.exp %39 : vector<2x32xf32>
    %cst_31 = arith.constant 1.000000e+00 : f32
    %41 = vector.broadcast %cst_31 : f32 to vector<2x32xf32>
    %42 = arith.addf %41, %40 : vector<2x32xf32>
    %43 = arith.divf %41, %42 : vector<2x32xf32>
    %44 = vector.extract_strided_slice %32 {offsets = [0, 32], sizes = [2, 32], strides = [1, 1]} : vector<2x96xf32> to vector<2x32xf32>
    %45 = vector.extract_strided_slice %28 {offsets = [0, 32], sizes = [2, 32], strides = [1, 1]} : vector<2x96xf32> to vector<2x32xf32>
    %46 = arith.addf %44, %45 : vector<2x32xf32>
    %47 = arith.negf %46 : vector<2x32xf32>
    %48 = math.exp %47 : vector<2x32xf32>
    %cst_32 = arith.constant 1.000000e+00 : f32
    %49 = vector.broadcast %cst_32 : f32 to vector<2x32xf32>
    %50 = arith.addf %49, %48 : vector<2x32xf32>
    %51 = arith.divf %49, %50 : vector<2x32xf32>
    %52 = vector.extract_strided_slice %32 {offsets = [0, 64], sizes = [2, 32], strides = [1, 1]} : vector<2x96xf32> to vector<2x32xf32>
    %53 = vector.extract_strided_slice %28 {offsets = [0, 64], sizes = [2, 32], strides = [1, 1]} : vector<2x96xf32> to vector<2x32xf32>
    %54 = arith.addf %53, %21 : vector<2x32xf32>
    %55 = arith.mulf %43, %54 : vector<2x32xf32>
    %56 = arith.addf %52, %55 : vector<2x32xf32>
    %57 = math.tanh %56 : vector<2x32xf32>
    %cst_33 = arith.constant 1.000000e+00 : f32
    %58 = vector.broadcast %cst_33 : f32 to vector<2x32xf32>
    %59 = arith.subf %58, %51 : vector<2x32xf32>
    %60 = arith.mulf %59, %57 : vector<2x32xf32>
    %61 = arith.mulf %51, %26 : vector<2x32xf32>
    %62 = arith.addf %60, %61 : vector<2x32xf32>
    %63 = vector.extract_strided_slice %35 {offsets = [0, 0], sizes = [2, 32], strides = [1, 1]} : vector<2x96xf32> to vector<2x32xf32>
    %64 = vector.extract_strided_slice %29 {offsets = [0, 0], sizes = [2, 32], strides = [1, 1]} : vector<2x96xf32> to vector<2x32xf32>
    %65 = arith.addf %63, %64 : vector<2x32xf32>
    %66 = arith.negf %65 : vector<2x32xf32>
    %67 = math.exp %66 : vector<2x32xf32>
    %cst_34 = arith.constant 1.000000e+00 : f32
    %68 = vector.broadcast %cst_34 : f32 to vector<2x32xf32>
    %69 = arith.addf %68, %67 : vector<2x32xf32>
    %70 = arith.divf %68, %69 : vector<2x32xf32>
    %71 = vector.extract_strided_slice %35 {offsets = [0, 32], sizes = [2, 32], strides = [1, 1]} : vector<2x96xf32> to vector<2x32xf32>
    %72 = vector.extract_strided_slice %29 {offsets = [0, 32], sizes = [2, 32], strides = [1, 1]} : vector<2x96xf32> to vector<2x32xf32>
    %73 = arith.addf %71, %72 : vector<2x32xf32>
    %74 = arith.negf %73 : vector<2x32xf32>
    %75 = math.exp %74 : vector<2x32xf32>
    %cst_35 = arith.constant 1.000000e+00 : f32
    %76 = vector.broadcast %cst_35 : f32 to vector<2x32xf32>
    %77 = arith.addf %76, %75 : vector<2x32xf32>
    %78 = arith.divf %76, %77 : vector<2x32xf32>
    %79 = vector.extract_strided_slice %35 {offsets = [0, 64], sizes = [2, 32], strides = [1, 1]} : vector<2x96xf32> to vector<2x32xf32>
    %80 = vector.extract_strided_slice %29 {offsets = [0, 64], sizes = [2, 32], strides = [1, 1]} : vector<2x96xf32> to vector<2x32xf32>
    %81 = arith.addf %80, %25 : vector<2x32xf32>
    %82 = arith.mulf %70, %81 : vector<2x32xf32>
    %83 = arith.addf %79, %82 : vector<2x32xf32>
    %84 = math.tanh %83 : vector<2x32xf32>
    %cst_36 = arith.constant 1.000000e+00 : f32
    %85 = vector.broadcast %cst_36 : f32 to vector<2x32xf32>
    %86 = arith.subf %85, %78 : vector<2x32xf32>
    %87 = arith.mulf %86, %84 : vector<2x32xf32>
    %88 = arith.mulf %78, %27 : vector<2x32xf32>
    %89 = arith.addf %87, %88 : vector<2x32xf32>
    %cst_37 = arith.constant dense<0.000000e+00> : vector<2x96xf32>
    %90 = tpu.matmul %62, %15, %cst_37 {dimension_numbers = #tpu.dot_dimension_numbers<[1], [0], [0], [1], [0, 0, 1, 1], [], []>} : vector<2x32xf32>, vector<32x96xf32>, vector<2x96xf32> -> vector<2x96xf32>
    %cst_38 = arith.constant dense<0.000000e+00> : vector<2x96xf32>
    %91 = tpu.matmul %89, %17, %cst_38 {dimension_numbers = #tpu.dot_dimension_numbers<[1], [0], [0], [1], [0, 0, 1, 1], [], []>} : vector<2x32xf32>, vector<32x96xf32>, vector<2x96xf32> -> vector<2x96xf32>
    %92 = vector.extract_strided_slice %11 {offsets = [1, 0], sizes = [1, 96], strides = [1, 1]} : vector<8x192xf32> to vector<1x96xf32>
    %93 = vector.extract_strided_slice %13 {offsets = [1, 0], sizes = [1, 96], strides = [1, 1]} : vector<8x192xf32> to vector<1x96xf32>
    %94 = tpu.concatenate %92, %93 in 0 : vector<1x96xf32>, vector<1x96xf32> -> vector<2x96xf32>
    %95 = vector.extract_strided_slice %11 {offsets = [6, 96], sizes = [1, 96], strides = [1, 1]} : vector<8x192xf32> to vector<1x96xf32>
    %96 = vector.extract_strided_slice %13 {offsets = [6, 96], sizes = [1, 96], strides = [1, 1]} : vector<8x192xf32> to vector<1x96xf32>
    %97 = tpu.concatenate %95, %96 in 0 : vector<1x96xf32>, vector<1x96xf32> -> vector<2x96xf32>
    %98 = vector.extract_strided_slice %94 {offsets = [0, 0], sizes = [2, 32], strides = [1, 1]} : vector<2x96xf32> to vector<2x32xf32>
    %99 = vector.extract_strided_slice %90 {offsets = [0, 0], sizes = [2, 32], strides = [1, 1]} : vector<2x96xf32> to vector<2x32xf32>
    %100 = arith.addf %98, %99 : vector<2x32xf32>
    %101 = arith.negf %100 : vector<2x32xf32>
    %102 = math.exp %101 : vector<2x32xf32>
    %cst_39 = arith.constant 1.000000e+00 : f32
    %103 = vector.broadcast %cst_39 : f32 to vector<2x32xf32>
    %104 = arith.addf %103, %102 : vector<2x32xf32>
    %105 = arith.divf %103, %104 : vector<2x32xf32>
    %106 = vector.extract_strided_slice %94 {offsets = [0, 32], sizes = [2, 32], strides = [1, 1]} : vector<2x96xf32> to vector<2x32xf32>
    %107 = vector.extract_strided_slice %90 {offsets = [0, 32], sizes = [2, 32], strides = [1, 1]} : vector<2x96xf32> to vector<2x32xf32>
    %108 = arith.addf %106, %107 : vector<2x32xf32>
    %109 = arith.negf %108 : vector<2x32xf32>
    %110 = math.exp %109 : vector<2x32xf32>
    %cst_40 = arith.constant 1.000000e+00 : f32
    %111 = vector.broadcast %cst_40 : f32 to vector<2x32xf32>
    %112 = arith.addf %111, %110 : vector<2x32xf32>
    %113 = arith.divf %111, %112 : vector<2x32xf32>
    %114 = vector.extract_strided_slice %94 {offsets = [0, 64], sizes = [2, 32], strides = [1, 1]} : vector<2x96xf32> to vector<2x32xf32>
    %115 = vector.extract_strided_slice %90 {offsets = [0, 64], sizes = [2, 32], strides = [1, 1]} : vector<2x96xf32> to vector<2x32xf32>
    %116 = arith.addf %115, %21 : vector<2x32xf32>
    %117 = arith.mulf %105, %116 : vector<2x32xf32>
    %118 = arith.addf %114, %117 : vector<2x32xf32>
    %119 = math.tanh %118 : vector<2x32xf32>
    %cst_41 = arith.constant 1.000000e+00 : f32
    %120 = vector.broadcast %cst_41 : f32 to vector<2x32xf32>
    %121 = arith.subf %120, %113 : vector<2x32xf32>
    %122 = arith.mulf %121, %119 : vector<2x32xf32>
    %123 = arith.mulf %113, %62 : vector<2x32xf32>
    %124 = arith.addf %122, %123 : vector<2x32xf32>
    %125 = vector.extract_strided_slice %97 {offsets = [0, 0], sizes = [2, 32], strides = [1, 1]} : vector<2x96xf32> to vector<2x32xf32>
    %126 = vector.extract_strided_slice %91 {offsets = [0, 0], sizes = [2, 32], strides = [1, 1]} : vector<2x96xf32> to vector<2x32xf32>
    %127 = arith.addf %125, %126 : vector<2x32xf32>
    %128 = arith.negf %127 : vector<2x32xf32>
    %129 = math.exp %128 : vector<2x32xf32>
    %cst_42 = arith.constant 1.000000e+00 : f32
    %130 = vector.broadcast %cst_42 : f32 to vector<2x32xf32>
    %131 = arith.addf %130, %129 : vector<2x32xf32>
    %132 = arith.divf %130, %131 : vector<2x32xf32>
    %133 = vector.extract_strided_slice %97 {offsets = [0, 32], sizes = [2, 32], strides = [1, 1]} : vector<2x96xf32> to vector<2x32xf32>
    %134 = vector.extract_strided_slice %91 {offsets = [0, 32], sizes = [2, 32], strides = [1, 1]} : vector<2x96xf32> to vector<2x32xf32>
    %135 = arith.addf %133, %134 : vector<2x32xf32>
    %136 = arith.negf %135 : vector<2x32xf32>
    %137 = math.exp %136 : vector<2x32xf32>
    %cst_43 = arith.constant 1.000000e+00 : f32
    %138 = vector.broadcast %cst_43 : f32 to vector<2x32xf32>
    %139 = arith.addf %138, %137 : vector<2x32xf32>
    %140 = arith.divf %138, %139 : vector<2x32xf32>
    %141 = vector.extract_strided_slice %97 {offsets = [0, 64], sizes = [2, 32], strides = [1, 1]} : vector<2x96xf32> to vector<2x32xf32>
    %142 = vector.extract_strided_slice %91 {offsets = [0, 64], sizes = [2, 32], strides = [1, 1]} : vector<2x96xf32> to vector<2x32xf32>
    %143 = arith.addf %142, %25 : vector<2x32xf32>
    %144 = arith.mulf %132, %143 : vector<2x32xf32>
    %145 = arith.addf %141, %144 : vector<2x32xf32>
    %146 = math.tanh %145 : vector<2x32xf32>
    %cst_44 = arith.constant 1.000000e+00 : f32
    %147 = vector.broadcast %cst_44 : f32 to vector<2x32xf32>
    %148 = arith.subf %147, %140 : vector<2x32xf32>
    %149 = arith.mulf %148, %146 : vector<2x32xf32>
    %150 = arith.mulf %140, %89 : vector<2x32xf32>
    %151 = arith.addf %149, %150 : vector<2x32xf32>
    %cst_45 = arith.constant dense<0.000000e+00> : vector<2x96xf32>
    %152 = tpu.matmul %124, %15, %cst_45 {dimension_numbers = #tpu.dot_dimension_numbers<[1], [0], [0], [1], [0, 0, 1, 1], [], []>} : vector<2x32xf32>, vector<32x96xf32>, vector<2x96xf32> -> vector<2x96xf32>
    %cst_46 = arith.constant dense<0.000000e+00> : vector<2x96xf32>
    %153 = tpu.matmul %151, %17, %cst_46 {dimension_numbers = #tpu.dot_dimension_numbers<[1], [0], [0], [1], [0, 0, 1, 1], [], []>} : vector<2x32xf32>, vector<32x96xf32>, vector<2x96xf32> -> vector<2x96xf32>
    %154 = vector.extract_strided_slice %11 {offsets = [2, 0], sizes = [1, 96], strides = [1, 1]} : vector<8x192xf32> to vector<1x96xf32>
    %155 = vector.extract_strided_slice %13 {offsets = [2, 0], sizes = [1, 96], strides = [1, 1]} : vector<8x192xf32> to vector<1x96xf32>
    %156 = tpu.concatenate %154, %155 in 0 : vector<1x96xf32>, vector<1x96xf32> -> vector<2x96xf32>
    %157 = vector.extract_strided_slice %11 {offsets = [5, 96], sizes = [1, 96], strides = [1, 1]} : vector<8x192xf32> to vector<1x96xf32>
    %158 = vector.extract_strided_slice %13 {offsets = [5, 96], sizes = [1, 96], strides = [1, 1]} : vector<8x192xf32> to vector<1x96xf32>
    %159 = tpu.concatenate %157, %158 in 0 : vector<1x96xf32>, vector<1x96xf32> -> vector<2x96xf32>
    %160 = vector.extract_strided_slice %156 {offsets = [0, 0], sizes = [2, 32], strides = [1, 1]} : vector<2x96xf32> to vector<2x32xf32>
    %161 = vector.extract_strided_slice %152 {offsets = [0, 0], sizes = [2, 32], strides = [1, 1]} : vector<2x96xf32> to vector<2x32xf32>
    %162 = arith.addf %160, %161 : vector<2x32xf32>
    %163 = arith.negf %162 : vector<2x32xf32>
    %164 = math.exp %163 : vector<2x32xf32>
    %cst_47 = arith.constant 1.000000e+00 : f32
    %165 = vector.broadcast %cst_47 : f32 to vector<2x32xf32>
    %166 = arith.addf %165, %164 : vector<2x32xf32>
    %167 = arith.divf %165, %166 : vector<2x32xf32>
    %168 = vector.extract_strided_slice %156 {offsets = [0, 32], sizes = [2, 32], strides = [1, 1]} : vector<2x96xf32> to vector<2x32xf32>
    %169 = vector.extract_strided_slice %152 {offsets = [0, 32], sizes = [2, 32], strides = [1, 1]} : vector<2x96xf32> to vector<2x32xf32>
    %170 = arith.addf %168, %169 : vector<2x32xf32>
    %171 = arith.negf %170 : vector<2x32xf32>
    %172 = math.exp %171 : vector<2x32xf32>
    %cst_48 = arith.constant 1.000000e+00 : f32
    %173 = vector.broadcast %cst_48 : f32 to vector<2x32xf32>
    %174 = arith.addf %173, %172 : vector<2x32xf32>
    %175 = arith.divf %173, %174 : vector<2x32xf32>
    %176 = vector.extract_strided_slice %156 {offsets = [0, 64], sizes = [2, 32], strides = [1, 1]} : vector<2x96xf32> to vector<2x32xf32>
    %177 = vector.extract_strided_slice %152 {offsets = [0, 64], sizes = [2, 32], strides = [1, 1]} : vector<2x96xf32> to vector<2x32xf32>
    %178 = arith.addf %177, %21 : vector<2x32xf32>
    %179 = arith.mulf %167, %178 : vector<2x32xf32>
    %180 = arith.addf %176, %179 : vector<2x32xf32>
    %181 = math.tanh %180 : vector<2x32xf32>
    %cst_49 = arith.constant 1.000000e+00 : f32
    %182 = vector.broadcast %cst_49 : f32 to vector<2x32xf32>
    %183 = arith.subf %182, %175 : vector<2x32xf32>
    %184 = arith.mulf %183, %181 : vector<2x32xf32>
    %185 = arith.mulf %175, %124 : vector<2x32xf32>
    %186 = arith.addf %184, %185 : vector<2x32xf32>
    %187 = vector.extract_strided_slice %159 {offsets = [0, 0], sizes = [2, 32], strides = [1, 1]} : vector<2x96xf32> to vector<2x32xf32>
    %188 = vector.extract_strided_slice %153 {offsets = [0, 0], sizes = [2, 32], strides = [1, 1]} : vector<2x96xf32> to vector<2x32xf32>
    %189 = arith.addf %187, %188 : vector<2x32xf32>
    %190 = arith.negf %189 : vector<2x32xf32>
    %191 = math.exp %190 : vector<2x32xf32>
    %cst_50 = arith.constant 1.000000e+00 : f32
    %192 = vector.broadcast %cst_50 : f32 to vector<2x32xf32>
    %193 = arith.addf %192, %191 : vector<2x32xf32>
    %194 = arith.divf %192, %193 : vector<2x32xf32>
    %195 = vector.extract_strided_slice %159 {offsets = [0, 32], sizes = [2, 32], strides = [1, 1]} : vector<2x96xf32> to vector<2x32xf32>
    %196 = vector.extract_strided_slice %153 {offsets = [0, 32], sizes = [2, 32], strides = [1, 1]} : vector<2x96xf32> to vector<2x32xf32>
    %197 = arith.addf %195, %196 : vector<2x32xf32>
    %198 = arith.negf %197 : vector<2x32xf32>
    %199 = math.exp %198 : vector<2x32xf32>
    %cst_51 = arith.constant 1.000000e+00 : f32
    %200 = vector.broadcast %cst_51 : f32 to vector<2x32xf32>
    %201 = arith.addf %200, %199 : vector<2x32xf32>
    %202 = arith.divf %200, %201 : vector<2x32xf32>
    %203 = vector.extract_strided_slice %159 {offsets = [0, 64], sizes = [2, 32], strides = [1, 1]} : vector<2x96xf32> to vector<2x32xf32>
    %204 = vector.extract_strided_slice %153 {offsets = [0, 64], sizes = [2, 32], strides = [1, 1]} : vector<2x96xf32> to vector<2x32xf32>
    %205 = arith.addf %204, %25 : vector<2x32xf32>
    %206 = arith.mulf %194, %205 : vector<2x32xf32>
    %207 = arith.addf %203, %206 : vector<2x32xf32>
    %208 = math.tanh %207 : vector<2x32xf32>
    %cst_52 = arith.constant 1.000000e+00 : f32
    %209 = vector.broadcast %cst_52 : f32 to vector<2x32xf32>
    %210 = arith.subf %209, %202 : vector<2x32xf32>
    %211 = arith.mulf %210, %208 : vector<2x32xf32>
    %212 = arith.mulf %202, %151 : vector<2x32xf32>
    %213 = arith.addf %211, %212 : vector<2x32xf32>
    %cst_53 = arith.constant dense<0.000000e+00> : vector<2x96xf32>
    %214 = tpu.matmul %186, %15, %cst_53 {dimension_numbers = #tpu.dot_dimension_numbers<[1], [0], [0], [1], [0, 0, 1, 1], [], []>} : vector<2x32xf32>, vector<32x96xf32>, vector<2x96xf32> -> vector<2x96xf32>
    %cst_54 = arith.constant dense<0.000000e+00> : vector<2x96xf32>
    %215 = tpu.matmul %213, %17, %cst_54 {dimension_numbers = #tpu.dot_dimension_numbers<[1], [0], [0], [1], [0, 0, 1, 1], [], []>} : vector<2x32xf32>, vector<32x96xf32>, vector<2x96xf32> -> vector<2x96xf32>
    %216 = vector.extract_strided_slice %11 {offsets = [3, 0], sizes = [1, 96], strides = [1, 1]} : vector<8x192xf32> to vector<1x96xf32>
    %217 = vector.extract_strided_slice %13 {offsets = [3, 0], sizes = [1, 96], strides = [1, 1]} : vector<8x192xf32> to vector<1x96xf32>
    %218 = tpu.concatenate %216, %217 in 0 : vector<1x96xf32>, vector<1x96xf32> -> vector<2x96xf32>
    %219 = vector.extract_strided_slice %11 {offsets = [4, 96], sizes = [1, 96], strides = [1, 1]} : vector<8x192xf32> to vector<1x96xf32>
    %220 = vector.extract_strided_slice %13 {offsets = [4, 96], sizes = [1, 96], strides = [1, 1]} : vector<8x192xf32> to vector<1x96xf32>
    %221 = tpu.concatenate %219, %220 in 0 : vector<1x96xf32>, vector<1x96xf32> -> vector<2x96xf32>
    %222 = vector.extract_strided_slice %218 {offsets = [0, 0], sizes = [2, 32], strides = [1, 1]} : vector<2x96xf32> to vector<2x32xf32>
    %223 = vector.extract_strided_slice %214 {offsets = [0, 0], sizes = [2, 32], strides = [1, 1]} : vector<2x96xf32> to vector<2x32xf32>
    %224 = arith.addf %222, %223 : vector<2x32xf32>
    %225 = arith.negf %224 : vector<2x32xf32>
    %226 = math.exp %225 : vector<2x32xf32>
    %cst_55 = arith.constant 1.000000e+00 : f32
    %227 = vector.broadcast %cst_55 : f32 to vector<2x32xf32>
    %228 = arith.addf %227, %226 : vector<2x32xf32>
    %229 = arith.divf %227, %228 : vector<2x32xf32>
    %230 = vector.extract_strided_slice %218 {offsets = [0, 32], sizes = [2, 32], strides = [1, 1]} : vector<2x96xf32> to vector<2x32xf32>
    %231 = vector.extract_strided_slice %214 {offsets = [0, 32], sizes = [2, 32], strides = [1, 1]} : vector<2x96xf32> to vector<2x32xf32>
    %232 = arith.addf %230, %231 : vector<2x32xf32>
    %233 = arith.negf %232 : vector<2x32xf32>
    %234 = math.exp %233 : vector<2x32xf32>
    %cst_56 = arith.constant 1.000000e+00 : f32
    %235 = vector.broadcast %cst_56 : f32 to vector<2x32xf32>
    %236 = arith.addf %235, %234 : vector<2x32xf32>
    %237 = arith.divf %235, %236 : vector<2x32xf32>
    %238 = vector.extract_strided_slice %218 {offsets = [0, 64], sizes = [2, 32], strides = [1, 1]} : vector<2x96xf32> to vector<2x32xf32>
    %239 = vector.extract_strided_slice %214 {offsets = [0, 64], sizes = [2, 32], strides = [1, 1]} : vector<2x96xf32> to vector<2x32xf32>
    %240 = arith.addf %239, %21 : vector<2x32xf32>
    %241 = arith.mulf %229, %240 : vector<2x32xf32>
    %242 = arith.addf %238, %241 : vector<2x32xf32>
    %243 = math.tanh %242 : vector<2x32xf32>
    %cst_57 = arith.constant 1.000000e+00 : f32
    %244 = vector.broadcast %cst_57 : f32 to vector<2x32xf32>
    %245 = arith.subf %244, %237 : vector<2x32xf32>
    %246 = arith.mulf %245, %243 : vector<2x32xf32>
    %247 = arith.mulf %237, %186 : vector<2x32xf32>
    %248 = arith.addf %246, %247 : vector<2x32xf32>
    %249 = vector.extract_strided_slice %221 {offsets = [0, 0], sizes = [2, 32], strides = [1, 1]} : vector<2x96xf32> to vector<2x32xf32>
    %250 = vector.extract_strided_slice %215 {offsets = [0, 0], sizes = [2, 32], strides = [1, 1]} : vector<2x96xf32> to vector<2x32xf32>
    %251 = arith.addf %249, %250 : vector<2x32xf32>
    %252 = arith.negf %251 : vector<2x32xf32>
    %253 = math.exp %252 : vector<2x32xf32>
    %cst_58 = arith.constant 1.000000e+00 : f32
    %254 = vector.broadcast %cst_58 : f32 to vector<2x32xf32>
    %255 = arith.addf %254, %253 : vector<2x32xf32>
    %256 = arith.divf %254, %255 : vector<2x32xf32>
    %257 = vector.extract_strided_slice %221 {offsets = [0, 32], sizes = [2, 32], strides = [1, 1]} : vector<2x96xf32> to vector<2x32xf32>
    %258 = vector.extract_strided_slice %215 {offsets = [0, 32], sizes = [2, 32], strides = [1, 1]} : vector<2x96xf32> to vector<2x32xf32>
    %259 = arith.addf %257, %258 : vector<2x32xf32>
    %260 = arith.negf %259 : vector<2x32xf32>
    %261 = math.exp %260 : vector<2x32xf32>
    %cst_59 = arith.constant 1.000000e+00 : f32
    %262 = vector.broadcast %cst_59 : f32 to vector<2x32xf32>
    %263 = arith.addf %262, %261 : vector<2x32xf32>
    %264 = arith.divf %262, %263 : vector<2x32xf32>
    %265 = vector.extract_strided_slice %221 {offsets = [0, 64], sizes = [2, 32], strides = [1, 1]} : vector<2x96xf32> to vector<2x32xf32>
    %266 = vector.extract_strided_slice %215 {offsets = [0, 64], sizes = [2, 32], strides = [1, 1]} : vector<2x96xf32> to vector<2x32xf32>
    %267 = arith.addf %266, %25 : vector<2x32xf32>
    %268 = arith.mulf %256, %267 : vector<2x32xf32>
    %269 = arith.addf %265, %268 : vector<2x32xf32>
    %270 = math.tanh %269 : vector<2x32xf32>
    %cst_60 = arith.constant 1.000000e+00 : f32
    %271 = vector.broadcast %cst_60 : f32 to vector<2x32xf32>
    %272 = arith.subf %271, %264 : vector<2x32xf32>
    %273 = arith.mulf %272, %270 : vector<2x32xf32>
    %274 = arith.mulf %264, %213 : vector<2x32xf32>
    %275 = arith.addf %273, %274 : vector<2x32xf32>
    %cst_61 = arith.constant dense<0.000000e+00> : vector<2x96xf32>
    %276 = tpu.matmul %248, %15, %cst_61 {dimension_numbers = #tpu.dot_dimension_numbers<[1], [0], [0], [1], [0, 0, 1, 1], [], []>} : vector<2x32xf32>, vector<32x96xf32>, vector<2x96xf32> -> vector<2x96xf32>
    %cst_62 = arith.constant dense<0.000000e+00> : vector<2x96xf32>
    %277 = tpu.matmul %275, %17, %cst_62 {dimension_numbers = #tpu.dot_dimension_numbers<[1], [0], [0], [1], [0, 0, 1, 1], [], []>} : vector<2x32xf32>, vector<32x96xf32>, vector<2x96xf32> -> vector<2x96xf32>
    %278 = vector.extract_strided_slice %11 {offsets = [4, 0], sizes = [1, 96], strides = [1, 1]} : vector<8x192xf32> to vector<1x96xf32>
    %279 = vector.extract_strided_slice %13 {offsets = [4, 0], sizes = [1, 96], strides = [1, 1]} : vector<8x192xf32> to vector<1x96xf32>
    %280 = tpu.concatenate %278, %279 in 0 : vector<1x96xf32>, vector<1x96xf32> -> vector<2x96xf32>
    %281 = vector.extract_strided_slice %11 {offsets = [3, 96], sizes = [1, 96], strides = [1, 1]} : vector<8x192xf32> to vector<1x96xf32>
    %282 = vector.extract_strided_slice %13 {offsets = [3, 96], sizes = [1, 96], strides = [1, 1]} : vector<8x192xf32> to vector<1x96xf32>
    %283 = tpu.concatenate %281, %282 in 0 : vector<1x96xf32>, vector<1x96xf32> -> vector<2x96xf32>
    %284 = vector.extract_strided_slice %280 {offsets = [0, 0], sizes = [2, 32], strides = [1, 1]} : vector<2x96xf32> to vector<2x32xf32>
    %285 = vector.extract_strided_slice %276 {offsets = [0, 0], sizes = [2, 32], strides = [1, 1]} : vector<2x96xf32> to vector<2x32xf32>
    %286 = arith.addf %284, %285 : vector<2x32xf32>
    %287 = arith.negf %286 : vector<2x32xf32>
    %288 = math.exp %287 : vector<2x32xf32>
    %cst_63 = arith.constant 1.000000e+00 : f32
    %289 = vector.broadcast %cst_63 : f32 to vector<2x32xf32>
    %290 = arith.addf %289, %288 : vector<2x32xf32>
    %291 = arith.divf %289, %290 : vector<2x32xf32>
    %292 = vector.extract_strided_slice %280 {offsets = [0, 32], sizes = [2, 32], strides = [1, 1]} : vector<2x96xf32> to vector<2x32xf32>
    %293 = vector.extract_strided_slice %276 {offsets = [0, 32], sizes = [2, 32], strides = [1, 1]} : vector<2x96xf32> to vector<2x32xf32>
    %294 = arith.addf %292, %293 : vector<2x32xf32>
    %295 = arith.negf %294 : vector<2x32xf32>
    %296 = math.exp %295 : vector<2x32xf32>
    %cst_64 = arith.constant 1.000000e+00 : f32
    %297 = vector.broadcast %cst_64 : f32 to vector<2x32xf32>
    %298 = arith.addf %297, %296 : vector<2x32xf32>
    %299 = arith.divf %297, %298 : vector<2x32xf32>
    %300 = vector.extract_strided_slice %280 {offsets = [0, 64], sizes = [2, 32], strides = [1, 1]} : vector<2x96xf32> to vector<2x32xf32>
    %301 = vector.extract_strided_slice %276 {offsets = [0, 64], sizes = [2, 32], strides = [1, 1]} : vector<2x96xf32> to vector<2x32xf32>
    %302 = arith.addf %301, %21 : vector<2x32xf32>
    %303 = arith.mulf %291, %302 : vector<2x32xf32>
    %304 = arith.addf %300, %303 : vector<2x32xf32>
    %305 = math.tanh %304 : vector<2x32xf32>
    %cst_65 = arith.constant 1.000000e+00 : f32
    %306 = vector.broadcast %cst_65 : f32 to vector<2x32xf32>
    %307 = arith.subf %306, %299 : vector<2x32xf32>
    %308 = arith.mulf %307, %305 : vector<2x32xf32>
    %309 = arith.mulf %299, %248 : vector<2x32xf32>
    %310 = arith.addf %308, %309 : vector<2x32xf32>
    %311 = vector.extract_strided_slice %283 {offsets = [0, 0], sizes = [2, 32], strides = [1, 1]} : vector<2x96xf32> to vector<2x32xf32>
    %312 = vector.extract_strided_slice %277 {offsets = [0, 0], sizes = [2, 32], strides = [1, 1]} : vector<2x96xf32> to vector<2x32xf32>
    %313 = arith.addf %311, %312 : vector<2x32xf32>
    %314 = arith.negf %313 : vector<2x32xf32>
    %315 = math.exp %314 : vector<2x32xf32>
    %cst_66 = arith.constant 1.000000e+00 : f32
    %316 = vector.broadcast %cst_66 : f32 to vector<2x32xf32>
    %317 = arith.addf %316, %315 : vector<2x32xf32>
    %318 = arith.divf %316, %317 : vector<2x32xf32>
    %319 = vector.extract_strided_slice %283 {offsets = [0, 32], sizes = [2, 32], strides = [1, 1]} : vector<2x96xf32> to vector<2x32xf32>
    %320 = vector.extract_strided_slice %277 {offsets = [0, 32], sizes = [2, 32], strides = [1, 1]} : vector<2x96xf32> to vector<2x32xf32>
    %321 = arith.addf %319, %320 : vector<2x32xf32>
    %322 = arith.negf %321 : vector<2x32xf32>
    %323 = math.exp %322 : vector<2x32xf32>
    %cst_67 = arith.constant 1.000000e+00 : f32
    %324 = vector.broadcast %cst_67 : f32 to vector<2x32xf32>
    %325 = arith.addf %324, %323 : vector<2x32xf32>
    %326 = arith.divf %324, %325 : vector<2x32xf32>
    %327 = vector.extract_strided_slice %283 {offsets = [0, 64], sizes = [2, 32], strides = [1, 1]} : vector<2x96xf32> to vector<2x32xf32>
    %328 = vector.extract_strided_slice %277 {offsets = [0, 64], sizes = [2, 32], strides = [1, 1]} : vector<2x96xf32> to vector<2x32xf32>
    %329 = arith.addf %328, %25 : vector<2x32xf32>
    %330 = arith.mulf %318, %329 : vector<2x32xf32>
    %331 = arith.addf %327, %330 : vector<2x32xf32>
    %332 = math.tanh %331 : vector<2x32xf32>
    %cst_68 = arith.constant 1.000000e+00 : f32
    %333 = vector.broadcast %cst_68 : f32 to vector<2x32xf32>
    %334 = arith.subf %333, %326 : vector<2x32xf32>
    %335 = arith.mulf %334, %332 : vector<2x32xf32>
    %336 = arith.mulf %326, %275 : vector<2x32xf32>
    %337 = arith.addf %335, %336 : vector<2x32xf32>
    %cst_69 = arith.constant dense<0.000000e+00> : vector<2x96xf32>
    %338 = tpu.matmul %310, %15, %cst_69 {dimension_numbers = #tpu.dot_dimension_numbers<[1], [0], [0], [1], [0, 0, 1, 1], [], []>} : vector<2x32xf32>, vector<32x96xf32>, vector<2x96xf32> -> vector<2x96xf32>
    %cst_70 = arith.constant dense<0.000000e+00> : vector<2x96xf32>
    %339 = tpu.matmul %337, %17, %cst_70 {dimension_numbers = #tpu.dot_dimension_numbers<[1], [0], [0], [1], [0, 0, 1, 1], [], []>} : vector<2x32xf32>, vector<32x96xf32>, vector<2x96xf32> -> vector<2x96xf32>
    %340 = vector.extract_strided_slice %11 {offsets = [5, 0], sizes = [1, 96], strides = [1, 1]} : vector<8x192xf32> to vector<1x96xf32>
    %341 = vector.extract_strided_slice %13 {offsets = [5, 0], sizes = [1, 96], strides = [1, 1]} : vector<8x192xf32> to vector<1x96xf32>
    %342 = tpu.concatenate %340, %341 in 0 : vector<1x96xf32>, vector<1x96xf32> -> vector<2x96xf32>
    %343 = vector.extract_strided_slice %11 {offsets = [2, 96], sizes = [1, 96], strides = [1, 1]} : vector<8x192xf32> to vector<1x96xf32>
    %344 = vector.extract_strided_slice %13 {offsets = [2, 96], sizes = [1, 96], strides = [1, 1]} : vector<8x192xf32> to vector<1x96xf32>
    %345 = tpu.concatenate %343, %344 in 0 : vector<1x96xf32>, vector<1x96xf32> -> vector<2x96xf32>
    %346 = vector.extract_strided_slice %342 {offsets = [0, 0], sizes = [2, 32], strides = [1, 1]} : vector<2x96xf32> to vector<2x32xf32>
    %347 = vector.extract_strided_slice %338 {offsets = [0, 0], sizes = [2, 32], strides = [1, 1]} : vector<2x96xf32> to vector<2x32xf32>
    %348 = arith.addf %346, %347 : vector<2x32xf32>
    %349 = arith.negf %348 : vector<2x32xf32>
    %350 = math.exp %349 : vector<2x32xf32>
    %cst_71 = arith.constant 1.000000e+00 : f32
    %351 = vector.broadcast %cst_71 : f32 to vector<2x32xf32>
    %352 = arith.addf %351, %350 : vector<2x32xf32>
    %353 = arith.divf %351, %352 : vector<2x32xf32>
    %354 = vector.extract_strided_slice %342 {offsets = [0, 32], sizes = [2, 32], strides = [1, 1]} : vector<2x96xf32> to vector<2x32xf32>
    %355 = vector.extract_strided_slice %338 {offsets = [0, 32], sizes = [2, 32], strides = [1, 1]} : vector<2x96xf32> to vector<2x32xf32>
    %356 = arith.addf %354, %355 : vector<2x32xf32>
    %357 = arith.negf %356 : vector<2x32xf32>
    %358 = math.exp %357 : vector<2x32xf32>
    %cst_72 = arith.constant 1.000000e+00 : f32
    %359 = vector.broadcast %cst_72 : f32 to vector<2x32xf32>
    %360 = arith.addf %359, %358 : vector<2x32xf32>
    %361 = arith.divf %359, %360 : vector<2x32xf32>
    %362 = vector.extract_strided_slice %342 {offsets = [0, 64], sizes = [2, 32], strides = [1, 1]} : vector<2x96xf32> to vector<2x32xf32>
    %363 = vector.extract_strided_slice %338 {offsets = [0, 64], sizes = [2, 32], strides = [1, 1]} : vector<2x96xf32> to vector<2x32xf32>
    %364 = arith.addf %363, %21 : vector<2x32xf32>
    %365 = arith.mulf %353, %364 : vector<2x32xf32>
    %366 = arith.addf %362, %365 : vector<2x32xf32>
    %367 = math.tanh %366 : vector<2x32xf32>
    %cst_73 = arith.constant 1.000000e+00 : f32
    %368 = vector.broadcast %cst_73 : f32 to vector<2x32xf32>
    %369 = arith.subf %368, %361 : vector<2x32xf32>
    %370 = arith.mulf %369, %367 : vector<2x32xf32>
    %371 = arith.mulf %361, %310 : vector<2x32xf32>
    %372 = arith.addf %370, %371 : vector<2x32xf32>
    %373 = vector.extract_strided_slice %345 {offsets = [0, 0], sizes = [2, 32], strides = [1, 1]} : vector<2x96xf32> to vector<2x32xf32>
    %374 = vector.extract_strided_slice %339 {offsets = [0, 0], sizes = [2, 32], strides = [1, 1]} : vector<2x96xf32> to vector<2x32xf32>
    %375 = arith.addf %373, %374 : vector<2x32xf32>
    %376 = arith.negf %375 : vector<2x32xf32>
    %377 = math.exp %376 : vector<2x32xf32>
    %cst_74 = arith.constant 1.000000e+00 : f32
    %378 = vector.broadcast %cst_74 : f32 to vector<2x32xf32>
    %379 = arith.addf %378, %377 : vector<2x32xf32>
    %380 = arith.divf %378, %379 : vector<2x32xf32>
    %381 = vector.extract_strided_slice %345 {offsets = [0, 32], sizes = [2, 32], strides = [1, 1]} : vector<2x96xf32> to vector<2x32xf32>
    %382 = vector.extract_strided_slice %339 {offsets = [0, 32], sizes = [2, 32], strides = [1, 1]} : vector<2x96xf32> to vector<2x32xf32>
    %383 = arith.addf %381, %382 : vector<2x32xf32>
    %384 = arith.negf %383 : vector<2x32xf32>
    %385 = math.exp %384 : vector<2x32xf32>
    %cst_75 = arith.constant 1.000000e+00 : f32
    %386 = vector.broadcast %cst_75 : f32 to vector<2x32xf32>
    %387 = arith.addf %386, %385 : vector<2x32xf32>
    %388 = arith.divf %386, %387 : vector<2x32xf32>
    %389 = vector.extract_strided_slice %345 {offsets = [0, 64], sizes = [2, 32], strides = [1, 1]} : vector<2x96xf32> to vector<2x32xf32>
    %390 = vector.extract_strided_slice %339 {offsets = [0, 64], sizes = [2, 32], strides = [1, 1]} : vector<2x96xf32> to vector<2x32xf32>
    %391 = arith.addf %390, %25 : vector<2x32xf32>
    %392 = arith.mulf %380, %391 : vector<2x32xf32>
    %393 = arith.addf %389, %392 : vector<2x32xf32>
    %394 = math.tanh %393 : vector<2x32xf32>
    %cst_76 = arith.constant 1.000000e+00 : f32
    %395 = vector.broadcast %cst_76 : f32 to vector<2x32xf32>
    %396 = arith.subf %395, %388 : vector<2x32xf32>
    %397 = arith.mulf %396, %394 : vector<2x32xf32>
    %398 = arith.mulf %388, %337 : vector<2x32xf32>
    %399 = arith.addf %397, %398 : vector<2x32xf32>
    %cst_77 = arith.constant dense<0.000000e+00> : vector<2x96xf32>
    %400 = tpu.matmul %372, %15, %cst_77 {dimension_numbers = #tpu.dot_dimension_numbers<[1], [0], [0], [1], [0, 0, 1, 1], [], []>} : vector<2x32xf32>, vector<32x96xf32>, vector<2x96xf32> -> vector<2x96xf32>
    %cst_78 = arith.constant dense<0.000000e+00> : vector<2x96xf32>
    %401 = tpu.matmul %399, %17, %cst_78 {dimension_numbers = #tpu.dot_dimension_numbers<[1], [0], [0], [1], [0, 0, 1, 1], [], []>} : vector<2x32xf32>, vector<32x96xf32>, vector<2x96xf32> -> vector<2x96xf32>
    %402 = vector.extract_strided_slice %11 {offsets = [6, 0], sizes = [1, 96], strides = [1, 1]} : vector<8x192xf32> to vector<1x96xf32>
    %403 = vector.extract_strided_slice %13 {offsets = [6, 0], sizes = [1, 96], strides = [1, 1]} : vector<8x192xf32> to vector<1x96xf32>
    %404 = tpu.concatenate %402, %403 in 0 : vector<1x96xf32>, vector<1x96xf32> -> vector<2x96xf32>
    %405 = vector.extract_strided_slice %11 {offsets = [1, 96], sizes = [1, 96], strides = [1, 1]} : vector<8x192xf32> to vector<1x96xf32>
    %406 = vector.extract_strided_slice %13 {offsets = [1, 96], sizes = [1, 96], strides = [1, 1]} : vector<8x192xf32> to vector<1x96xf32>
    %407 = tpu.concatenate %405, %406 in 0 : vector<1x96xf32>, vector<1x96xf32> -> vector<2x96xf32>
    %408 = vector.extract_strided_slice %404 {offsets = [0, 0], sizes = [2, 32], strides = [1, 1]} : vector<2x96xf32> to vector<2x32xf32>
    %409 = vector.extract_strided_slice %400 {offsets = [0, 0], sizes = [2, 32], strides = [1, 1]} : vector<2x96xf32> to vector<2x32xf32>
    %410 = arith.addf %408, %409 : vector<2x32xf32>
    %411 = arith.negf %410 : vector<2x32xf32>
    %412 = math.exp %411 : vector<2x32xf32>
    %cst_79 = arith.constant 1.000000e+00 : f32
    %413 = vector.broadcast %cst_79 : f32 to vector<2x32xf32>
    %414 = arith.addf %413, %412 : vector<2x32xf32>
    %415 = arith.divf %413, %414 : vector<2x32xf32>
    %416 = vector.extract_strided_slice %404 {offsets = [0, 32], sizes = [2, 32], strides = [1, 1]} : vector<2x96xf32> to vector<2x32xf32>
    %417 = vector.extract_strided_slice %400 {offsets = [0, 32], sizes = [2, 32], strides = [1, 1]} : vector<2x96xf32> to vector<2x32xf32>
    %418 = arith.addf %416, %417 : vector<2x32xf32>
    %419 = arith.negf %418 : vector<2x32xf32>
    %420 = math.exp %419 : vector<2x32xf32>
    %cst_80 = arith.constant 1.000000e+00 : f32
    %421 = vector.broadcast %cst_80 : f32 to vector<2x32xf32>
    %422 = arith.addf %421, %420 : vector<2x32xf32>
    %423 = arith.divf %421, %422 : vector<2x32xf32>
    %424 = vector.extract_strided_slice %404 {offsets = [0, 64], sizes = [2, 32], strides = [1, 1]} : vector<2x96xf32> to vector<2x32xf32>
    %425 = vector.extract_strided_slice %400 {offsets = [0, 64], sizes = [2, 32], strides = [1, 1]} : vector<2x96xf32> to vector<2x32xf32>
    %426 = arith.addf %425, %21 : vector<2x32xf32>
    %427 = arith.mulf %415, %426 : vector<2x32xf32>
    %428 = arith.addf %424, %427 : vector<2x32xf32>
    %429 = math.tanh %428 : vector<2x32xf32>
    %cst_81 = arith.constant 1.000000e+00 : f32
    %430 = vector.broadcast %cst_81 : f32 to vector<2x32xf32>
    %431 = arith.subf %430, %423 : vector<2x32xf32>
    %432 = arith.mulf %431, %429 : vector<2x32xf32>
    %433 = arith.mulf %423, %372 : vector<2x32xf32>
    %434 = arith.addf %432, %433 : vector<2x32xf32>
    %435 = vector.extract_strided_slice %407 {offsets = [0, 0], sizes = [2, 32], strides = [1, 1]} : vector<2x96xf32> to vector<2x32xf32>
    %436 = vector.extract_strided_slice %401 {offsets = [0, 0], sizes = [2, 32], strides = [1, 1]} : vector<2x96xf32> to vector<2x32xf32>
    %437 = arith.addf %435, %436 : vector<2x32xf32>
    %438 = arith.negf %437 : vector<2x32xf32>
    %439 = math.exp %438 : vector<2x32xf32>
    %cst_82 = arith.constant 1.000000e+00 : f32
    %440 = vector.broadcast %cst_82 : f32 to vector<2x32xf32>
    %441 = arith.addf %440, %439 : vector<2x32xf32>
    %442 = arith.divf %440, %441 : vector<2x32xf32>
    %443 = vector.extract_strided_slice %407 {offsets = [0, 32], sizes = [2, 32], strides = [1, 1]} : vector<2x96xf32> to vector<2x32xf32>
    %444 = vector.extract_strided_slice %401 {offsets = [0, 32], sizes = [2, 32], strides = [1, 1]} : vector<2x96xf32> to vector<2x32xf32>
    %445 = arith.addf %443, %444 : vector<2x32xf32>
    %446 = arith.negf %445 : vector<2x32xf32>
    %447 = math.exp %446 : vector<2x32xf32>
    %cst_83 = arith.constant 1.000000e+00 : f32
    %448 = vector.broadcast %cst_83 : f32 to vector<2x32xf32>
    %449 = arith.addf %448, %447 : vector<2x32xf32>
    %450 = arith.divf %448, %449 : vector<2x32xf32>
    %451 = vector.extract_strided_slice %407 {offsets = [0, 64], sizes = [2, 32], strides = [1, 1]} : vector<2x96xf32> to vector<2x32xf32>
    %452 = vector.extract_strided_slice %401 {offsets = [0, 64], sizes = [2, 32], strides = [1, 1]} : vector<2x96xf32> to vector<2x32xf32>
    %453 = arith.addf %452, %25 : vector<2x32xf32>
    %454 = arith.mulf %442, %453 : vector<2x32xf32>
    %455 = arith.addf %451, %454 : vector<2x32xf32>
    %456 = math.tanh %455 : vector<2x32xf32>
    %cst_84 = arith.constant 1.000000e+00 : f32
    %457 = vector.broadcast %cst_84 : f32 to vector<2x32xf32>
    %458 = arith.subf %457, %450 : vector<2x32xf32>
    %459 = arith.mulf %458, %456 : vector<2x32xf32>
    %460 = arith.mulf %450, %399 : vector<2x32xf32>
    %461 = arith.addf %459, %460 : vector<2x32xf32>
    %cst_85 = arith.constant dense<0.000000e+00> : vector<2x96xf32>
    %462 = tpu.matmul %434, %15, %cst_85 {dimension_numbers = #tpu.dot_dimension_numbers<[1], [0], [0], [1], [0, 0, 1, 1], [], []>} : vector<2x32xf32>, vector<32x96xf32>, vector<2x96xf32> -> vector<2x96xf32>
    %cst_86 = arith.constant dense<0.000000e+00> : vector<2x96xf32>
    %463 = tpu.matmul %461, %17, %cst_86 {dimension_numbers = #tpu.dot_dimension_numbers<[1], [0], [0], [1], [0, 0, 1, 1], [], []>} : vector<2x32xf32>, vector<32x96xf32>, vector<2x96xf32> -> vector<2x96xf32>
    %464 = vector.extract_strided_slice %11 {offsets = [7, 0], sizes = [1, 96], strides = [1, 1]} : vector<8x192xf32> to vector<1x96xf32>
    %465 = vector.extract_strided_slice %13 {offsets = [7, 0], sizes = [1, 96], strides = [1, 1]} : vector<8x192xf32> to vector<1x96xf32>
    %466 = tpu.concatenate %464, %465 in 0 : vector<1x96xf32>, vector<1x96xf32> -> vector<2x96xf32>
    %467 = vector.extract_strided_slice %11 {offsets = [0, 96], sizes = [1, 96], strides = [1, 1]} : vector<8x192xf32> to vector<1x96xf32>
    %468 = vector.extract_strided_slice %13 {offsets = [0, 96], sizes = [1, 96], strides = [1, 1]} : vector<8x192xf32> to vector<1x96xf32>
    %469 = tpu.concatenate %467, %468 in 0 : vector<1x96xf32>, vector<1x96xf32> -> vector<2x96xf32>
    %470 = vector.extract_strided_slice %466 {offsets = [0, 0], sizes = [2, 32], strides = [1, 1]} : vector<2x96xf32> to vector<2x32xf32>
    %471 = vector.extract_strided_slice %462 {offsets = [0, 0], sizes = [2, 32], strides = [1, 1]} : vector<2x96xf32> to vector<2x32xf32>
    %472 = arith.addf %470, %471 : vector<2x32xf32>
    %473 = arith.negf %472 : vector<2x32xf32>
    %474 = math.exp %473 : vector<2x32xf32>
    %cst_87 = arith.constant 1.000000e+00 : f32
    %475 = vector.broadcast %cst_87 : f32 to vector<2x32xf32>
    %476 = arith.addf %475, %474 : vector<2x32xf32>
    %477 = arith.divf %475, %476 : vector<2x32xf32>
    %478 = vector.extract_strided_slice %466 {offsets = [0, 32], sizes = [2, 32], strides = [1, 1]} : vector<2x96xf32> to vector<2x32xf32>
    %479 = vector.extract_strided_slice %462 {offsets = [0, 32], sizes = [2, 32], strides = [1, 1]} : vector<2x96xf32> to vector<2x32xf32>
    %480 = arith.addf %478, %479 : vector<2x32xf32>
    %481 = arith.negf %480 : vector<2x32xf32>
    %482 = math.exp %481 : vector<2x32xf32>
    %cst_88 = arith.constant 1.000000e+00 : f32
    %483 = vector.broadcast %cst_88 : f32 to vector<2x32xf32>
    %484 = arith.addf %483, %482 : vector<2x32xf32>
    %485 = arith.divf %483, %484 : vector<2x32xf32>
    %486 = vector.extract_strided_slice %466 {offsets = [0, 64], sizes = [2, 32], strides = [1, 1]} : vector<2x96xf32> to vector<2x32xf32>
    %487 = vector.extract_strided_slice %462 {offsets = [0, 64], sizes = [2, 32], strides = [1, 1]} : vector<2x96xf32> to vector<2x32xf32>
    %488 = arith.addf %487, %21 : vector<2x32xf32>
    %489 = arith.mulf %477, %488 : vector<2x32xf32>
    %490 = arith.addf %486, %489 : vector<2x32xf32>
    %491 = math.tanh %490 : vector<2x32xf32>
    %cst_89 = arith.constant 1.000000e+00 : f32
    %492 = vector.broadcast %cst_89 : f32 to vector<2x32xf32>
    %493 = arith.subf %492, %485 : vector<2x32xf32>
    %494 = arith.mulf %493, %491 : vector<2x32xf32>
    %495 = arith.mulf %485, %434 : vector<2x32xf32>
    %496 = arith.addf %494, %495 : vector<2x32xf32>
    %497 = vector.extract_strided_slice %469 {offsets = [0, 0], sizes = [2, 32], strides = [1, 1]} : vector<2x96xf32> to vector<2x32xf32>
    %498 = vector.extract_strided_slice %463 {offsets = [0, 0], sizes = [2, 32], strides = [1, 1]} : vector<2x96xf32> to vector<2x32xf32>
    %499 = arith.addf %497, %498 : vector<2x32xf32>
    %500 = arith.negf %499 : vector<2x32xf32>
    %501 = math.exp %500 : vector<2x32xf32>
    %cst_90 = arith.constant 1.000000e+00 : f32
    %502 = vector.broadcast %cst_90 : f32 to vector<2x32xf32>
    %503 = arith.addf %502, %501 : vector<2x32xf32>
    %504 = arith.divf %502, %503 : vector<2x32xf32>
    %505 = vector.extract_strided_slice %469 {offsets = [0, 32], sizes = [2, 32], strides = [1, 1]} : vector<2x96xf32> to vector<2x32xf32>
    %506 = vector.extract_strided_slice %463 {offsets = [0, 32], sizes = [2, 32], strides = [1, 1]} : vector<2x96xf32> to vector<2x32xf32>
    %507 = arith.addf %505, %506 : vector<2x32xf32>
    %508 = arith.negf %507 : vector<2x32xf32>
    %509 = math.exp %508 : vector<2x32xf32>
    %cst_91 = arith.constant 1.000000e+00 : f32
    %510 = vector.broadcast %cst_91 : f32 to vector<2x32xf32>
    %511 = arith.addf %510, %509 : vector<2x32xf32>
    %512 = arith.divf %510, %511 : vector<2x32xf32>
    %513 = vector.extract_strided_slice %469 {offsets = [0, 64], sizes = [2, 32], strides = [1, 1]} : vector<2x96xf32> to vector<2x32xf32>
    %514 = vector.extract_strided_slice %463 {offsets = [0, 64], sizes = [2, 32], strides = [1, 1]} : vector<2x96xf32> to vector<2x32xf32>
    %515 = arith.addf %514, %25 : vector<2x32xf32>
    %516 = arith.mulf %504, %515 : vector<2x32xf32>
    %517 = arith.addf %513, %516 : vector<2x32xf32>
    %518 = math.tanh %517 : vector<2x32xf32>
    %cst_92 = arith.constant 1.000000e+00 : f32
    %519 = vector.broadcast %cst_92 : f32 to vector<2x32xf32>
    %520 = arith.subf %519, %512 : vector<2x32xf32>
    %521 = arith.mulf %520, %518 : vector<2x32xf32>
    %522 = arith.mulf %512, %461 : vector<2x32xf32>
    %523 = arith.addf %521, %522 : vector<2x32xf32>
    %524 = vector.extract_strided_slice %62 {offsets = [0, 0], sizes = [1, 32], strides = [1, 1]} : vector<2x32xf32> to vector<1x32xf32>
    %525 = vector.extract_strided_slice %523 {offsets = [0, 0], sizes = [1, 32], strides = [1, 1]} : vector<2x32xf32> to vector<1x32xf32>
    %526 = tpu.concatenate %524, %525 in 1 : vector<1x32xf32>, vector<1x32xf32> -> vector<1x64xf32>
    %527 = vector.extract_strided_slice %124 {offsets = [0, 0], sizes = [1, 32], strides = [1, 1]} : vector<2x32xf32> to vector<1x32xf32>
    %528 = vector.extract_strided_slice %461 {offsets = [0, 0], sizes = [1, 32], strides = [1, 1]} : vector<2x32xf32> to vector<1x32xf32>
    %529 = tpu.concatenate %527, %528 in 1 : vector<1x32xf32>, vector<1x32xf32> -> vector<1x64xf32>
    %530 = vector.extract_strided_slice %186 {offsets = [0, 0], sizes = [1, 32], strides = [1, 1]} : vector<2x32xf32> to vector<1x32xf32>
    %531 = vector.extract_strided_slice %399 {offsets = [0, 0], sizes = [1, 32], strides = [1, 1]} : vector<2x32xf32> to vector<1x32xf32>
    %532 = tpu.concatenate %530, %531 in 1 : vector<1x32xf32>, vector<1x32xf32> -> vector<1x64xf32>
    %533 = vector.extract_strided_slice %248 {offsets = [0, 0], sizes = [1, 32], strides = [1, 1]} : vector<2x32xf32> to vector<1x32xf32>
    %534 = vector.extract_strided_slice %337 {offsets = [0, 0], sizes = [1, 32], strides = [1, 1]} : vector<2x32xf32> to vector<1x32xf32>
    %535 = tpu.concatenate %533, %534 in 1 : vector<1x32xf32>, vector<1x32xf32> -> vector<1x64xf32>
    %536 = vector.extract_strided_slice %310 {offsets = [0, 0], sizes = [1, 32], strides = [1, 1]} : vector<2x32xf32> to vector<1x32xf32>
    %537 = vector.extract_strided_slice %275 {offsets = [0, 0], sizes = [1, 32], strides = [1, 1]} : vector<2x32xf32> to vector<1x32xf32>
    %538 = tpu.concatenate %536, %537 in 1 : vector<1x32xf32>, vector<1x32xf32> -> vector<1x64xf32>
    %539 = vector.extract_strided_slice %372 {offsets = [0, 0], sizes = [1, 32], strides = [1, 1]} : vector<2x32xf32> to vector<1x32xf32>
    %540 = vector.extract_strided_slice %213 {offsets = [0, 0], sizes = [1, 32], strides = [1, 1]} : vector<2x32xf32> to vector<1x32xf32>
    %541 = tpu.concatenate %539, %540 in 1 : vector<1x32xf32>, vector<1x32xf32> -> vector<1x64xf32>
    %542 = vector.extract_strided_slice %434 {offsets = [0, 0], sizes = [1, 32], strides = [1, 1]} : vector<2x32xf32> to vector<1x32xf32>
    %543 = vector.extract_strided_slice %151 {offsets = [0, 0], sizes = [1, 32], strides = [1, 1]} : vector<2x32xf32> to vector<1x32xf32>
    %544 = tpu.concatenate %542, %543 in 1 : vector<1x32xf32>, vector<1x32xf32> -> vector<1x64xf32>
    %545 = vector.extract_strided_slice %496 {offsets = [0, 0], sizes = [1, 32], strides = [1, 1]} : vector<2x32xf32> to vector<1x32xf32>
    %546 = vector.extract_strided_slice %89 {offsets = [0, 0], sizes = [1, 32], strides = [1, 1]} : vector<2x32xf32> to vector<1x32xf32>
    %547 = tpu.concatenate %545, %546 in 1 : vector<1x32xf32>, vector<1x32xf32> -> vector<1x64xf32>
    %548 = tpu.concatenate %526, %529, %532, %535, %538, %541, %544, %547 in 0 : vector<1x64xf32>, vector<1x64xf32>, vector<1x64xf32>, vector<1x64xf32>, vector<1x64xf32>, vector<1x64xf32>, vector<1x64xf32>, vector<1x64xf32> -> vector<8x64xf32>
    %549 = vector.extract_strided_slice %62 {offsets = [1, 0], sizes = [1, 32], strides = [1, 1]} : vector<2x32xf32> to vector<1x32xf32>
    %550 = vector.extract_strided_slice %523 {offsets = [1, 0], sizes = [1, 32], strides = [1, 1]} : vector<2x32xf32> to vector<1x32xf32>
    %551 = tpu.concatenate %549, %550 in 1 : vector<1x32xf32>, vector<1x32xf32> -> vector<1x64xf32>
    %552 = vector.extract_strided_slice %124 {offsets = [1, 0], sizes = [1, 32], strides = [1, 1]} : vector<2x32xf32> to vector<1x32xf32>
    %553 = vector.extract_strided_slice %461 {offsets = [1, 0], sizes = [1, 32], strides = [1, 1]} : vector<2x32xf32> to vector<1x32xf32>
    %554 = tpu.concatenate %552, %553 in 1 : vector<1x32xf32>, vector<1x32xf32> -> vector<1x64xf32>
    %555 = vector.extract_strided_slice %186 {offsets = [1, 0], sizes = [1, 32], strides = [1, 1]} : vector<2x32xf32> to vector<1x32xf32>
    %556 = vector.extract_strided_slice %399 {offsets = [1, 0], sizes = [1, 32], strides = [1, 1]} : vector<2x32xf32> to vector<1x32xf32>
    %557 = tpu.concatenate %555, %556 in 1 : vector<1x32xf32>, vector<1x32xf32> -> vector<1x64xf32>
    %558 = vector.extract_strided_slice %248 {offsets = [1, 0], sizes = [1, 32], strides = [1, 1]} : vector<2x32xf32> to vector<1x32xf32>
    %559 = vector.extract_strided_slice %337 {offsets = [1, 0], sizes = [1, 32], strides = [1, 1]} : vector<2x32xf32> to vector<1x32xf32>
    %560 = tpu.concatenate %558, %559 in 1 : vector<1x32xf32>, vector<1x32xf32> -> vector<1x64xf32>
    %561 = vector.extract_strided_slice %310 {offsets = [1, 0], sizes = [1, 32], strides = [1, 1]} : vector<2x32xf32> to vector<1x32xf32>
    %562 = vector.extract_strided_slice %275 {offsets = [1, 0], sizes = [1, 32], strides = [1, 1]} : vector<2x32xf32> to vector<1x32xf32>
    %563 = tpu.concatenate %561, %562 in 1 : vector<1x32xf32>, vector<1x32xf32> -> vector<1x64xf32>
    %564 = vector.extract_strided_slice %372 {offsets = [1, 0], sizes = [1, 32], strides = [1, 1]} : vector<2x32xf32> to vector<1x32xf32>
    %565 = vector.extract_strided_slice %213 {offsets = [1, 0], sizes = [1, 32], strides = [1, 1]} : vector<2x32xf32> to vector<1x32xf32>
    %566 = tpu.concatenate %564, %565 in 1 : vector<1x32xf32>, vector<1x32xf32> -> vector<1x64xf32>
    %567 = vector.extract_strided_slice %434 {offsets = [1, 0], sizes = [1, 32], strides = [1, 1]} : vector<2x32xf32> to vector<1x32xf32>
    %568 = vector.extract_strided_slice %151 {offsets = [1, 0], sizes = [1, 32], strides = [1, 1]} : vector<2x32xf32> to vector<1x32xf32>
    %569 = tpu.concatenate %567, %568 in 1 : vector<1x32xf32>, vector<1x32xf32> -> vector<1x64xf32>
    %570 = vector.extract_strided_slice %496 {offsets = [1, 0], sizes = [1, 32], strides = [1, 1]} : vector<2x32xf32> to vector<1x32xf32>
    %571 = vector.extract_strided_slice %89 {offsets = [1, 0], sizes = [1, 32], strides = [1, 1]} : vector<2x32xf32> to vector<1x32xf32>
    %572 = tpu.concatenate %570, %571 in 1 : vector<1x32xf32>, vector<1x32xf32> -> vector<1x64xf32>
    %573 = tpu.concatenate %551, %554, %557, %560, %563, %566, %569, %572 in 0 : vector<1x64xf32>, vector<1x64xf32>, vector<1x64xf32>, vector<1x64xf32>, vector<1x64xf32>, vector<1x64xf32>, vector<1x64xf32>, vector<1x64xf32> -> vector<8x64xf32>
    %c1_93 = arith.constant 1 : index
    %c0_94 = arith.constant 0 : index
    %c0_95 = arith.constant 0 : index
    %574 = vector.load %arg1[%c1_93, %c0_94, %c0_95] : memref<2x64x192xf32, #tpu.memory_space<vmem>>, vector<1x64x192xf32>
    %575 = vector.shape_cast %574 : vector<1x64x192xf32> to vector<64x192xf32>
    %c1_96 = arith.constant 1 : index
    %c0_97 = arith.constant 0 : index
    %c0_98 = arith.constant 0 : index
    %576 = vector.load %arg2[%c1_96, %c0_97, %c0_98] : memref<2x1x192xf32, #tpu.memory_space<vmem>>, vector<1x1x192xf32>
    %577 = vector.shape_cast %576 : vector<1x1x192xf32> to vector<1x192xf32>
    %578 = vector.shape_cast %577 : vector<1x192xf32> to vector<1x192xf32>
    %579 = vector.broadcast %578 : vector<1x192xf32> to vector<8x192xf32>
    %cst_99 = arith.constant dense<0.000000e+00> : vector<8x192xf32>
    %580 = tpu.matmul %548, %575, %cst_99 {dimension_numbers = #tpu.dot_dimension_numbers<[1], [0], [0], [1], [0, 0, 1, 1], [], []>} : vector<8x64xf32>, vector<64x192xf32>, vector<8x192xf32> -> vector<8x192xf32>
    %581 = arith.addf %580, %579 : vector<8x192xf32>
    %cst_100 = arith.constant dense<0.000000e+00> : vector<8x192xf32>
    %582 = tpu.matmul %573, %575, %cst_100 {dimension_numbers = #tpu.dot_dimension_numbers<[1], [0], [0], [1], [0, 0, 1, 1], [], []>} : vector<8x64xf32>, vector<64x192xf32>, vector<8x192xf32> -> vector<8x192xf32>
    %583 = arith.addf %582, %579 : vector<8x192xf32>
    %c1_101 = arith.constant 1 : index
    %c0_102 = arith.constant 0 : index
    %c0_103 = arith.constant 0 : index
    %c0_104 = arith.constant 0 : index
    %584 = vector.load %arg3[%c1_101, %c0_102, %c0_103, %c0_104] : memref<2x2x32x96xf32, #tpu.memory_space<vmem>>, vector<1x1x32x96xf32>
    %585 = vector.shape_cast %584 : vector<1x1x32x96xf32> to vector<32x96xf32>
    %c1_105 = arith.constant 1 : index
    %c1_106 = arith.constant 1 : index
    %c0_107 = arith.constant 0 : index
    %c0_108 = arith.constant 0 : index
    %586 = vector.load %arg3[%c1_105, %c1_106, %c0_107, %c0_108] : memref<2x2x32x96xf32, #tpu.memory_space<vmem>>, vector<1x1x32x96xf32>
    %587 = vector.shape_cast %586 : vector<1x1x32x96xf32> to vector<32x96xf32>
    %c1_109 = arith.constant 1 : index
    %c0_110 = arith.constant 0 : index
    %c0_111 = arith.constant 0 : index
    %c0_112 = arith.constant 0 : index
    %588 = vector.load %arg4[%c1_109, %c0_110, %c0_111, %c0_112] : memref<2x2x1x32xf32, #tpu.memory_space<vmem>>, vector<1x1x1x32xf32>
    %589 = vector.shape_cast %588 : vector<1x1x1x32xf32> to vector<1x32xf32>
    %590 = vector.shape_cast %589 : vector<1x32xf32> to vector<1x32xf32>
    %591 = vector.broadcast %590 : vector<1x32xf32> to vector<2x32xf32>
    %c1_113 = arith.constant 1 : index
    %c1_114 = arith.constant 1 : index
    %c0_115 = arith.constant 0 : index
    %c0_116 = arith.constant 0 : index
    %592 = vector.load %arg4[%c1_113, %c1_114, %c0_115, %c0_116] : memref<2x2x1x32xf32, #tpu.memory_space<vmem>>, vector<1x1x1x32xf32>
    %593 = vector.shape_cast %592 : vector<1x1x1x32xf32> to vector<1x32xf32>
    %594 = vector.shape_cast %593 : vector<1x32xf32> to vector<1x32xf32>
    %595 = vector.broadcast %594 : vector<1x32xf32> to vector<2x32xf32>
    %cst_117 = arith.constant 0.000000e+00 : f32
    %596 = vector.broadcast %cst_117 : f32 to vector<2x32xf32>
    %cst_118 = arith.constant 0.000000e+00 : f32
    %597 = vector.broadcast %cst_118 : f32 to vector<2x32xf32>
    %cst_119 = arith.constant dense<0.000000e+00> : vector<2x96xf32>
    %598 = tpu.matmul %596, %585, %cst_119 {dimension_numbers = #tpu.dot_dimension_numbers<[1], [0], [0], [1], [0, 0, 1, 1], [], []>} : vector<2x32xf32>, vector<32x96xf32>, vector<2x96xf32> -> vector<2x96xf32>
    %cst_120 = arith.constant dense<0.000000e+00> : vector<2x96xf32>
    %599 = tpu.matmul %597, %587, %cst_120 {dimension_numbers = #tpu.dot_dimension_numbers<[1], [0], [0], [1], [0, 0, 1, 1], [], []>} : vector<2x32xf32>, vector<32x96xf32>, vector<2x96xf32> -> vector<2x96xf32>
    %600 = vector.extract_strided_slice %581 {offsets = [0, 0], sizes = [1, 96], strides = [1, 1]} : vector<8x192xf32> to vector<1x96xf32>
    %601 = vector.extract_strided_slice %583 {offsets = [0, 0], sizes = [1, 96], strides = [1, 1]} : vector<8x192xf32> to vector<1x96xf32>
    %602 = tpu.concatenate %600, %601 in 0 : vector<1x96xf32>, vector<1x96xf32> -> vector<2x96xf32>
    %603 = vector.extract_strided_slice %581 {offsets = [7, 96], sizes = [1, 96], strides = [1, 1]} : vector<8x192xf32> to vector<1x96xf32>
    %604 = vector.extract_strided_slice %583 {offsets = [7, 96], sizes = [1, 96], strides = [1, 1]} : vector<8x192xf32> to vector<1x96xf32>
    %605 = tpu.concatenate %603, %604 in 0 : vector<1x96xf32>, vector<1x96xf32> -> vector<2x96xf32>
    %606 = vector.extract_strided_slice %602 {offsets = [0, 0], sizes = [2, 32], strides = [1, 1]} : vector<2x96xf32> to vector<2x32xf32>
    %607 = vector.extract_strided_slice %598 {offsets = [0, 0], sizes = [2, 32], strides = [1, 1]} : vector<2x96xf32> to vector<2x32xf32>
    %608 = arith.addf %606, %607 : vector<2x32xf32>
    %609 = arith.negf %608 : vector<2x32xf32>
    %610 = math.exp %609 : vector<2x32xf32>
    %cst_121 = arith.constant 1.000000e+00 : f32
    %611 = vector.broadcast %cst_121 : f32 to vector<2x32xf32>
    %612 = arith.addf %611, %610 : vector<2x32xf32>
    %613 = arith.divf %611, %612 : vector<2x32xf32>
    %614 = vector.extract_strided_slice %602 {offsets = [0, 32], sizes = [2, 32], strides = [1, 1]} : vector<2x96xf32> to vector<2x32xf32>
    %615 = vector.extract_strided_slice %598 {offsets = [0, 32], sizes = [2, 32], strides = [1, 1]} : vector<2x96xf32> to vector<2x32xf32>
    %616 = arith.addf %614, %615 : vector<2x32xf32>
    %617 = arith.negf %616 : vector<2x32xf32>
    %618 = math.exp %617 : vector<2x32xf32>
    %cst_122 = arith.constant 1.000000e+00 : f32
    %619 = vector.broadcast %cst_122 : f32 to vector<2x32xf32>
    %620 = arith.addf %619, %618 : vector<2x32xf32>
    %621 = arith.divf %619, %620 : vector<2x32xf32>
    %622 = vector.extract_strided_slice %602 {offsets = [0, 64], sizes = [2, 32], strides = [1, 1]} : vector<2x96xf32> to vector<2x32xf32>
    %623 = vector.extract_strided_slice %598 {offsets = [0, 64], sizes = [2, 32], strides = [1, 1]} : vector<2x96xf32> to vector<2x32xf32>
    %624 = arith.addf %623, %591 : vector<2x32xf32>
    %625 = arith.mulf %613, %624 : vector<2x32xf32>
    %626 = arith.addf %622, %625 : vector<2x32xf32>
    %627 = math.tanh %626 : vector<2x32xf32>
    %cst_123 = arith.constant 1.000000e+00 : f32
    %628 = vector.broadcast %cst_123 : f32 to vector<2x32xf32>
    %629 = arith.subf %628, %621 : vector<2x32xf32>
    %630 = arith.mulf %629, %627 : vector<2x32xf32>
    %631 = arith.mulf %621, %596 : vector<2x32xf32>
    %632 = arith.addf %630, %631 : vector<2x32xf32>
    %633 = vector.extract_strided_slice %605 {offsets = [0, 0], sizes = [2, 32], strides = [1, 1]} : vector<2x96xf32> to vector<2x32xf32>
    %634 = vector.extract_strided_slice %599 {offsets = [0, 0], sizes = [2, 32], strides = [1, 1]} : vector<2x96xf32> to vector<2x32xf32>
    %635 = arith.addf %633, %634 : vector<2x32xf32>
    %636 = arith.negf %635 : vector<2x32xf32>
    %637 = math.exp %636 : vector<2x32xf32>
    %cst_124 = arith.constant 1.000000e+00 : f32
    %638 = vector.broadcast %cst_124 : f32 to vector<2x32xf32>
    %639 = arith.addf %638, %637 : vector<2x32xf32>
    %640 = arith.divf %638, %639 : vector<2x32xf32>
    %641 = vector.extract_strided_slice %605 {offsets = [0, 32], sizes = [2, 32], strides = [1, 1]} : vector<2x96xf32> to vector<2x32xf32>
    %642 = vector.extract_strided_slice %599 {offsets = [0, 32], sizes = [2, 32], strides = [1, 1]} : vector<2x96xf32> to vector<2x32xf32>
    %643 = arith.addf %641, %642 : vector<2x32xf32>
    %644 = arith.negf %643 : vector<2x32xf32>
    %645 = math.exp %644 : vector<2x32xf32>
    %cst_125 = arith.constant 1.000000e+00 : f32
    %646 = vector.broadcast %cst_125 : f32 to vector<2x32xf32>
    %647 = arith.addf %646, %645 : vector<2x32xf32>
    %648 = arith.divf %646, %647 : vector<2x32xf32>
    %649 = vector.extract_strided_slice %605 {offsets = [0, 64], sizes = [2, 32], strides = [1, 1]} : vector<2x96xf32> to vector<2x32xf32>
    %650 = vector.extract_strided_slice %599 {offsets = [0, 64], sizes = [2, 32], strides = [1, 1]} : vector<2x96xf32> to vector<2x32xf32>
    %651 = arith.addf %650, %595 : vector<2x32xf32>
    %652 = arith.mulf %640, %651 : vector<2x32xf32>
    %653 = arith.addf %649, %652 : vector<2x32xf32>
    %654 = math.tanh %653 : vector<2x32xf32>
    %cst_126 = arith.constant 1.000000e+00 : f32
    %655 = vector.broadcast %cst_126 : f32 to vector<2x32xf32>
    %656 = arith.subf %655, %648 : vector<2x32xf32>
    %657 = arith.mulf %656, %654 : vector<2x32xf32>
    %658 = arith.mulf %648, %597 : vector<2x32xf32>
    %659 = arith.addf %657, %658 : vector<2x32xf32>
    %cst_127 = arith.constant dense<0.000000e+00> : vector<2x96xf32>
    %660 = tpu.matmul %632, %585, %cst_127 {dimension_numbers = #tpu.dot_dimension_numbers<[1], [0], [0], [1], [0, 0, 1, 1], [], []>} : vector<2x32xf32>, vector<32x96xf32>, vector<2x96xf32> -> vector<2x96xf32>
    %cst_128 = arith.constant dense<0.000000e+00> : vector<2x96xf32>
    %661 = tpu.matmul %659, %587, %cst_128 {dimension_numbers = #tpu.dot_dimension_numbers<[1], [0], [0], [1], [0, 0, 1, 1], [], []>} : vector<2x32xf32>, vector<32x96xf32>, vector<2x96xf32> -> vector<2x96xf32>
    %662 = vector.extract_strided_slice %581 {offsets = [1, 0], sizes = [1, 96], strides = [1, 1]} : vector<8x192xf32> to vector<1x96xf32>
    %663 = vector.extract_strided_slice %583 {offsets = [1, 0], sizes = [1, 96], strides = [1, 1]} : vector<8x192xf32> to vector<1x96xf32>
    %664 = tpu.concatenate %662, %663 in 0 : vector<1x96xf32>, vector<1x96xf32> -> vector<2x96xf32>
    %665 = vector.extract_strided_slice %581 {offsets = [6, 96], sizes = [1, 96], strides = [1, 1]} : vector<8x192xf32> to vector<1x96xf32>
    %666 = vector.extract_strided_slice %583 {offsets = [6, 96], sizes = [1, 96], strides = [1, 1]} : vector<8x192xf32> to vector<1x96xf32>
    %667 = tpu.concatenate %665, %666 in 0 : vector<1x96xf32>, vector<1x96xf32> -> vector<2x96xf32>
    %668 = vector.extract_strided_slice %664 {offsets = [0, 0], sizes = [2, 32], strides = [1, 1]} : vector<2x96xf32> to vector<2x32xf32>
    %669 = vector.extract_strided_slice %660 {offsets = [0, 0], sizes = [2, 32], strides = [1, 1]} : vector<2x96xf32> to vector<2x32xf32>
    %670 = arith.addf %668, %669 : vector<2x32xf32>
    %671 = arith.negf %670 : vector<2x32xf32>
    %672 = math.exp %671 : vector<2x32xf32>
    %cst_129 = arith.constant 1.000000e+00 : f32
    %673 = vector.broadcast %cst_129 : f32 to vector<2x32xf32>
    %674 = arith.addf %673, %672 : vector<2x32xf32>
    %675 = arith.divf %673, %674 : vector<2x32xf32>
    %676 = vector.extract_strided_slice %664 {offsets = [0, 32], sizes = [2, 32], strides = [1, 1]} : vector<2x96xf32> to vector<2x32xf32>
    %677 = vector.extract_strided_slice %660 {offsets = [0, 32], sizes = [2, 32], strides = [1, 1]} : vector<2x96xf32> to vector<2x32xf32>
    %678 = arith.addf %676, %677 : vector<2x32xf32>
    %679 = arith.negf %678 : vector<2x32xf32>
    %680 = math.exp %679 : vector<2x32xf32>
    %cst_130 = arith.constant 1.000000e+00 : f32
    %681 = vector.broadcast %cst_130 : f32 to vector<2x32xf32>
    %682 = arith.addf %681, %680 : vector<2x32xf32>
    %683 = arith.divf %681, %682 : vector<2x32xf32>
    %684 = vector.extract_strided_slice %664 {offsets = [0, 64], sizes = [2, 32], strides = [1, 1]} : vector<2x96xf32> to vector<2x32xf32>
    %685 = vector.extract_strided_slice %660 {offsets = [0, 64], sizes = [2, 32], strides = [1, 1]} : vector<2x96xf32> to vector<2x32xf32>
    %686 = arith.addf %685, %591 : vector<2x32xf32>
    %687 = arith.mulf %675, %686 : vector<2x32xf32>
    %688 = arith.addf %684, %687 : vector<2x32xf32>
    %689 = math.tanh %688 : vector<2x32xf32>
    %cst_131 = arith.constant 1.000000e+00 : f32
    %690 = vector.broadcast %cst_131 : f32 to vector<2x32xf32>
    %691 = arith.subf %690, %683 : vector<2x32xf32>
    %692 = arith.mulf %691, %689 : vector<2x32xf32>
    %693 = arith.mulf %683, %632 : vector<2x32xf32>
    %694 = arith.addf %692, %693 : vector<2x32xf32>
    %695 = vector.extract_strided_slice %667 {offsets = [0, 0], sizes = [2, 32], strides = [1, 1]} : vector<2x96xf32> to vector<2x32xf32>
    %696 = vector.extract_strided_slice %661 {offsets = [0, 0], sizes = [2, 32], strides = [1, 1]} : vector<2x96xf32> to vector<2x32xf32>
    %697 = arith.addf %695, %696 : vector<2x32xf32>
    %698 = arith.negf %697 : vector<2x32xf32>
    %699 = math.exp %698 : vector<2x32xf32>
    %cst_132 = arith.constant 1.000000e+00 : f32
    %700 = vector.broadcast %cst_132 : f32 to vector<2x32xf32>
    %701 = arith.addf %700, %699 : vector<2x32xf32>
    %702 = arith.divf %700, %701 : vector<2x32xf32>
    %703 = vector.extract_strided_slice %667 {offsets = [0, 32], sizes = [2, 32], strides = [1, 1]} : vector<2x96xf32> to vector<2x32xf32>
    %704 = vector.extract_strided_slice %661 {offsets = [0, 32], sizes = [2, 32], strides = [1, 1]} : vector<2x96xf32> to vector<2x32xf32>
    %705 = arith.addf %703, %704 : vector<2x32xf32>
    %706 = arith.negf %705 : vector<2x32xf32>
    %707 = math.exp %706 : vector<2x32xf32>
    %cst_133 = arith.constant 1.000000e+00 : f32
    %708 = vector.broadcast %cst_133 : f32 to vector<2x32xf32>
    %709 = arith.addf %708, %707 : vector<2x32xf32>
    %710 = arith.divf %708, %709 : vector<2x32xf32>
    %711 = vector.extract_strided_slice %667 {offsets = [0, 64], sizes = [2, 32], strides = [1, 1]} : vector<2x96xf32> to vector<2x32xf32>
    %712 = vector.extract_strided_slice %661 {offsets = [0, 64], sizes = [2, 32], strides = [1, 1]} : vector<2x96xf32> to vector<2x32xf32>
    %713 = arith.addf %712, %595 : vector<2x32xf32>
    %714 = arith.mulf %702, %713 : vector<2x32xf32>
    %715 = arith.addf %711, %714 : vector<2x32xf32>
    %716 = math.tanh %715 : vector<2x32xf32>
    %cst_134 = arith.constant 1.000000e+00 : f32
    %717 = vector.broadcast %cst_134 : f32 to vector<2x32xf32>
    %718 = arith.subf %717, %710 : vector<2x32xf32>
    %719 = arith.mulf %718, %716 : vector<2x32xf32>
    %720 = arith.mulf %710, %659 : vector<2x32xf32>
    %721 = arith.addf %719, %720 : vector<2x32xf32>
    %cst_135 = arith.constant dense<0.000000e+00> : vector<2x96xf32>
    %722 = tpu.matmul %694, %585, %cst_135 {dimension_numbers = #tpu.dot_dimension_numbers<[1], [0], [0], [1], [0, 0, 1, 1], [], []>} : vector<2x32xf32>, vector<32x96xf32>, vector<2x96xf32> -> vector<2x96xf32>
    %cst_136 = arith.constant dense<0.000000e+00> : vector<2x96xf32>
    %723 = tpu.matmul %721, %587, %cst_136 {dimension_numbers = #tpu.dot_dimension_numbers<[1], [0], [0], [1], [0, 0, 1, 1], [], []>} : vector<2x32xf32>, vector<32x96xf32>, vector<2x96xf32> -> vector<2x96xf32>
    %724 = vector.extract_strided_slice %581 {offsets = [2, 0], sizes = [1, 96], strides = [1, 1]} : vector<8x192xf32> to vector<1x96xf32>
    %725 = vector.extract_strided_slice %583 {offsets = [2, 0], sizes = [1, 96], strides = [1, 1]} : vector<8x192xf32> to vector<1x96xf32>
    %726 = tpu.concatenate %724, %725 in 0 : vector<1x96xf32>, vector<1x96xf32> -> vector<2x96xf32>
    %727 = vector.extract_strided_slice %581 {offsets = [5, 96], sizes = [1, 96], strides = [1, 1]} : vector<8x192xf32> to vector<1x96xf32>
    %728 = vector.extract_strided_slice %583 {offsets = [5, 96], sizes = [1, 96], strides = [1, 1]} : vector<8x192xf32> to vector<1x96xf32>
    %729 = tpu.concatenate %727, %728 in 0 : vector<1x96xf32>, vector<1x96xf32> -> vector<2x96xf32>
    %730 = vector.extract_strided_slice %726 {offsets = [0, 0], sizes = [2, 32], strides = [1, 1]} : vector<2x96xf32> to vector<2x32xf32>
    %731 = vector.extract_strided_slice %722 {offsets = [0, 0], sizes = [2, 32], strides = [1, 1]} : vector<2x96xf32> to vector<2x32xf32>
    %732 = arith.addf %730, %731 : vector<2x32xf32>
    %733 = arith.negf %732 : vector<2x32xf32>
    %734 = math.exp %733 : vector<2x32xf32>
    %cst_137 = arith.constant 1.000000e+00 : f32
    %735 = vector.broadcast %cst_137 : f32 to vector<2x32xf32>
    %736 = arith.addf %735, %734 : vector<2x32xf32>
    %737 = arith.divf %735, %736 : vector<2x32xf32>
    %738 = vector.extract_strided_slice %726 {offsets = [0, 32], sizes = [2, 32], strides = [1, 1]} : vector<2x96xf32> to vector<2x32xf32>
    %739 = vector.extract_strided_slice %722 {offsets = [0, 32], sizes = [2, 32], strides = [1, 1]} : vector<2x96xf32> to vector<2x32xf32>
    %740 = arith.addf %738, %739 : vector<2x32xf32>
    %741 = arith.negf %740 : vector<2x32xf32>
    %742 = math.exp %741 : vector<2x32xf32>
    %cst_138 = arith.constant 1.000000e+00 : f32
    %743 = vector.broadcast %cst_138 : f32 to vector<2x32xf32>
    %744 = arith.addf %743, %742 : vector<2x32xf32>
    %745 = arith.divf %743, %744 : vector<2x32xf32>
    %746 = vector.extract_strided_slice %726 {offsets = [0, 64], sizes = [2, 32], strides = [1, 1]} : vector<2x96xf32> to vector<2x32xf32>
    %747 = vector.extract_strided_slice %722 {offsets = [0, 64], sizes = [2, 32], strides = [1, 1]} : vector<2x96xf32> to vector<2x32xf32>
    %748 = arith.addf %747, %591 : vector<2x32xf32>
    %749 = arith.mulf %737, %748 : vector<2x32xf32>
    %750 = arith.addf %746, %749 : vector<2x32xf32>
    %751 = math.tanh %750 : vector<2x32xf32>
    %cst_139 = arith.constant 1.000000e+00 : f32
    %752 = vector.broadcast %cst_139 : f32 to vector<2x32xf32>
    %753 = arith.subf %752, %745 : vector<2x32xf32>
    %754 = arith.mulf %753, %751 : vector<2x32xf32>
    %755 = arith.mulf %745, %694 : vector<2x32xf32>
    %756 = arith.addf %754, %755 : vector<2x32xf32>
    %757 = vector.extract_strided_slice %729 {offsets = [0, 0], sizes = [2, 32], strides = [1, 1]} : vector<2x96xf32> to vector<2x32xf32>
    %758 = vector.extract_strided_slice %723 {offsets = [0, 0], sizes = [2, 32], strides = [1, 1]} : vector<2x96xf32> to vector<2x32xf32>
    %759 = arith.addf %757, %758 : vector<2x32xf32>
    %760 = arith.negf %759 : vector<2x32xf32>
    %761 = math.exp %760 : vector<2x32xf32>
    %cst_140 = arith.constant 1.000000e+00 : f32
    %762 = vector.broadcast %cst_140 : f32 to vector<2x32xf32>
    %763 = arith.addf %762, %761 : vector<2x32xf32>
    %764 = arith.divf %762, %763 : vector<2x32xf32>
    %765 = vector.extract_strided_slice %729 {offsets = [0, 32], sizes = [2, 32], strides = [1, 1]} : vector<2x96xf32> to vector<2x32xf32>
    %766 = vector.extract_strided_slice %723 {offsets = [0, 32], sizes = [2, 32], strides = [1, 1]} : vector<2x96xf32> to vector<2x32xf32>
    %767 = arith.addf %765, %766 : vector<2x32xf32>
    %768 = arith.negf %767 : vector<2x32xf32>
    %769 = math.exp %768 : vector<2x32xf32>
    %cst_141 = arith.constant 1.000000e+00 : f32
    %770 = vector.broadcast %cst_141 : f32 to vector<2x32xf32>
    %771 = arith.addf %770, %769 : vector<2x32xf32>
    %772 = arith.divf %770, %771 : vector<2x32xf32>
    %773 = vector.extract_strided_slice %729 {offsets = [0, 64], sizes = [2, 32], strides = [1, 1]} : vector<2x96xf32> to vector<2x32xf32>
    %774 = vector.extract_strided_slice %723 {offsets = [0, 64], sizes = [2, 32], strides = [1, 1]} : vector<2x96xf32> to vector<2x32xf32>
    %775 = arith.addf %774, %595 : vector<2x32xf32>
    %776 = arith.mulf %764, %775 : vector<2x32xf32>
    %777 = arith.addf %773, %776 : vector<2x32xf32>
    %778 = math.tanh %777 : vector<2x32xf32>
    %cst_142 = arith.constant 1.000000e+00 : f32
    %779 = vector.broadcast %cst_142 : f32 to vector<2x32xf32>
    %780 = arith.subf %779, %772 : vector<2x32xf32>
    %781 = arith.mulf %780, %778 : vector<2x32xf32>
    %782 = arith.mulf %772, %721 : vector<2x32xf32>
    %783 = arith.addf %781, %782 : vector<2x32xf32>
    %cst_143 = arith.constant dense<0.000000e+00> : vector<2x96xf32>
    %784 = tpu.matmul %756, %585, %cst_143 {dimension_numbers = #tpu.dot_dimension_numbers<[1], [0], [0], [1], [0, 0, 1, 1], [], []>} : vector<2x32xf32>, vector<32x96xf32>, vector<2x96xf32> -> vector<2x96xf32>
    %cst_144 = arith.constant dense<0.000000e+00> : vector<2x96xf32>
    %785 = tpu.matmul %783, %587, %cst_144 {dimension_numbers = #tpu.dot_dimension_numbers<[1], [0], [0], [1], [0, 0, 1, 1], [], []>} : vector<2x32xf32>, vector<32x96xf32>, vector<2x96xf32> -> vector<2x96xf32>
    %786 = vector.extract_strided_slice %581 {offsets = [3, 0], sizes = [1, 96], strides = [1, 1]} : vector<8x192xf32> to vector<1x96xf32>
    %787 = vector.extract_strided_slice %583 {offsets = [3, 0], sizes = [1, 96], strides = [1, 1]} : vector<8x192xf32> to vector<1x96xf32>
    %788 = tpu.concatenate %786, %787 in 0 : vector<1x96xf32>, vector<1x96xf32> -> vector<2x96xf32>
    %789 = vector.extract_strided_slice %581 {offsets = [4, 96], sizes = [1, 96], strides = [1, 1]} : vector<8x192xf32> to vector<1x96xf32>
    %790 = vector.extract_strided_slice %583 {offsets = [4, 96], sizes = [1, 96], strides = [1, 1]} : vector<8x192xf32> to vector<1x96xf32>
    %791 = tpu.concatenate %789, %790 in 0 : vector<1x96xf32>, vector<1x96xf32> -> vector<2x96xf32>
    %792 = vector.extract_strided_slice %788 {offsets = [0, 0], sizes = [2, 32], strides = [1, 1]} : vector<2x96xf32> to vector<2x32xf32>
    %793 = vector.extract_strided_slice %784 {offsets = [0, 0], sizes = [2, 32], strides = [1, 1]} : vector<2x96xf32> to vector<2x32xf32>
    %794 = arith.addf %792, %793 : vector<2x32xf32>
    %795 = arith.negf %794 : vector<2x32xf32>
    %796 = math.exp %795 : vector<2x32xf32>
    %cst_145 = arith.constant 1.000000e+00 : f32
    %797 = vector.broadcast %cst_145 : f32 to vector<2x32xf32>
    %798 = arith.addf %797, %796 : vector<2x32xf32>
    %799 = arith.divf %797, %798 : vector<2x32xf32>
    %800 = vector.extract_strided_slice %788 {offsets = [0, 32], sizes = [2, 32], strides = [1, 1]} : vector<2x96xf32> to vector<2x32xf32>
    %801 = vector.extract_strided_slice %784 {offsets = [0, 32], sizes = [2, 32], strides = [1, 1]} : vector<2x96xf32> to vector<2x32xf32>
    %802 = arith.addf %800, %801 : vector<2x32xf32>
    %803 = arith.negf %802 : vector<2x32xf32>
    %804 = math.exp %803 : vector<2x32xf32>
    %cst_146 = arith.constant 1.000000e+00 : f32
    %805 = vector.broadcast %cst_146 : f32 to vector<2x32xf32>
    %806 = arith.addf %805, %804 : vector<2x32xf32>
    %807 = arith.divf %805, %806 : vector<2x32xf32>
    %808 = vector.extract_strided_slice %788 {offsets = [0, 64], sizes = [2, 32], strides = [1, 1]} : vector<2x96xf32> to vector<2x32xf32>
    %809 = vector.extract_strided_slice %784 {offsets = [0, 64], sizes = [2, 32], strides = [1, 1]} : vector<2x96xf32> to vector<2x32xf32>
    %810 = arith.addf %809, %591 : vector<2x32xf32>
    %811 = arith.mulf %799, %810 : vector<2x32xf32>
    %812 = arith.addf %808, %811 : vector<2x32xf32>
    %813 = math.tanh %812 : vector<2x32xf32>
    %cst_147 = arith.constant 1.000000e+00 : f32
    %814 = vector.broadcast %cst_147 : f32 to vector<2x32xf32>
    %815 = arith.subf %814, %807 : vector<2x32xf32>
    %816 = arith.mulf %815, %813 : vector<2x32xf32>
    %817 = arith.mulf %807, %756 : vector<2x32xf32>
    %818 = arith.addf %816, %817 : vector<2x32xf32>
    %819 = vector.extract_strided_slice %791 {offsets = [0, 0], sizes = [2, 32], strides = [1, 1]} : vector<2x96xf32> to vector<2x32xf32>
    %820 = vector.extract_strided_slice %785 {offsets = [0, 0], sizes = [2, 32], strides = [1, 1]} : vector<2x96xf32> to vector<2x32xf32>
    %821 = arith.addf %819, %820 : vector<2x32xf32>
    %822 = arith.negf %821 : vector<2x32xf32>
    %823 = math.exp %822 : vector<2x32xf32>
    %cst_148 = arith.constant 1.000000e+00 : f32
    %824 = vector.broadcast %cst_148 : f32 to vector<2x32xf32>
    %825 = arith.addf %824, %823 : vector<2x32xf32>
    %826 = arith.divf %824, %825 : vector<2x32xf32>
    %827 = vector.extract_strided_slice %791 {offsets = [0, 32], sizes = [2, 32], strides = [1, 1]} : vector<2x96xf32> to vector<2x32xf32>
    %828 = vector.extract_strided_slice %785 {offsets = [0, 32], sizes = [2, 32], strides = [1, 1]} : vector<2x96xf32> to vector<2x32xf32>
    %829 = arith.addf %827, %828 : vector<2x32xf32>
    %830 = arith.negf %829 : vector<2x32xf32>
    %831 = math.exp %830 : vector<2x32xf32>
    %cst_149 = arith.constant 1.000000e+00 : f32
    %832 = vector.broadcast %cst_149 : f32 to vector<2x32xf32>
    %833 = arith.addf %832, %831 : vector<2x32xf32>
    %834 = arith.divf %832, %833 : vector<2x32xf32>
    %835 = vector.extract_strided_slice %791 {offsets = [0, 64], sizes = [2, 32], strides = [1, 1]} : vector<2x96xf32> to vector<2x32xf32>
    %836 = vector.extract_strided_slice %785 {offsets = [0, 64], sizes = [2, 32], strides = [1, 1]} : vector<2x96xf32> to vector<2x32xf32>
    %837 = arith.addf %836, %595 : vector<2x32xf32>
    %838 = arith.mulf %826, %837 : vector<2x32xf32>
    %839 = arith.addf %835, %838 : vector<2x32xf32>
    %840 = math.tanh %839 : vector<2x32xf32>
    %cst_150 = arith.constant 1.000000e+00 : f32
    %841 = vector.broadcast %cst_150 : f32 to vector<2x32xf32>
    %842 = arith.subf %841, %834 : vector<2x32xf32>
    %843 = arith.mulf %842, %840 : vector<2x32xf32>
    %844 = arith.mulf %834, %783 : vector<2x32xf32>
    %845 = arith.addf %843, %844 : vector<2x32xf32>
    %cst_151 = arith.constant dense<0.000000e+00> : vector<2x96xf32>
    %846 = tpu.matmul %818, %585, %cst_151 {dimension_numbers = #tpu.dot_dimension_numbers<[1], [0], [0], [1], [0, 0, 1, 1], [], []>} : vector<2x32xf32>, vector<32x96xf32>, vector<2x96xf32> -> vector<2x96xf32>
    %cst_152 = arith.constant dense<0.000000e+00> : vector<2x96xf32>
    %847 = tpu.matmul %845, %587, %cst_152 {dimension_numbers = #tpu.dot_dimension_numbers<[1], [0], [0], [1], [0, 0, 1, 1], [], []>} : vector<2x32xf32>, vector<32x96xf32>, vector<2x96xf32> -> vector<2x96xf32>
    %848 = vector.extract_strided_slice %581 {offsets = [4, 0], sizes = [1, 96], strides = [1, 1]} : vector<8x192xf32> to vector<1x96xf32>
    %849 = vector.extract_strided_slice %583 {offsets = [4, 0], sizes = [1, 96], strides = [1, 1]} : vector<8x192xf32> to vector<1x96xf32>
    %850 = tpu.concatenate %848, %849 in 0 : vector<1x96xf32>, vector<1x96xf32> -> vector<2x96xf32>
    %851 = vector.extract_strided_slice %581 {offsets = [3, 96], sizes = [1, 96], strides = [1, 1]} : vector<8x192xf32> to vector<1x96xf32>
    %852 = vector.extract_strided_slice %583 {offsets = [3, 96], sizes = [1, 96], strides = [1, 1]} : vector<8x192xf32> to vector<1x96xf32>
    %853 = tpu.concatenate %851, %852 in 0 : vector<1x96xf32>, vector<1x96xf32> -> vector<2x96xf32>
    %854 = vector.extract_strided_slice %850 {offsets = [0, 0], sizes = [2, 32], strides = [1, 1]} : vector<2x96xf32> to vector<2x32xf32>
    %855 = vector.extract_strided_slice %846 {offsets = [0, 0], sizes = [2, 32], strides = [1, 1]} : vector<2x96xf32> to vector<2x32xf32>
    %856 = arith.addf %854, %855 : vector<2x32xf32>
    %857 = arith.negf %856 : vector<2x32xf32>
    %858 = math.exp %857 : vector<2x32xf32>
    %cst_153 = arith.constant 1.000000e+00 : f32
    %859 = vector.broadcast %cst_153 : f32 to vector<2x32xf32>
    %860 = arith.addf %859, %858 : vector<2x32xf32>
    %861 = arith.divf %859, %860 : vector<2x32xf32>
    %862 = vector.extract_strided_slice %850 {offsets = [0, 32], sizes = [2, 32], strides = [1, 1]} : vector<2x96xf32> to vector<2x32xf32>
    %863 = vector.extract_strided_slice %846 {offsets = [0, 32], sizes = [2, 32], strides = [1, 1]} : vector<2x96xf32> to vector<2x32xf32>
    %864 = arith.addf %862, %863 : vector<2x32xf32>
    %865 = arith.negf %864 : vector<2x32xf32>
    %866 = math.exp %865 : vector<2x32xf32>
    %cst_154 = arith.constant 1.000000e+00 : f32
    %867 = vector.broadcast %cst_154 : f32 to vector<2x32xf32>
    %868 = arith.addf %867, %866 : vector<2x32xf32>
    %869 = arith.divf %867, %868 : vector<2x32xf32>
    %870 = vector.extract_strided_slice %850 {offsets = [0, 64], sizes = [2, 32], strides = [1, 1]} : vector<2x96xf32> to vector<2x32xf32>
    %871 = vector.extract_strided_slice %846 {offsets = [0, 64], sizes = [2, 32], strides = [1, 1]} : vector<2x96xf32> to vector<2x32xf32>
    %872 = arith.addf %871, %591 : vector<2x32xf32>
    %873 = arith.mulf %861, %872 : vector<2x32xf32>
    %874 = arith.addf %870, %873 : vector<2x32xf32>
    %875 = math.tanh %874 : vector<2x32xf32>
    %cst_155 = arith.constant 1.000000e+00 : f32
    %876 = vector.broadcast %cst_155 : f32 to vector<2x32xf32>
    %877 = arith.subf %876, %869 : vector<2x32xf32>
    %878 = arith.mulf %877, %875 : vector<2x32xf32>
    %879 = arith.mulf %869, %818 : vector<2x32xf32>
    %880 = arith.addf %878, %879 : vector<2x32xf32>
    %881 = vector.extract_strided_slice %853 {offsets = [0, 0], sizes = [2, 32], strides = [1, 1]} : vector<2x96xf32> to vector<2x32xf32>
    %882 = vector.extract_strided_slice %847 {offsets = [0, 0], sizes = [2, 32], strides = [1, 1]} : vector<2x96xf32> to vector<2x32xf32>
    %883 = arith.addf %881, %882 : vector<2x32xf32>
    %884 = arith.negf %883 : vector<2x32xf32>
    %885 = math.exp %884 : vector<2x32xf32>
    %cst_156 = arith.constant 1.000000e+00 : f32
    %886 = vector.broadcast %cst_156 : f32 to vector<2x32xf32>
    %887 = arith.addf %886, %885 : vector<2x32xf32>
    %888 = arith.divf %886, %887 : vector<2x32xf32>
    %889 = vector.extract_strided_slice %853 {offsets = [0, 32], sizes = [2, 32], strides = [1, 1]} : vector<2x96xf32> to vector<2x32xf32>
    %890 = vector.extract_strided_slice %847 {offsets = [0, 32], sizes = [2, 32], strides = [1, 1]} : vector<2x96xf32> to vector<2x32xf32>
    %891 = arith.addf %889, %890 : vector<2x32xf32>
    %892 = arith.negf %891 : vector<2x32xf32>
    %893 = math.exp %892 : vector<2x32xf32>
    %cst_157 = arith.constant 1.000000e+00 : f32
    %894 = vector.broadcast %cst_157 : f32 to vector<2x32xf32>
    %895 = arith.addf %894, %893 : vector<2x32xf32>
    %896 = arith.divf %894, %895 : vector<2x32xf32>
    %897 = vector.extract_strided_slice %853 {offsets = [0, 64], sizes = [2, 32], strides = [1, 1]} : vector<2x96xf32> to vector<2x32xf32>
    %898 = vector.extract_strided_slice %847 {offsets = [0, 64], sizes = [2, 32], strides = [1, 1]} : vector<2x96xf32> to vector<2x32xf32>
    %899 = arith.addf %898, %595 : vector<2x32xf32>
    %900 = arith.mulf %888, %899 : vector<2x32xf32>
    %901 = arith.addf %897, %900 : vector<2x32xf32>
    %902 = math.tanh %901 : vector<2x32xf32>
    %cst_158 = arith.constant 1.000000e+00 : f32
    %903 = vector.broadcast %cst_158 : f32 to vector<2x32xf32>
    %904 = arith.subf %903, %896 : vector<2x32xf32>
    %905 = arith.mulf %904, %902 : vector<2x32xf32>
    %906 = arith.mulf %896, %845 : vector<2x32xf32>
    %907 = arith.addf %905, %906 : vector<2x32xf32>
    %cst_159 = arith.constant dense<0.000000e+00> : vector<2x96xf32>
    %908 = tpu.matmul %880, %585, %cst_159 {dimension_numbers = #tpu.dot_dimension_numbers<[1], [0], [0], [1], [0, 0, 1, 1], [], []>} : vector<2x32xf32>, vector<32x96xf32>, vector<2x96xf32> -> vector<2x96xf32>
    %cst_160 = arith.constant dense<0.000000e+00> : vector<2x96xf32>
    %909 = tpu.matmul %907, %587, %cst_160 {dimension_numbers = #tpu.dot_dimension_numbers<[1], [0], [0], [1], [0, 0, 1, 1], [], []>} : vector<2x32xf32>, vector<32x96xf32>, vector<2x96xf32> -> vector<2x96xf32>
    %910 = vector.extract_strided_slice %581 {offsets = [5, 0], sizes = [1, 96], strides = [1, 1]} : vector<8x192xf32> to vector<1x96xf32>
    %911 = vector.extract_strided_slice %583 {offsets = [5, 0], sizes = [1, 96], strides = [1, 1]} : vector<8x192xf32> to vector<1x96xf32>
    %912 = tpu.concatenate %910, %911 in 0 : vector<1x96xf32>, vector<1x96xf32> -> vector<2x96xf32>
    %913 = vector.extract_strided_slice %581 {offsets = [2, 96], sizes = [1, 96], strides = [1, 1]} : vector<8x192xf32> to vector<1x96xf32>
    %914 = vector.extract_strided_slice %583 {offsets = [2, 96], sizes = [1, 96], strides = [1, 1]} : vector<8x192xf32> to vector<1x96xf32>
    %915 = tpu.concatenate %913, %914 in 0 : vector<1x96xf32>, vector<1x96xf32> -> vector<2x96xf32>
    %916 = vector.extract_strided_slice %912 {offsets = [0, 0], sizes = [2, 32], strides = [1, 1]} : vector<2x96xf32> to vector<2x32xf32>
    %917 = vector.extract_strided_slice %908 {offsets = [0, 0], sizes = [2, 32], strides = [1, 1]} : vector<2x96xf32> to vector<2x32xf32>
    %918 = arith.addf %916, %917 : vector<2x32xf32>
    %919 = arith.negf %918 : vector<2x32xf32>
    %920 = math.exp %919 : vector<2x32xf32>
    %cst_161 = arith.constant 1.000000e+00 : f32
    %921 = vector.broadcast %cst_161 : f32 to vector<2x32xf32>
    %922 = arith.addf %921, %920 : vector<2x32xf32>
    %923 = arith.divf %921, %922 : vector<2x32xf32>
    %924 = vector.extract_strided_slice %912 {offsets = [0, 32], sizes = [2, 32], strides = [1, 1]} : vector<2x96xf32> to vector<2x32xf32>
    %925 = vector.extract_strided_slice %908 {offsets = [0, 32], sizes = [2, 32], strides = [1, 1]} : vector<2x96xf32> to vector<2x32xf32>
    %926 = arith.addf %924, %925 : vector<2x32xf32>
    %927 = arith.negf %926 : vector<2x32xf32>
    %928 = math.exp %927 : vector<2x32xf32>
    %cst_162 = arith.constant 1.000000e+00 : f32
    %929 = vector.broadcast %cst_162 : f32 to vector<2x32xf32>
    %930 = arith.addf %929, %928 : vector<2x32xf32>
    %931 = arith.divf %929, %930 : vector<2x32xf32>
    %932 = vector.extract_strided_slice %912 {offsets = [0, 64], sizes = [2, 32], strides = [1, 1]} : vector<2x96xf32> to vector<2x32xf32>
    %933 = vector.extract_strided_slice %908 {offsets = [0, 64], sizes = [2, 32], strides = [1, 1]} : vector<2x96xf32> to vector<2x32xf32>
    %934 = arith.addf %933, %591 : vector<2x32xf32>
    %935 = arith.mulf %923, %934 : vector<2x32xf32>
    %936 = arith.addf %932, %935 : vector<2x32xf32>
    %937 = math.tanh %936 : vector<2x32xf32>
    %cst_163 = arith.constant 1.000000e+00 : f32
    %938 = vector.broadcast %cst_163 : f32 to vector<2x32xf32>
    %939 = arith.subf %938, %931 : vector<2x32xf32>
    %940 = arith.mulf %939, %937 : vector<2x32xf32>
    %941 = arith.mulf %931, %880 : vector<2x32xf32>
    %942 = arith.addf %940, %941 : vector<2x32xf32>
    %943 = vector.extract_strided_slice %915 {offsets = [0, 0], sizes = [2, 32], strides = [1, 1]} : vector<2x96xf32> to vector<2x32xf32>
    %944 = vector.extract_strided_slice %909 {offsets = [0, 0], sizes = [2, 32], strides = [1, 1]} : vector<2x96xf32> to vector<2x32xf32>
    %945 = arith.addf %943, %944 : vector<2x32xf32>
    %946 = arith.negf %945 : vector<2x32xf32>
    %947 = math.exp %946 : vector<2x32xf32>
    %cst_164 = arith.constant 1.000000e+00 : f32
    %948 = vector.broadcast %cst_164 : f32 to vector<2x32xf32>
    %949 = arith.addf %948, %947 : vector<2x32xf32>
    %950 = arith.divf %948, %949 : vector<2x32xf32>
    %951 = vector.extract_strided_slice %915 {offsets = [0, 32], sizes = [2, 32], strides = [1, 1]} : vector<2x96xf32> to vector<2x32xf32>
    %952 = vector.extract_strided_slice %909 {offsets = [0, 32], sizes = [2, 32], strides = [1, 1]} : vector<2x96xf32> to vector<2x32xf32>
    %953 = arith.addf %951, %952 : vector<2x32xf32>
    %954 = arith.negf %953 : vector<2x32xf32>
    %955 = math.exp %954 : vector<2x32xf32>
    %cst_165 = arith.constant 1.000000e+00 : f32
    %956 = vector.broadcast %cst_165 : f32 to vector<2x32xf32>
    %957 = arith.addf %956, %955 : vector<2x32xf32>
    %958 = arith.divf %956, %957 : vector<2x32xf32>
    %959 = vector.extract_strided_slice %915 {offsets = [0, 64], sizes = [2, 32], strides = [1, 1]} : vector<2x96xf32> to vector<2x32xf32>
    %960 = vector.extract_strided_slice %909 {offsets = [0, 64], sizes = [2, 32], strides = [1, 1]} : vector<2x96xf32> to vector<2x32xf32>
    %961 = arith.addf %960, %595 : vector<2x32xf32>
    %962 = arith.mulf %950, %961 : vector<2x32xf32>
    %963 = arith.addf %959, %962 : vector<2x32xf32>
    %964 = math.tanh %963 : vector<2x32xf32>
    %cst_166 = arith.constant 1.000000e+00 : f32
    %965 = vector.broadcast %cst_166 : f32 to vector<2x32xf32>
    %966 = arith.subf %965, %958 : vector<2x32xf32>
    %967 = arith.mulf %966, %964 : vector<2x32xf32>
    %968 = arith.mulf %958, %907 : vector<2x32xf32>
    %969 = arith.addf %967, %968 : vector<2x32xf32>
    %cst_167 = arith.constant dense<0.000000e+00> : vector<2x96xf32>
    %970 = tpu.matmul %942, %585, %cst_167 {dimension_numbers = #tpu.dot_dimension_numbers<[1], [0], [0], [1], [0, 0, 1, 1], [], []>} : vector<2x32xf32>, vector<32x96xf32>, vector<2x96xf32> -> vector<2x96xf32>
    %cst_168 = arith.constant dense<0.000000e+00> : vector<2x96xf32>
    %971 = tpu.matmul %969, %587, %cst_168 {dimension_numbers = #tpu.dot_dimension_numbers<[1], [0], [0], [1], [0, 0, 1, 1], [], []>} : vector<2x32xf32>, vector<32x96xf32>, vector<2x96xf32> -> vector<2x96xf32>
    %972 = vector.extract_strided_slice %581 {offsets = [6, 0], sizes = [1, 96], strides = [1, 1]} : vector<8x192xf32> to vector<1x96xf32>
    %973 = vector.extract_strided_slice %583 {offsets = [6, 0], sizes = [1, 96], strides = [1, 1]} : vector<8x192xf32> to vector<1x96xf32>
    %974 = tpu.concatenate %972, %973 in 0 : vector<1x96xf32>, vector<1x96xf32> -> vector<2x96xf32>
    %975 = vector.extract_strided_slice %581 {offsets = [1, 96], sizes = [1, 96], strides = [1, 1]} : vector<8x192xf32> to vector<1x96xf32>
    %976 = vector.extract_strided_slice %583 {offsets = [1, 96], sizes = [1, 96], strides = [1, 1]} : vector<8x192xf32> to vector<1x96xf32>
    %977 = tpu.concatenate %975, %976 in 0 : vector<1x96xf32>, vector<1x96xf32> -> vector<2x96xf32>
    %978 = vector.extract_strided_slice %974 {offsets = [0, 0], sizes = [2, 32], strides = [1, 1]} : vector<2x96xf32> to vector<2x32xf32>
    %979 = vector.extract_strided_slice %970 {offsets = [0, 0], sizes = [2, 32], strides = [1, 1]} : vector<2x96xf32> to vector<2x32xf32>
    %980 = arith.addf %978, %979 : vector<2x32xf32>
    %981 = arith.negf %980 : vector<2x32xf32>
    %982 = math.exp %981 : vector<2x32xf32>
    %cst_169 = arith.constant 1.000000e+00 : f32
    %983 = vector.broadcast %cst_169 : f32 to vector<2x32xf32>
    %984 = arith.addf %983, %982 : vector<2x32xf32>
    %985 = arith.divf %983, %984 : vector<2x32xf32>
    %986 = vector.extract_strided_slice %974 {offsets = [0, 32], sizes = [2, 32], strides = [1, 1]} : vector<2x96xf32> to vector<2x32xf32>
    %987 = vector.extract_strided_slice %970 {offsets = [0, 32], sizes = [2, 32], strides = [1, 1]} : vector<2x96xf32> to vector<2x32xf32>
    %988 = arith.addf %986, %987 : vector<2x32xf32>
    %989 = arith.negf %988 : vector<2x32xf32>
    %990 = math.exp %989 : vector<2x32xf32>
    %cst_170 = arith.constant 1.000000e+00 : f32
    %991 = vector.broadcast %cst_170 : f32 to vector<2x32xf32>
    %992 = arith.addf %991, %990 : vector<2x32xf32>
    %993 = arith.divf %991, %992 : vector<2x32xf32>
    %994 = vector.extract_strided_slice %974 {offsets = [0, 64], sizes = [2, 32], strides = [1, 1]} : vector<2x96xf32> to vector<2x32xf32>
    %995 = vector.extract_strided_slice %970 {offsets = [0, 64], sizes = [2, 32], strides = [1, 1]} : vector<2x96xf32> to vector<2x32xf32>
    %996 = arith.addf %995, %591 : vector<2x32xf32>
    %997 = arith.mulf %985, %996 : vector<2x32xf32>
    %998 = arith.addf %994, %997 : vector<2x32xf32>
    %999 = math.tanh %998 : vector<2x32xf32>
    %cst_171 = arith.constant 1.000000e+00 : f32
    %1000 = vector.broadcast %cst_171 : f32 to vector<2x32xf32>
    %1001 = arith.subf %1000, %993 : vector<2x32xf32>
    %1002 = arith.mulf %1001, %999 : vector<2x32xf32>
    %1003 = arith.mulf %993, %942 : vector<2x32xf32>
    %1004 = arith.addf %1002, %1003 : vector<2x32xf32>
    %1005 = vector.extract_strided_slice %977 {offsets = [0, 0], sizes = [2, 32], strides = [1, 1]} : vector<2x96xf32> to vector<2x32xf32>
    %1006 = vector.extract_strided_slice %971 {offsets = [0, 0], sizes = [2, 32], strides = [1, 1]} : vector<2x96xf32> to vector<2x32xf32>
    %1007 = arith.addf %1005, %1006 : vector<2x32xf32>
    %1008 = arith.negf %1007 : vector<2x32xf32>
    %1009 = math.exp %1008 : vector<2x32xf32>
    %cst_172 = arith.constant 1.000000e+00 : f32
    %1010 = vector.broadcast %cst_172 : f32 to vector<2x32xf32>
    %1011 = arith.addf %1010, %1009 : vector<2x32xf32>
    %1012 = arith.divf %1010, %1011 : vector<2x32xf32>
    %1013 = vector.extract_strided_slice %977 {offsets = [0, 32], sizes = [2, 32], strides = [1, 1]} : vector<2x96xf32> to vector<2x32xf32>
    %1014 = vector.extract_strided_slice %971 {offsets = [0, 32], sizes = [2, 32], strides = [1, 1]} : vector<2x96xf32> to vector<2x32xf32>
    %1015 = arith.addf %1013, %1014 : vector<2x32xf32>
    %1016 = arith.negf %1015 : vector<2x32xf32>
    %1017 = math.exp %1016 : vector<2x32xf32>
    %cst_173 = arith.constant 1.000000e+00 : f32
    %1018 = vector.broadcast %cst_173 : f32 to vector<2x32xf32>
    %1019 = arith.addf %1018, %1017 : vector<2x32xf32>
    %1020 = arith.divf %1018, %1019 : vector<2x32xf32>
    %1021 = vector.extract_strided_slice %977 {offsets = [0, 64], sizes = [2, 32], strides = [1, 1]} : vector<2x96xf32> to vector<2x32xf32>
    %1022 = vector.extract_strided_slice %971 {offsets = [0, 64], sizes = [2, 32], strides = [1, 1]} : vector<2x96xf32> to vector<2x32xf32>
    %1023 = arith.addf %1022, %595 : vector<2x32xf32>
    %1024 = arith.mulf %1012, %1023 : vector<2x32xf32>
    %1025 = arith.addf %1021, %1024 : vector<2x32xf32>
    %1026 = math.tanh %1025 : vector<2x32xf32>
    %cst_174 = arith.constant 1.000000e+00 : f32
    %1027 = vector.broadcast %cst_174 : f32 to vector<2x32xf32>
    %1028 = arith.subf %1027, %1020 : vector<2x32xf32>
    %1029 = arith.mulf %1028, %1026 : vector<2x32xf32>
    %1030 = arith.mulf %1020, %969 : vector<2x32xf32>
    %1031 = arith.addf %1029, %1030 : vector<2x32xf32>
    %cst_175 = arith.constant dense<0.000000e+00> : vector<2x96xf32>
    %1032 = tpu.matmul %1004, %585, %cst_175 {dimension_numbers = #tpu.dot_dimension_numbers<[1], [0], [0], [1], [0, 0, 1, 1], [], []>} : vector<2x32xf32>, vector<32x96xf32>, vector<2x96xf32> -> vector<2x96xf32>
    %cst_176 = arith.constant dense<0.000000e+00> : vector<2x96xf32>
    %1033 = tpu.matmul %1031, %587, %cst_176 {dimension_numbers = #tpu.dot_dimension_numbers<[1], [0], [0], [1], [0, 0, 1, 1], [], []>} : vector<2x32xf32>, vector<32x96xf32>, vector<2x96xf32> -> vector<2x96xf32>
    %1034 = vector.extract_strided_slice %581 {offsets = [7, 0], sizes = [1, 96], strides = [1, 1]} : vector<8x192xf32> to vector<1x96xf32>
    %1035 = vector.extract_strided_slice %583 {offsets = [7, 0], sizes = [1, 96], strides = [1, 1]} : vector<8x192xf32> to vector<1x96xf32>
    %1036 = tpu.concatenate %1034, %1035 in 0 : vector<1x96xf32>, vector<1x96xf32> -> vector<2x96xf32>
    %1037 = vector.extract_strided_slice %581 {offsets = [0, 96], sizes = [1, 96], strides = [1, 1]} : vector<8x192xf32> to vector<1x96xf32>
    %1038 = vector.extract_strided_slice %583 {offsets = [0, 96], sizes = [1, 96], strides = [1, 1]} : vector<8x192xf32> to vector<1x96xf32>
    %1039 = tpu.concatenate %1037, %1038 in 0 : vector<1x96xf32>, vector<1x96xf32> -> vector<2x96xf32>
    %1040 = vector.extract_strided_slice %1036 {offsets = [0, 0], sizes = [2, 32], strides = [1, 1]} : vector<2x96xf32> to vector<2x32xf32>
    %1041 = vector.extract_strided_slice %1032 {offsets = [0, 0], sizes = [2, 32], strides = [1, 1]} : vector<2x96xf32> to vector<2x32xf32>
    %1042 = arith.addf %1040, %1041 : vector<2x32xf32>
    %1043 = arith.negf %1042 : vector<2x32xf32>
    %1044 = math.exp %1043 : vector<2x32xf32>
    %cst_177 = arith.constant 1.000000e+00 : f32
    %1045 = vector.broadcast %cst_177 : f32 to vector<2x32xf32>
    %1046 = arith.addf %1045, %1044 : vector<2x32xf32>
    %1047 = arith.divf %1045, %1046 : vector<2x32xf32>
    %1048 = vector.extract_strided_slice %1036 {offsets = [0, 32], sizes = [2, 32], strides = [1, 1]} : vector<2x96xf32> to vector<2x32xf32>
    %1049 = vector.extract_strided_slice %1032 {offsets = [0, 32], sizes = [2, 32], strides = [1, 1]} : vector<2x96xf32> to vector<2x32xf32>
    %1050 = arith.addf %1048, %1049 : vector<2x32xf32>
    %1051 = arith.negf %1050 : vector<2x32xf32>
    %1052 = math.exp %1051 : vector<2x32xf32>
    %cst_178 = arith.constant 1.000000e+00 : f32
    %1053 = vector.broadcast %cst_178 : f32 to vector<2x32xf32>
    %1054 = arith.addf %1053, %1052 : vector<2x32xf32>
    %1055 = arith.divf %1053, %1054 : vector<2x32xf32>
    %1056 = vector.extract_strided_slice %1036 {offsets = [0, 64], sizes = [2, 32], strides = [1, 1]} : vector<2x96xf32> to vector<2x32xf32>
    %1057 = vector.extract_strided_slice %1032 {offsets = [0, 64], sizes = [2, 32], strides = [1, 1]} : vector<2x96xf32> to vector<2x32xf32>
    %1058 = arith.addf %1057, %591 : vector<2x32xf32>
    %1059 = arith.mulf %1047, %1058 : vector<2x32xf32>
    %1060 = arith.addf %1056, %1059 : vector<2x32xf32>
    %1061 = math.tanh %1060 : vector<2x32xf32>
    %cst_179 = arith.constant 1.000000e+00 : f32
    %1062 = vector.broadcast %cst_179 : f32 to vector<2x32xf32>
    %1063 = arith.subf %1062, %1055 : vector<2x32xf32>
    %1064 = arith.mulf %1063, %1061 : vector<2x32xf32>
    %1065 = arith.mulf %1055, %1004 : vector<2x32xf32>
    %1066 = arith.addf %1064, %1065 : vector<2x32xf32>
    %1067 = vector.extract_strided_slice %1039 {offsets = [0, 0], sizes = [2, 32], strides = [1, 1]} : vector<2x96xf32> to vector<2x32xf32>
    %1068 = vector.extract_strided_slice %1033 {offsets = [0, 0], sizes = [2, 32], strides = [1, 1]} : vector<2x96xf32> to vector<2x32xf32>
    %1069 = arith.addf %1067, %1068 : vector<2x32xf32>
    %1070 = arith.negf %1069 : vector<2x32xf32>
    %1071 = math.exp %1070 : vector<2x32xf32>
    %cst_180 = arith.constant 1.000000e+00 : f32
    %1072 = vector.broadcast %cst_180 : f32 to vector<2x32xf32>
    %1073 = arith.addf %1072, %1071 : vector<2x32xf32>
    %1074 = arith.divf %1072, %1073 : vector<2x32xf32>
    %1075 = vector.extract_strided_slice %1039 {offsets = [0, 32], sizes = [2, 32], strides = [1, 1]} : vector<2x96xf32> to vector<2x32xf32>
    %1076 = vector.extract_strided_slice %1033 {offsets = [0, 32], sizes = [2, 32], strides = [1, 1]} : vector<2x96xf32> to vector<2x32xf32>
    %1077 = arith.addf %1075, %1076 : vector<2x32xf32>
    %1078 = arith.negf %1077 : vector<2x32xf32>
    %1079 = math.exp %1078 : vector<2x32xf32>
    %cst_181 = arith.constant 1.000000e+00 : f32
    %1080 = vector.broadcast %cst_181 : f32 to vector<2x32xf32>
    %1081 = arith.addf %1080, %1079 : vector<2x32xf32>
    %1082 = arith.divf %1080, %1081 : vector<2x32xf32>
    %1083 = vector.extract_strided_slice %1039 {offsets = [0, 64], sizes = [2, 32], strides = [1, 1]} : vector<2x96xf32> to vector<2x32xf32>
    %1084 = vector.extract_strided_slice %1033 {offsets = [0, 64], sizes = [2, 32], strides = [1, 1]} : vector<2x96xf32> to vector<2x32xf32>
    %1085 = arith.addf %1084, %595 : vector<2x32xf32>
    %1086 = arith.mulf %1074, %1085 : vector<2x32xf32>
    %1087 = arith.addf %1083, %1086 : vector<2x32xf32>
    %1088 = math.tanh %1087 : vector<2x32xf32>
    %cst_182 = arith.constant 1.000000e+00 : f32
    %1089 = vector.broadcast %cst_182 : f32 to vector<2x32xf32>
    %1090 = arith.subf %1089, %1082 : vector<2x32xf32>
    %1091 = arith.mulf %1090, %1088 : vector<2x32xf32>
    %1092 = arith.mulf %1082, %1031 : vector<2x32xf32>
    %1093 = arith.addf %1091, %1092 : vector<2x32xf32>
    %1094 = tpu.concatenate %1066, %1093 in 1 : vector<2x32xf32>, vector<2x32xf32> -> vector<2x64xf32>
    %c0_183 = arith.constant 0 : index
    %c0_184 = arith.constant 0 : index
    %1095 = vector.load %arg5[%c0_183, %c0_184] : memref<64x2xf32, #tpu.memory_space<vmem>>, vector<64x2xf32>
    %cst_185 = arith.constant dense<0.000000e+00> : vector<2x2xf32>
    %1096 = tpu.matmul %1094, %1095, %cst_185 {dimension_numbers = #tpu.dot_dimension_numbers<[1], [0], [0], [1], [0, 0, 1, 1], [], []>} : vector<2x64xf32>, vector<64x2xf32>, vector<2x2xf32> -> vector<2x2xf32>
    %c0_186 = arith.constant 0 : index
    %c0_187 = arith.constant 0 : index
    %1097 = vector.load %arg6[%c0_186, %c0_187] : memref<1x2xf32, #tpu.memory_space<vmem>>, vector<1x2xf32>
    %1098 = vector.broadcast %1097 : vector<1x2xf32> to vector<2x2xf32>
    %1099 = arith.addf %1096, %1098 : vector<2x2xf32>
    %c0_188 = arith.constant 0 : index
    %c0_189 = arith.constant 0 : index
    %1100 = vector.load %arg7[%c0_188, %c0_189] : memref<2x2xf32, #tpu.memory_space<vmem>>, vector<2x2xf32>
    tpu.vector_store %arg7[%c0_188, %c0_189], %1099 {strides = array<i32>} : memref<2x2xf32, #tpu.memory_space<vmem>>, vector<2x2xf32>,
    return
  }
}

</mosaic_0001>

<llo_original>
// kernel: bert_gru_sentiment.1
$region0: #{bert_gru_sentiment.1}
  #allocation0 [shape = 'u32[]', space=smem, size = 0x4, offset = 0x4, fixed_abs, tag = 'smem constant byte address 0x4 - core index']
  #allocation1 [shape = 'u32[144,128]{1,0:T(1,128)}', space=vmem, size = 0x12000, scoped, tag = 'internal scratch']
  %s0 = inlined_call_operand.vmem [shape: f32[2,8,64], index: 0, kind: input, shape index: {}]
  %s1 = inlined_call_operand.vmem [shape: f32[2,64,192], index: 1, kind: input, shape index: {}]
  %s2 = inlined_call_operand.vmem [shape: f32[2,1,192], index: 2, kind: input, shape index: {}]
  %s3 = inlined_call_operand.vmem [shape: f32[2,2,32,96], index: 3, kind: input, shape index: {}]
  %s4 = inlined_call_operand.vmem [shape: f32[2,2,1,32], index: 4, kind: input, shape index: {}]
  %s5 = inlined_call_operand.vmem [shape: f32[64,2], index: 5, kind: input, shape index: {}]
  %s6 = inlined_call_operand.vmem [shape: f32[1,2], index: 6, kind: input, shape index: {}]
  %s7 = inlined_call_operand.hbm [shape: f32[2,2], index: 7, kind: output, shape index: {}]
  %s8 = sld [smem:[#allocation0]]
  $region38: #{bert_gru_sentiment.1} parent=0
    _
  %s10 = ssub.s32 1, %s8
  %s11 = scalar_select 0, %s10, %s8
  $region1: #{bert_gru_sentiment.1} parent=0
    #allocation2 [shape = 'u8[1024]{0}', space=vmem, size = 0x400, scoped, tag = 'output window, operand 0, single buffered']
    #allocation3 [shape = 's32[1]{0}', space=sflag, size = 0x4, scoped, tag = 'scoped memory for bert_gru_sentiment.1']
    %12 = vsyncpa [#allocation3], 0
    // Predicated region
    $region2: #{bert_gru_sentiment.1} parent=1 // pred_check
      _
    $region3: #{bert_gru_sentiment.1} parent=1 // pred_check_branch
      %14 = sbr.rel (0) target = $region5
    $region4: #{bert_gru_sentiment.1} parent=1 // pred_region
      _
    $region5: #{bert_gru_sentiment.1} parent=1 // pred_fallthru
      _
    // Predicated region
    $region6: #{bert_gru_sentiment.1} parent=1 // pred_check
      _
    $region7: #{bert_gru_sentiment.1} parent=1 // pred_check_branch
      %16 = sbr.rel (0) target = $region9
    $region8: #{bert_gru_sentiment.1} parent=1 // pred_region
      _
    $region9: #{bert_gru_sentiment.1} parent=1 // pred_fallthru
      _
    // Predicated region
    $region10: #{bert_gru_sentiment.1} parent=1 // pred_check
      _
    $region11: #{bert_gru_sentiment.1} parent=1 // pred_check_branch
      %18 = sbr.rel (0) target = $region13
    $region12: #{bert_gru_sentiment.1} parent=1 // pred_region
      _
    $region13: #{bert_gru_sentiment.1} parent=1 // pred_fallthru
      _
    // Predicated region
    $region14: #{bert_gru_sentiment.1} parent=1 // pred_check
      _
    $region15: #{bert_gru_sentiment.1} parent=1 // pred_check_branch
      %20 = sbr.rel (0) target = $region17
    $region16: #{bert_gru_sentiment.1} parent=1 // pred_region
      _
    $region17: #{bert_gru_sentiment.1} parent=1 // pred_fallthru
      _
    // Predicated region
    $region18: #{bert_gru_sentiment.1} parent=1 // pred_check
      _
    $region19: #{bert_gru_sentiment.1} parent=1 // pred_check_branch
      %22 = sbr.rel (0) target = $region21
    $region20: #{bert_gru_sentiment.1} parent=1 // pred_region
      _
    $region21: #{bert_gru_sentiment.1} parent=1 // pred_fallthru
      _
    // Predicated region
    $region22: #{bert_gru_sentiment.1} parent=1 // pred_check
      _
    $region23: #{bert_gru_sentiment.1} parent=1 // pred_check_branch
      %24 = sbr.rel (0) target = $region25
    $region24: #{bert_gru_sentiment.1} parent=1 // pred_region
      _
    $region25: #{bert_gru_sentiment.1} parent=1 // pred_fallthru
      _
    // Predicated region
    $region26: #{bert_gru_sentiment.1} parent=1 // pred_check
      _
    $region27: #{bert_gru_sentiment.1} parent=1 // pred_check_branch
      %26 = sbr.rel (0) target = $region29
    $region28: #{bert_gru_sentiment.1} parent=1 // pred_region
      _
    $region29: #{bert_gru_sentiment.1} parent=1 // pred_fallthru
      _
    %v27 = vld [vmem:[%s0] sm:$0xff]
    %s28 = scalar_lea.vmem %s0, 8
    %v29 = vld [vmem:[%s28] sm:$0xff]
    %v30 = vld [vmem:[%s1] sm:$0xff]
    %v31 = vld [vmem:[%s1 + $0x8] sm:$0xff]
    %v32 = vld [vmem:[%s1 + $0x10] sm:$0xff]
    %v33 = vld [vmem:[%s1 + $0x18] sm:$0xff]
    %v34 = vld [vmem:[%s1 + $0x20] sm:$0xff]
    %v35 = vld [vmem:[%s1 + $0x28] sm:$0xff]
    %v36 = vld [vmem:[%s1 + $0x30] sm:$0xff]
    %v37 = vld [vmem:[%s1 + $0x38] sm:$0xff]
    %v38 = vld [vmem:[%s1 + $0x40] sm:$0xff]
    %v39 = vld [vmem:[%s1 + $0x48] sm:$0xff]
    %v40 = vld [vmem:[%s1 + $0x50] sm:$0xff]
    %v41 = vld [vmem:[%s1 + $0x58] sm:$0xff]
    %v42 = vld [vmem:[%s1 + $0x60] sm:$0xff]
    %v43 = vld [vmem:[%s1 + $0x68] sm:$0xff]
    %v44 = vld [vmem:[%s1 + $0x70] sm:$0xff]
    %v45 = vld [vmem:[%s1 + $0x78] sm:$0xff]
    %v46 = vld [vmem:[%s2] sm:$0x3]
    %v48 = vlaneseq
    %v49 = vshrl.u32 %v48, 7
    %v50 = vsub.s32 0, %v49
    %v51 = vrot.slane %v46, %v50
    %v52 = vlaneseq
    %v53 = vshrl.u32 %v52, 7
    %v54 = vsub.s32 1, %v53
    %v55 = vrot.slane %v46, %v54
    %vm58 = vcmask 523264
    %v60 = vsel %vm58, %v27, 0
    %62 = vmatprep.subr.mxu0 %v31
    %63 = vmatpush1.msra.mxu0 %v30
    %64 = vmatprep.subr.mxu0 %v33
    %65 = vmatpush1.msra.mxu0 %v32
    %66 = vmatprep.subr.mxu0 %v35
    %67 = vmatpush1.msra.mxu0 %v34
    %68 = vmatprep.subr.mxu0 %v37
    %69 = vmatpush1.msra.mxu0 %v36
    %70 = vmatprep.subr.mxu0 %v39
    %71 = vmatpush1.msra.mxu0 %v38
    %72 = vmatprep.subr.mxu0 %v41
    %73 = vmatpush1.msra.mxu0 %v40
    %74 = vmatprep.subr.mxu0 %v43
    %75 = vmatpush1.msra.mxu0 %v42
    %76 = vmatprep.subr.mxu0 %v45
    %77 = vmatpush1.msra.mxu0 %v44
    %78 = vmatprep.subr.mxu0 0.0
    %79 = vmatpush1.msra.mxu0 0.0
    %80 = vmatprep.subr.mxu0 0.0
    %81 = vmatpush1.msra.mxu0 0.0
    %82 = vmatprep.subr.mxu0 0.0
    %83 = vmatpush1.msra.mxu0 0.0
    %84 = vmatprep.subr.mxu0 0.0
    %85 = vmatpush1.msra.mxu0 0.0
    %86 = vmatprep.subr.mxu0 0.0
    %87 = vmatpush1.msra.mxu0 0.0
    %88 = vmatprep.subr.mxu0 0.0
    %89 = vmatpush1.msra.mxu0 0.0
    %90 = vmatprep.subr.mxu0 0.0
    %91 = vmatpush1.msra.mxu0 0.0
    %92 = vmatprep.subr.mxu0 0.0
    %93 = vmatpush1.msra.mxu0 0.0
    %94 = vmatprep.subr.mxu0 0.0
    %95 = vmatpush1.msra.mxu0 0.0
    %96 = vmatprep.subr.mxu0 0.0
    %97 = vmatpush1.msra.mxu0 0.0
    %98 = vmatprep.subr.mxu0 0.0
    %99 = vmatpush1.msra.mxu0 0.0
    %100 = vmatprep.subr.mxu0 0.0
    %101 = vmatpush1.msra.mxu0 0.0
    %102 = vmatprep.subr.mxu0 0.0
    %103 = vmatpush1.msra.mxu0 0.0
    %104 = vmatprep.subr.mxu0 0.0
    %105 = vmatpush1.msra.mxu0 0.0
    %106 = vmatprep.subr.mxu0 0.0
    %107 = vmatpush1.msra.mxu0 0.0
    %108 = vmatprep.subr.mxu0 0.0
    %109 = vmatpush1.msra.mxu0 0.0
    %110 = vmatprep.subr.mxu0 0.0
    %111 = vmatpush1.msra.mxu0 0.0
    %112 = vmatprep.subr.mxu0 0.0
    %113 = vmatpush1.msra.mxu0 0.0
    %114 = vmatprep.subr.mxu0 0.0
    %115 = vmatpush1.msra.mxu0 0.0
    %116 = vmatprep.subr.mxu0 0.0
    %117 = vmatpush1.msra.mxu0 0.0
    %118 = vmatprep.subr.mxu0 0.0
    %119 = vmatpush1.msra.mxu0 0.0
    %120 = vmatprep.subr.mxu0 0.0
    %121 = vmatpush1.msra.mxu0 0.0
    %122 = vmatprep.subr.mxu0 0.0
    %123 = vmatpush1.msra.mxu0 0.0
    %124 = vmatprep.subr.mxu0 0.0
    %125 = vmatpush1.msra.mxu0 0.0
    %126 = vmatprep.mubr.f32.mxu0 0.0
    %127 = vmatmul.mubr.f32.gmra.mrb[0].mxu0 %v60
    %v128 = vpop.f32.mrb[0].mxu0
    %v129 = vadd.f32 %v51, %v128
    %v130 = vpop.f32.mrb[0].mxu0
    %v131 = vadd.f32 %v55, %v130
    %132 = vdwg.mxu0
    %v134 = vsel %vm58, %v29, 0
    %136 = vmatprep.subr.mxu0 %v31
    %137 = vmatpush1.msra.mxu0 %v30
    %138 = vmatprep.subr.mxu0 %v33
    %139 = vmatpush1.msra.mxu0 %v32
    %140 = vmatprep.subr.mxu0 %v35
    %141 = vmatpush1.msra.mxu0 %v34
    %142 = vmatprep.subr.mxu0 %v37
    %143 = vmatpush1.msra.mxu0 %v36
    %144 = vmatprep.subr.mxu0 %v39
    %145 = vmatpush1.msra.mxu0 %v38
    %146 = vmatprep.subr.mxu0 %v41
    %147 = vmatpush1.msra.mxu0 %v40
    %148 = vmatprep.subr.mxu0 %v43
    %149 = vmatpush1.msra.mxu0 %v42
    %150 = vmatprep.subr.mxu0 %v45
    %151 = vmatpush1.msra.mxu0 %v44
    %152 = vmatprep.subr.mxu0 0.0
    %153 = vmatpush1.msra.mxu0 0.0
    %154 = vmatprep.subr.mxu0 0.0
    %155 = vmatpush1.msra.mxu0 0.0
    %156 = vmatprep.subr.mxu0 0.0
    %157 = vmatpush1.msra.mxu0 0.0
    %158 = vmatprep.subr.mxu0 0.0
    %159 = vmatpush1.msra.mxu0 0.0
    %160 = vmatprep.subr.mxu0 0.0
    %161 = vmatpush1.msra.mxu0 0.0
    %162 = vmatprep.subr.mxu0 0.0
    %163 = vmatpush1.msra.mxu0 0.0
    %164 = vmatprep.subr.mxu0 0.0
    %165 = vmatpush1.msra.mxu0 0.0
    %166 = vmatprep.subr.mxu0 0.0
    %167 = vmatpush1.msra.mxu0 0.0
    %168 = vmatprep.subr.mxu0 0.0
    %169 = vmatpush1.msra.mxu0 0.0
    %170 = vmatprep.subr.mxu0 0.0
    %171 = vmatpush1.msra.mxu0 0.0
    %172 = vmatprep.subr.mxu0 0.0
    %173 = vmatpush1.msra.mxu0 0.0
    %174 = vmatprep.subr.mxu0 0.0
    %175 = vmatpush1.msra.mxu0 0.0
    %176 = vmatprep.subr.mxu0 0.0
    %177 = vmatpush1.msra.mxu0 0.0
    %178 = vmatprep.subr.mxu0 0.0
    %179 = vmatpush1.msra.mxu0 0.0
    %180 = vmatprep.subr.mxu0 0.0
    %181 = vmatpush1.msra.mxu0 0.0
    %182 = vmatprep.subr.mxu0 0.0
    %183 = vmatpush1.msra.mxu0 0.0
    %184 = vmatprep.subr.mxu0 0.0
    %185 = vmatpush1.msra.mxu0 0.0
    %186 = vmatprep.subr.mxu0 0.0
    %187 = vmatpush1.msra.mxu0 0.0
    %188 = vmatprep.subr.mxu0 0.0
    %189 = vmatpush1.msra.mxu0 0.0
    %190 = vmatprep.subr.mxu0 0.0
    %191 = vmatpush1.msra.mxu0 0.0
    %192 = vmatprep.subr.mxu0 0.0
    %193 = vmatpush1.msra.mxu0 0.0
    %194 = vmatprep.subr.mxu0 0.0
    %195 = vmatpush1.msra.mxu0 0.0
    %196 = vmatprep.subr.mxu0 0.0
    %197 = vmatpush1.msra.mxu0 0.0
    %198 = vmatprep.subr.mxu0 0.0
    %199 = vmatpush1.msra.mxu0 0.0
    %200 = vmatprep.mubr.f32.mxu0 0.0
    %201 = vmatmul.mubr.f32.gmra.mrb[0].mxu0 %v134
    %v202 = vpop.f32.mrb[0].mxu0
    %v203 = vadd.f32 %v51, %v202
    %v204 = vpop.f32.mrb[0].mxu0
    %v205 = vadd.f32 %v55, %v204
    %206 = vdwg.mxu0
    %v207 = vld [vmem:[%s3] sm:$0xff]
    %v208 = vld [vmem:[%s3 + $0x8] sm:$0xff]
    %v209 = vld [vmem:[%s3 + $0x10] sm:$0xff]
    %v210 = vld [vmem:[%s3 + $0x18] sm:$0xff]
    %s211 = scalar_lea.vmem %s3, 32
    %v212 = vld [vmem:[%s211] sm:$0xff]
    %v213 = vld [vmem:[%s211 + $0x8] sm:$0xff]
    %v214 = vld [vmem:[%s211 + $0x10] sm:$0xff]
    %v215 = vld [vmem:[%s211 + $0x18] sm:$0xff]
    %v216 = vld [vmem:[%s4] sm:$0x1]
    %v218 = vlaneseq
    %v219 = vshrl.u32 %v218, 7
    %v220 = vsub.s32 0, %v219
    %v221 = vrot.slane %v216, %v220
    %s222 = scalar_lea.vmem %s4, 1
    %v223 = vld [vmem:[%s222] sm:$0x1]
    %v225 = vlaneseq
    %v226 = vshrl.u32 %v225, 7
    %v227 = vsub.s32 0, %v226
    %v228 = vrot.slane %v223, %v227
    %vm229 = vcmask 261120
    %v231 = vsel %vm229, 0.0, 0
    %233 = vmatprep.subr.mxu0 0.0
    %234 = vmatpush1.msra.mxu0 %v207
    %235 = vmatprep.subr.mxu0 0.0
    %236 = vmatpush1.msra.mxu0 %v208
    %237 = vmatprep.subr.mxu0 0.0
    %238 = vmatpush1.msra.mxu0 %v209
    %239 = vmatprep.subr.mxu0 0.0
    %240 = vmatpush1.msra.mxu0 %v210
    %241 = vmatprep.subr.mxu0 0.0
    %242 = vmatpush1.msra.mxu0 0.0
    %243 = vmatprep.subr.mxu0 0.0
    %244 = vmatpush1.msra.mxu0 0.0
    %245 = vmatprep.subr.mxu0 0.0
    %246 = vmatpush1.msra.mxu0 0.0
    %247 = vmatprep.subr.mxu0 0.0
    %248 = vmatpush1.msra.mxu0 0.0
    %249 = vmatprep.subr.mxu0 0.0
    %250 = vmatpush1.msra.mxu0 0.0
    %251 = vmatprep.subr.mxu0 0.0
    %252 = vmatpush1.msra.mxu0 0.0
    %253 = vmatprep.subr.mxu0 0.0
    %254 = vmatpush1.msra.mxu0 0.0
    %255 = vmatprep.subr.mxu0 0.0
    %256 = vmatpush1.msra.mxu0 0.0
    %257 = vmatprep.subr.mxu0 0.0
    %258 = vmatpush1.msra.mxu0 0.0
    %259 = vmatprep.subr.mxu0 0.0
    %260 = vmatpush1.msra.mxu0 0.0
    %261 = vmatprep.subr.mxu0 0.0
    %262 = vmatpush1.msra.mxu0 0.0
    %263 = vmatprep.subr.mxu0 0.0
    %264 = vmatpush1.msra.mxu0 0.0
    %265 = vmatprep.subr.mxu0 0.0
    %266 = vmatpush1.msra.mxu0 0.0
    %267 = vmatprep.subr.mxu0 0.0
    %268 = vmatpush1.msra.mxu0 0.0
    %269 = vmatprep.subr.mxu0 0.0
    %270 = vmatpush1.msra.mxu0 0.0
    %271 = vmatprep.subr.mxu0 0.0
    %272 = vmatpush1.msra.mxu0 0.0
    %273 = vmatprep.subr.mxu0 0.0
    %274 = vmatpush1.msra.mxu0 0.0
    %275 = vmatprep.subr.mxu0 0.0
    %276 = vmatpush1.msra.mxu0 0.0
    %277 = vmatprep.subr.mxu0 0.0
    %278 = vmatpush1.msra.mxu0 0.0
    %279 = vmatprep.subr.mxu0 0.0
    %280 = vmatpush1.msra.mxu0 0.0
    %281 = vmatprep.subr.mxu0 0.0
    %282 = vmatpush1.msra.mxu0 0.0
    %283 = vmatprep.subr.mxu0 0.0
    %284 = vmatpush1.msra.mxu0 0.0
    %285 = vmatprep.subr.mxu0 0.0
    %286 = vmatpush1.msra.mxu0 0.0
    %287 = vmatprep.subr.mxu0 0.0
    %288 = vmatpush1.msra.mxu0 0.0
    %289 = vmatprep.subr.mxu0 0.0
    %290 = vmatpush1.msra.mxu0 0.0
    %291 = vmatprep.subr.mxu0 0.0
    %292 = vmatpush1.msra.mxu0 0.0
    %293 = vmatprep.subr.mxu0 0.0
    %294 = vmatpush1.msra.mxu0 0.0
    %295 = vmatprep.subr.mxu0 0.0
    %296 = vmatpush1.msra.mxu0 0.0
    %297 = vmatprep.mubr.f32.mxu0 0.0
    %298 = vmatmul.mubr.f32.gmra.mrb[0].mxu0 %v231
    %v299 = vpop.f32.mrb[0].mxu0
    %v300 = vadd.f32 0.0, %v299
    %v301 = vpop.f32.mrb[0].mxu0
    %302 = vdwg.mxu0
    %303 = vmatprep.subr.mxu0 0.0
    %304 = vmatpush1.msra.mxu0 %v212
    %305 = vmatprep.subr.mxu0 0.0
    %306 = vmatpush1.msra.mxu0 %v213
    %307 = vmatprep.subr.mxu0 0.0
    %308 = vmatpush1.msra.mxu0 %v214
    %309 = vmatprep.subr.mxu0 0.0
    %310 = vmatpush1.msra.mxu0 %v215
    %311 = vmatprep.subr.mxu0 0.0
    %312 = vmatpush1.msra.mxu0 0.0
    %313 = vmatprep.subr.mxu0 0.0
    %314 = vmatpush1.msra.mxu0 0.0
    %315 = vmatprep.subr.mxu0 0.0
    %316 = vmatpush1.msra.mxu0 0.0
    %317 = vmatprep.subr.mxu0 0.0
    %318 = vmatpush1.msra.mxu0 0.0
    %319 = vmatprep.subr.mxu0 0.0
    %320 = vmatpush1.msra.mxu0 0.0
    %321 = vmatprep.subr.mxu0 0.0
    %322 = vmatpush1.msra.mxu0 0.0
    %323 = vmatprep.subr.mxu0 0.0
    %324 = vmatpush1.msra.mxu0 0.0
    %325 = vmatprep.subr.mxu0 0.0
    %326 = vmatpush1.msra.mxu0 0.0
    %327 = vmatprep.subr.mxu0 0.0
    %328 = vmatpush1.msra.mxu0 0.0
    %329 = vmatprep.subr.mxu0 0.0
    %330 = vmatpush1.msra.mxu0 0.0
    %331 = vmatprep.subr.mxu0 0.0
    %332 = vmatpush1.msra.mxu0 0.0
    %333 = vmatprep.subr.mxu0 0.0
    %334 = vmatpush1.msra.mxu0 0.0
    %335 = vmatprep.subr.mxu0 0.0
    %336 = vmatpush1.msra.mxu0 0.0
    %337 = vmatprep.subr.mxu0 0.0
    %338 = vmatpush1.msra.mxu0 0.0
    %339 = vmatprep.subr.mxu0 0.0
    %340 = vmatpush1.msra.mxu0 0.0
    %341 = vmatprep.subr.mxu0 0.0
    %342 = vmatpush1.msra.mxu0 0.0
    %343 = vmatprep.subr.mxu0 0.0
    %344 = vmatpush1.msra.mxu0 0.0
    %345 = vmatprep.subr.mxu0 0.0
    %346 = vmatpush1.msra.mxu0 0.0
    %347 = vmatprep.subr.mxu0 0.0
    %348 = vmatpush1.msra.mxu0 0.0
    %349 = vmatprep.subr.mxu0 0.0
    %350 = vmatpush1.msra.mxu0 0.0
    %351 = vmatprep.subr.mxu0 0.0
    %352 = vmatpush1.msra.mxu0 0.0
    %353 = vmatprep.subr.mxu0 0.0
    %354 = vmatpush1.msra.mxu0 0.0
    %355 = vmatprep.subr.mxu0 0.0
    %356 = vmatpush1.msra.mxu0 0.0
    %357 = vmatprep.subr.mxu0 0.0
    %358 = vmatpush1.msra.mxu0 0.0
    %359 = vmatprep.subr.mxu0 0.0
    %360 = vmatpush1.msra.mxu0 0.0
    %361 = vmatprep.subr.mxu0 0.0
    %362 = vmatpush1.msra.mxu0 0.0
    %363 = vmatprep.subr.mxu0 0.0
    %364 = vmatpush1.msra.mxu0 0.0
    %365 = vmatprep.subr.mxu0 0.0
    %366 = vmatpush1.msra.mxu0 0.0
    %367 = vmatprep.mubr.f32.mxu0 0.0
    %368 = vmatmul.mubr.f32.gmra.mrb[0].mxu0 %v231
    %v369 = vpop.f32.mrb[0].mxu0
    %v370 = vadd.f32 0.0, %v369
    %v371 = vpop.f32.mrb[0].mxu0
    %372 = vdwg.mxu0
    %v374 = vrot.slane %v203, 7
    %vm376 = vcmask 1040384
    %v377 = vsel %vm376, %v129, %v374
    %v380 = vrot.slane %v129, 7
    %v381 = vrot.slane %v131, 7
    %v385 = vrot.slane %v203, 6
    %v386 = vrot.slane %v205, 6
    %v389 = vsel %vm376, %v380, %v385
    %v390 = vsel %vm376, %v381, %v386
    %v391 = vadd.f32 %v377, %v300
    %v392 = vxor.u32 %v391, 2147483648
    %v393 = vmul.f32 %v392, 1.442695
    %v394 = vpow.pop %v393
    %v395 = vadd.f32 %v394, 1.0
    %v396 = vrcp.pop %v395
    %v397 = vmul.f32 1.0, %v396
    %398 = vrot.lane.b32.xlu0 %v221, 64
    %v399 = vpop.permute.xlu0 %398
    %v401 = vadd.f32 %v300, %v399
    %403 = vrot.lane.b32.xlu0 %v401, 64
    %v404 = vpop.permute.xlu0 %403
    %v406 = vmul.f32 %v397, %v404
    %408 = vrot.lane.b32.xlu0 %v406, 64
    %v409 = vpop.permute.xlu0 %408
    %v411 = vadd.f32 %v377, %v409
    %v412 = vtanh.pop %v411
    %v413 = vsub.f32 1.0, %v397
    %415 = vrot.lane.b32.xlu0 %v412, 96
    %v416 = vpop.permute.xlu0 %415
    %v418 = vmul.f32 %v413, %v416
    %v419 = vmul.f32 %v397, 0.0
    %v420 = vadd.f32 %v418, %v419
    %422 = vrot.lane.b32.xlu0 %v370, 96
    %v423 = vpop.permute.xlu0 %422
    %v425 = vadd.f32 %v389, %v423
    %v426 = vxor.u32 %v425, 2147483648
    %v427 = vmul.f32 %v426, 1.442695
    %v428 = vpow.pop %v427
    %v429 = vadd.f32 %v428, 1.0
    %v430 = vrcp.pop %v429
    %v431 = vmul.f32 1.0, %v430
    %v432 = vadd.f32 %v390, %v423
    %v433 = vxor.u32 %v432, 2147483648
    %v434 = vmul.f32 %v433, 1.442695
    %v435 = vpow.pop %v434
    %v436 = vadd.f32 %v435, 1.0
    %v437 = vrcp.pop %v436
    %v438 = vmul.f32 1.0, %v437
    %439 = vrot.lane.b32.xlu0 %v228, 64
    %v440 = vpop.permute.xlu0 %439
    %v442 = vadd.f32 %v370, %v440
    %444 = vrot.lane.b32.xlu0 %v442, 32
    %v445 = vpop.permute.xlu0 %444
    %v447 = vmul.f32 %v431, %v445
    %449 = vrot.lane.b32.xlu0 %v447, 64
    %v450 = vpop.permute.xlu0 %449
    %v452 = vadd.f32 %v390, %v450
    %v453 = vtanh.pop %v452
    %v454 = vsub.f32 1.0, %v438
    %456 = vrot.lane.b32.xlu0 %v453, 96
    %v457 = vpop.permute.xlu0 %456
    %v459 = vmul.f32 %v454, %v457
    %v460 = vmul.f32 %v438, 0.0
    %v461 = vadd.f32 %v459, %v460
    %463 = vrot.lane.b32.xlu0 %v420, 96
    %v464 = vpop.permute.xlu0 %463
    %v465 = vsel %vm229, %v464, 0
    %467 = vmatprep.subr.mxu0 0.0
    %468 = vmatpush1.msra.mxu0 %v207
    %469 = vmatprep.subr.mxu0 0.0
    %470 = vmatpush1.msra.mxu0 %v208
    %471 = vmatprep.subr.mxu0 0.0
    %472 = vmatpush1.msra.mxu0 %v209
    %473 = vmatprep.subr.mxu0 0.0
    %474 = vmatpush1.msra.mxu0 %v210
    %475 = vmatprep.subr.mxu0 0.0
    %476 = vmatpush1.msra.mxu0 0.0
    %477 = vmatprep.subr.mxu0 0.0
    %478 = vmatpush1.msra.mxu0 0.0
    %479 = vmatprep.subr.mxu0 0.0
    %480 = vmatpush1.msra.mxu0 0.0
    %481 = vmatprep.subr.mxu0 0.0
    %482 = vmatpush1.msra.mxu0 0.0
    %483 = vmatprep.subr.mxu0 0.0
    %484 = vmatpush1.msra.mxu0 0.0
    %485 = vmatprep.subr.mxu0 0.0
    %486 = vmatpush1.msra.mxu0 0.0
    %487 = vmatprep.subr.mxu0 0.0
    %488 = vmatpush1.msra.mxu0 0.0
    %489 = vmatprep.subr.mxu0 0.0
    %490 = vmatpush1.msra.mxu0 0.0
    %491 = vmatprep.subr.mxu0 0.0
    %492 = vmatpush1.msra.mxu0 0.0
    %493 = vmatprep.subr.mxu0 0.0
    %494 = vmatpush1.msra.mxu0 0.0
    %495 = vmatprep.subr.mxu0 0.0
    %496 = vmatpush1.msra.mxu0 0.0
    %497 = vmatprep.subr.mxu0 0.0
    %498 = vmatpush1.msra.mxu0 0.0
    %499 = vmatprep.subr.mxu0 0.0
    %500 = vmatpush1.msra.mxu0 0.0
    %501 = vmatprep.subr.mxu0 0.0
    %502 = vmatpush1.msra.mxu0 0.0
    %503 = vmatprep.subr.mxu0 0.0
    %504 = vmatpush1.msra.mxu0 0.0
    %505 = vmatprep.subr.mxu0 0.0
    %506 = vmatpush1.msra.mxu0 0.0
    %507 = vmatprep.subr.mxu0 0.0
    %508 = vmatpush1.msra.mxu0 0.0
    %509 = vmatprep.subr.mxu0 0.0
    %510 = vmatpush1.msra.mxu0 0.0
    %511 = vmatprep.subr.mxu0 0.0
    %512 = vmatpush1.msra.mxu0 0.0
    %513 = vmatprep.subr.mxu0 0.0
    %514 = vmatpush1.msra.mxu0 0.0
    %515 = vmatprep.subr.mxu0 0.0
    %516 = vmatpush1.msra.mxu0 0.0
    %517 = vmatprep.subr.mxu0 0.0
    %518 = vmatpush1.msra.mxu0 0.0
    %519 = vmatprep.subr.mxu0 0.0
    %520 = vmatpush1.msra.mxu0 0.0
    %521 = vmatprep.subr.mxu0 0.0
    %522 = vmatpush1.msra.mxu0 0.0
    %523 = vmatprep.subr.mxu0 0.0
    %524 = vmatpush1.msra.mxu0 0.0
    %525 = vmatprep.subr.mxu0 0.0
    %526 = vmatpush1.msra.mxu0 0.0
    %527 = vmatprep.subr.mxu0 0.0
    %528 = vmatpush1.msra.mxu0 0.0
    %529 = vmatprep.subr.mxu0 0.0
    %530 = vmatpush1.msra.mxu0 0.0
    %531 = vmatprep.mubr.f32.mxu0 0.0
    %532 = vmatmul.mubr.f32.gmra.mrb[0].mxu0 %v465
    %v533 = vpop.f32.mrb[0].mxu0
    %v534 = vadd.f32 0.0, %v533
    %v535 = vpop.f32.mrb[0].mxu0
    %536 = vdwg.mxu0
    %v538 = vsel %vm229, %v461, 0
    %540 = vmatprep.subr.mxu0 0.0
    %541 = vmatpush1.msra.mxu0 %v212
    %542 = vmatprep.subr.mxu0 0.0
    %543 = vmatpush1.msra.mxu0 %v213
    %544 = vmatprep.subr.mxu0 0.0
    %545 = vmatpush1.msra.mxu0 %v214
    %546 = vmatprep.subr.mxu0 0.0
    %547 = vmatpush1.msra.mxu0 %v215
    %548 = vmatprep.subr.mxu0 0.0
    %549 = vmatpush1.msra.mxu0 0.0
    %550 = vmatprep.subr.mxu0 0.0
    %551 = vmatpush1.msra.mxu0 0.0
    %552 = vmatprep.subr.mxu0 0.0
    %553 = vmatpush1.msra.mxu0 0.0
    %554 = vmatprep.subr.mxu0 0.0
    %555 = vmatpush1.msra.mxu0 0.0
    %556 = vmatprep.subr.mxu0 0.0
    %557 = vmatpush1.msra.mxu0 0.0
    %558 = vmatprep.subr.mxu0 0.0
    %559 = vmatpush1.msra.mxu0 0.0
    %560 = vmatprep.subr.mxu0 0.0
    %561 = vmatpush1.msra.mxu0 0.0
    %562 = vmatprep.subr.mxu0 0.0
    %563 = vmatpush1.msra.mxu0 0.0
    %564 = vmatprep.subr.mxu0 0.0
    %565 = vmatpush1.msra.mxu0 0.0
    %566 = vmatprep.subr.mxu0 0.0
    %567 = vmatpush1.msra.mxu0 0.0
    %568 = vmatprep.subr.mxu0 0.0
    %569 = vmatpush1.msra.mxu0 0.0
    %570 = vmatprep.subr.mxu0 0.0
    %571 = vmatpush1.msra.mxu0 0.0
    %572 = vmatprep.subr.mxu0 0.0
    %573 = vmatpush1.msra.mxu0 0.0
    %574 = vmatprep.subr.mxu0 0.0
    %575 = vmatpush1.msra.mxu0 0.0
    %576 = vmatprep.subr.mxu0 0.0
    %577 = vmatpush1.msra.mxu0 0.0
    %578 = vmatprep.subr.mxu0 0.0
    %579 = vmatpush1.msra.mxu0 0.0
    %580 = vmatprep.subr.mxu0 0.0
    %581 = vmatpush1.msra.mxu0 0.0
    %582 = vmatprep.subr.mxu0 0.0
    %583 = vmatpush1.msra.mxu0 0.0
    %584 = vmatprep.subr.mxu0 0.0
    %585 = vmatpush1.msra.mxu0 0.0
    %586 = vmatprep.subr.mxu0 0.0
    %587 = vmatpush1.msra.mxu0 0.0
    %588 = vmatprep.subr.mxu0 0.0
    %589 = vmatpush1.msra.mxu0 0.0
    %590 = vmatprep.subr.mxu0 0.0
    %591 = vmatpush1.msra.mxu0 0.0
    %592 = vmatprep.subr.mxu0 0.0
    %593 = vmatpush1.msra.mxu0 0.0
    %594 = vmatprep.subr.mxu0 0.0
    %595 = vmatpush1.msra.mxu0 0.0
    %596 = vmatprep.subr.mxu0 0.0
    %597 = vmatpush1.msra.mxu0 0.0
    %598 = vmatprep.subr.mxu0 0.0
    %599 = vmatpush1.msra.mxu0 0.0
    %600 = vmatprep.subr.mxu0 0.0
    %601 = vmatpush1.msra.mxu0 0.0
    %602 = vmatprep.subr.mxu0 0.0
    %603 = vmatpush1.msra.mxu0 0.0
    %604 = vmatprep.mubr.f32.mxu0 0.0
    %605 = vmatmul.mubr.f32.gmra.mrb[0].mxu0 %v538
    %v606 = vpop.f32.mrb[0].mxu0
    %v607 = vadd.f32 0.0, %v606
    %v608 = vpop.f32.mrb[0].mxu0
    %609 = vdwg.mxu0
    %v610 = vrot.slane %v129, 1
    %v612 = vsel %vm376, %v610, %v203
    %v613 = vrot.slane %v129, 6
    %v614 = vrot.slane %v131, 6
    %v617 = vrot.slane %v203, 5
    %v618 = vrot.slane %v205, 5
    %v621 = vsel %vm376, %v613, %v617
    %v622 = vsel %vm376, %v614, %v618
    %v623 = vadd.f32 %v612, %v534
    %v624 = vxor.u32 %v623, 2147483648
    %v625 = vmul.f32 %v624, 1.442695
    %v626 = vpow.pop %v625
    %v627 = vadd.f32 %v626, 1.0
    %v628 = vrcp.pop %v627
    %v629 = vmul.f32 1.0, %v628
    %v630 = vadd.f32 %v534, %v399
    %632 = vrot.lane.b32.xlu0 %v630, 64
    %v633 = vpop.permute.xlu0 %632
    %v635 = vmul.f32 %v629, %v633
    %637 = vrot.lane.b32.xlu0 %v635, 64
    %v638 = vpop.permute.xlu0 %637
    %v640 = vadd.f32 %v612, %v638
    %v641 = vtanh.pop %v640
    %v642 = vsub.f32 1.0, %v629
    %644 = vrot.lane.b32.xlu0 %v641, 96
    %v645 = vpop.permute.xlu0 %644
    %v647 = vmul.f32 %v642, %v645
    %v648 = vmul.f32 %v629, %v420
    %v649 = vadd.f32 %v647, %v648
    %651 = vrot.lane.b32.xlu0 %v607, 96
    %v652 = vpop.permute.xlu0 %651
    %v654 = vadd.f32 %v621, %v652
    %v655 = vxor.u32 %v654, 2147483648
    %v656 = vmul.f32 %v655, 1.442695
    %v657 = vpow.pop %v656
    %v658 = vadd.f32 %v657, 1.0
    %v659 = vrcp.pop %v658
    %v660 = vmul.f32 1.0, %v659
    %v661 = vadd.f32 %v622, %v652
    %v662 = vxor.u32 %v661, 2147483648
    %v663 = vmul.f32 %v662, 1.442695
    %v664 = vpow.pop %v663
    %v665 = vadd.f32 %v664, 1.0
    %v666 = vrcp.pop %v665
    %v667 = vmul.f32 1.0, %v666
    %v668 = vadd.f32 %v607, %v440
    %670 = vrot.lane.b32.xlu0 %v668, 32
    %v671 = vpop.permute.xlu0 %670
    %v673 = vmul.f32 %v660, %v671
    %675 = vrot.lane.b32.xlu0 %v673, 64
    %v676 = vpop.permute.xlu0 %675
    %v678 = vadd.f32 %v622, %v676
    %v679 = vtanh.pop %v678
    %v680 = vsub.f32 1.0, %v667
    %682 = vrot.lane.b32.xlu0 %v679, 96
    %v683 = vpop.permute.xlu0 %682
    %v685 = vmul.f32 %v680, %v683
    %v686 = vmul.f32 %v667, %v461
    %v687 = vadd.f32 %v685, %v686
    %689 = vrot.lane.b32.xlu0 %v649, 96
    %v690 = vpop.permute.xlu0 %689
    %v691 = vsel %vm229, %v690, 0
    %693 = vmatprep.subr.mxu0 0.0
    %694 = vmatpush1.msra.mxu0 %v207
    %695 = vmatprep.subr.mxu0 0.0
    %696 = vmatpush1.msra.mxu0 %v208
    %697 = vmatprep.subr.mxu0 0.0
    %698 = vmatpush1.msra.mxu0 %v209
    %699 = vmatprep.subr.mxu0 0.0
    %700 = vmatpush1.msra.mxu0 %v210
    %701 = vmatprep.subr.mxu0 0.0
    %702 = vmatpush1.msra.mxu0 0.0
    %703 = vmatprep.subr.mxu0 0.0
    %704 = vmatpush1.msra.mxu0 0.0
    %705 = vmatprep.subr.mxu0 0.0
    %706 = vmatpush1.msra.mxu0 0.0
    %707 = vmatprep.subr.mxu0 0.0
    %708 = vmatpush1.msra.mxu0 0.0
    %709 = vmatprep.subr.mxu0 0.0
    %710 = vmatpush1.msra.mxu0 0.0
    %711 = vmatprep.subr.mxu0 0.0
    %712 = vmatpush1.msra.mxu0 0.0
    %713 = vmatprep.subr.mxu0 0.0
    %714 = vmatpush1.msra.mxu0 0.0
    %715 = vmatprep.subr.mxu0 0.0
    %716 = vmatpush1.msra.mxu0 0.0
    %717 = vmatprep.subr.mxu0 0.0
    %718 = vmatpush1.msra.mxu0 0.0
    %719 = vmatprep.subr.mxu0 0.0
    %720 = vmatpush1.msra.mxu0 0.0
    %721 = vmatprep.subr.mxu0 0.0
    %722 = vmatpush1.msra.mxu0 0.0
    %723 = vmatprep.subr.mxu0 0.0
    %724 = vmatpush1.msra.mxu0 0.0
    %725 = vmatprep.subr.mxu0 0.0
    %726 = vmatpush1.msra.mxu0 0.0
    %727 = vmatprep.subr.mxu0 0.0
    %728 = vmatpush1.msra.mxu0 0.0
    %729 = vmatprep.subr.mxu0 0.0
    %730 = vmatpush1.msra.mxu0 0.0
    %731 = vmatprep.subr.mxu0 0.0
    %732 = vmatpush1.msra.mxu0 0.0
    %733 = vmatprep.subr.mxu0 0.0
    %734 = vmatpush1.msra.mxu0 0.0
    %735 = vmatprep.subr.mxu0 0.0
    %736 = vmatpush1.msra.mxu0 0.0
    %737 = vmatprep.subr.mxu0 0.0
    %738 = vmatpush1.msra.mxu0 0.0
    %739 = vmatprep.subr.mxu0 0.0
    %740 = vmatpush1.msra.mxu0 0.0
    %741 = vmatprep.subr.mxu0 0.0
    %742 = vmatpush1.msra.mxu0 0.0
    %743 = vmatprep.subr.mxu0 0.0
    %744 = vmatpush1.msra.mxu0 0.0
    %745 = vmatprep.subr.mxu0 0.0
    %746 = vmatpush1.msra.mxu0 0.0
    %747 = vmatprep.subr.mxu0 0.0
    %748 = vmatpush1.msra.mxu0 0.0
    %749 = vmatprep.subr.mxu0 0.0
    %750 = vmatpush1.msra.mxu0 0.0
    %751 = vmatprep.subr.mxu0 0.0
    %752 = vmatpush1.msra.mxu0 0.0
    %753 = vmatprep.subr.mxu0 0.0
    %754 = vmatpush1.msra.mxu0 0.0
    %755 = vmatprep.subr.mxu0 0.0
    %756 = vmatpush1.msra.mxu0 0.0
    %757 = vmatprep.mubr.f32.mxu0 0.0
    %758 = vmatmul.mubr.f32.gmra.mrb[0].mxu0 %v691
    %v759 = vpop.f32.mrb[0].mxu0
    %v760 = vadd.f32 0.0, %v759
    %v761 = vpop.f32.mrb[0].mxu0
    %762 = vdwg.mxu0
    %v764 = vsel %vm229, %v687, 0
    %766 = vmatprep.subr.mxu0 0.0
    %767 = vmatpush1.msra.mxu0 %v212
    %768 = vmatprep.subr.mxu0 0.0
    %769 = vmatpush1.msra.mxu0 %v213
    %770 = vmatprep.subr.mxu0 0.0
    %771 = vmatpush1.msra.mxu0 %v214
    %772 = vmatprep.subr.mxu0 0.0
    %773 = vmatpush1.msra.mxu0 %v215
    %774 = vmatprep.subr.mxu0 0.0
    %775 = vmatpush1.msra.mxu0 0.0
    %776 = vmatprep.subr.mxu0 0.0
    %777 = vmatpush1.msra.mxu0 0.0
    %778 = vmatprep.subr.mxu0 0.0
    %779 = vmatpush1.msra.mxu0 0.0
    %780 = vmatprep.subr.mxu0 0.0
    %781 = vmatpush1.msra.mxu0 0.0
    %782 = vmatprep.subr.mxu0 0.0
    %783 = vmatpush1.msra.mxu0 0.0
    %784 = vmatprep.subr.mxu0 0.0
    %785 = vmatpush1.msra.mxu0 0.0
    %786 = vmatprep.subr.mxu0 0.0
    %787 = vmatpush1.msra.mxu0 0.0
    %788 = vmatprep.subr.mxu0 0.0
    %789 = vmatpush1.msra.mxu0 0.0
    %790 = vmatprep.subr.mxu0 0.0
    %791 = vmatpush1.msra.mxu0 0.0
    %792 = vmatprep.subr.mxu0 0.0
    %793 = vmatpush1.msra.mxu0 0.0
    %794 = vmatprep.subr.mxu0 0.0
    %795 = vmatpush1.msra.mxu0 0.0
    %796 = vmatprep.subr.mxu0 0.0
    %797 = vmatpush1.msra.mxu0 0.0
    %798 = vmatprep.subr.mxu0 0.0
    %799 = vmatpush1.msra.mxu0 0.0
    %800 = vmatprep.subr.mxu0 0.0
    %801 = vmatpush1.msra.mxu0 0.0
    %802 = vmatprep.subr.mxu0 0.0
    %803 = vmatpush1.msra.mxu0 0.0
    %804 = vmatprep.subr.mxu0 0.0
    %805 = vmatpush1.msra.mxu0 0.0
    %806 = vmatprep.subr.mxu0 0.0
    %807 = vmatpush1.msra.mxu0 0.0
    %808 = vmatprep.subr.mxu0 0.0
    %809 = vmatpush1.msra.mxu0 0.0
    %810 = vmatprep.subr.mxu0 0.0
    %811 = vmatpush1.msra.mxu0 0.0
    %812 = vmatprep.subr.mxu0 0.0
    %813 = vmatpush1.msra.mxu0 0.0
    %814 = vmatprep.subr.mxu0 0.0
    %815 = vmatpush1.msra.mxu0 0.0
    %816 = vmatprep.subr.mxu0 0.0
    %817 = vmatpush1.msra.mxu0 0.0
    %818 = vmatprep.subr.mxu0 0.0
    %819 = vmatpush1.msra.mxu0 0.0
    %820 = vmatprep.subr.mxu0 0.0
    %821 = vmatpush1.msra.mxu0 0.0
    %822 = vmatprep.subr.mxu0 0.0
    %823 = vmatpush1.msra.mxu0 0.0
    %824 = vmatprep.subr.mxu0 0.0
    %825 = vmatpush1.msra.mxu0 0.0
    %826 = vmatprep.subr.mxu0 0.0
    %827 = vmatpush1.msra.mxu0 0.0
    %828 = vmatprep.subr.mxu0 0.0
    %829 = vmatpush1.msra.mxu0 0.0
    %830 = vmatprep.mubr.f32.mxu0 0.0
    %831 = vmatmul.mubr.f32.gmra.mrb[0].mxu0 %v764
    %v832 = vpop.f32.mrb[0].mxu0
    %v833 = vadd.f32 0.0, %v832
    %v834 = vpop.f32.mrb[0].mxu0
    %835 = vdwg.mxu0
    %v836 = vrot.slane %v129, 2
    %v838 = vrot.slane %v203, 1
    %v840 = vsel %vm376, %v836, %v838
    %v841 = vrot.slane %v129, 5
    %v842 = vrot.slane %v131, 5
    %v845 = vrot.slane %v203, 4
    %v846 = vrot.slane %v205, 4
    %v849 = vsel %vm376, %v841, %v845
    %v850 = vsel %vm376, %v842, %v846
    %v851 = vadd.f32 %v840, %v760
    %v852 = vxor.u32 %v851, 2147483648
    %v853 = vmul.f32 %v852, 1.442695
    %v854 = vpow.pop %v853
    %v855 = vadd.f32 %v854, 1.0
    %v856 = vrcp.pop %v855
    %v857 = vmul.f32 1.0, %v856
    %v858 = vadd.f32 %v760, %v399
    %860 = vrot.lane.b32.xlu0 %v858, 64
    %v861 = vpop.permute.xlu0 %860
    %v863 = vmul.f32 %v857, %v861
    %865 = vrot.lane.b32.xlu0 %v863, 64
    %v866 = vpop.permute.xlu0 %865
    %v868 = vadd.f32 %v840, %v866
    %v869 = vtanh.pop %v868
    %v870 = vsub.f32 1.0, %v857
    %872 = vrot.lane.b32.xlu0 %v869, 96
    %v873 = vpop.permute.xlu0 %872
    %v875 = vmul.f32 %v870, %v873
    %v876 = vmul.f32 %v857, %v649
    %v877 = vadd.f32 %v875, %v876
    %879 = vrot.lane.b32.xlu0 %v833, 96
    %v880 = vpop.permute.xlu0 %879
    %v882 = vadd.f32 %v849, %v880
    %v883 = vxor.u32 %v882, 2147483648
    %v884 = vmul.f32 %v883, 1.442695
    %v885 = vpow.pop %v884
    %v886 = vadd.f32 %v885, 1.0
    %v887 = vrcp.pop %v886
    %v888 = vmul.f32 1.0, %v887
    %v889 = vadd.f32 %v850, %v880
    %v890 = vxor.u32 %v889, 2147483648
    %v891 = vmul.f32 %v890, 1.442695
    %v892 = vpow.pop %v891
    %v893 = vadd.f32 %v892, 1.0
    %v894 = vrcp.pop %v893
    %v895 = vmul.f32 1.0, %v894
    %v896 = vadd.f32 %v833, %v440
    %898 = vrot.lane.b32.xlu0 %v896, 32
    %v899 = vpop.permute.xlu0 %898
    %v901 = vmul.f32 %v888, %v899
    %903 = vrot.lane.b32.xlu0 %v901, 64
    %v904 = vpop.permute.xlu0 %903
    %v906 = vadd.f32 %v850, %v904
    %v907 = vtanh.pop %v906
    %v908 = vsub.f32 1.0, %v895
    %910 = vrot.lane.b32.xlu0 %v907, 96
    %v911 = vpop.permute.xlu0 %910
    %v913 = vmul.f32 %v908, %v911
    %v914 = vmul.f32 %v895, %v687
    %v915 = vadd.f32 %v913, %v914
    %917 = vrot.lane.b32.xlu0 %v877, 96
    %v918 = vpop.permute.xlu0 %917
    %v919 = vsel %vm229, %v918, 0
    %921 = vmatprep.subr.mxu0 0.0
    %922 = vmatpush1.msra.mxu0 %v207
    %923 = vmatprep.subr.mxu0 0.0
    %924 = vmatpush1.msra.mxu0 %v208
    %925 = vmatprep.subr.mxu0 0.0
    %926 = vmatpush1.msra.mxu0 %v209
    %927 = vmatprep.subr.mxu0 0.0
    %928 = vmatpush1.msra.mxu0 %v210
    %929 = vmatprep.subr.mxu0 0.0
    %930 = vmatpush1.msra.mxu0 0.0
    %931 = vmatprep.subr.mxu0 0.0
    %932 = vmatpush1.msra.mxu0 0.0
    %933 = vmatprep.subr.mxu0 0.0
    %934 = vmatpush1.msra.mxu0 0.0
    %935 = vmatprep.subr.mxu0 0.0
    %936 = vmatpush1.msra.mxu0 0.0
    %937 = vmatprep.subr.mxu0 0.0
    %938 = vmatpush1.msra.mxu0 0.0
    %939 = vmatprep.subr.mxu0 0.0
    %940 = vmatpush1.msra.mxu0 0.0
    %941 = vmatprep.subr.mxu0 0.0
    %942 = vmatpush1.msra.mxu0 0.0
    %943 = vmatprep.subr.mxu0 0.0
    %944 = vmatpush1.msra.mxu0 0.0
    %945 = vmatprep.subr.mxu0 0.0
    %946 = vmatpush1.msra.mxu0 0.0
    %947 = vmatprep.subr.mxu0 0.0
    %948 = vmatpush1.msra.mxu0 0.0
    %949 = vmatprep.subr.mxu0 0.0
    %950 = vmatpush1.msra.mxu0 0.0
    %951 = vmatprep.subr.mxu0 0.0
    %952 = vmatpush1.msra.mxu0 0.0
    %953 = vmatprep.subr.mxu0 0.0
    %954 = vmatpush1.msra.mxu0 0.0
    %955 = vmatprep.subr.mxu0 0.0
    %956 = vmatpush1.msra.mxu0 0.0
    %957 = vmatprep.subr.mxu0 0.0
    %958 = vmatpush1.msra.mxu0 0.0
    %959 = vmatprep.subr.mxu0 0.0
    %960 = vmatpush1.msra.mxu0 0.0
    %961 = vmatprep.subr.mxu0 0.0
    %962 = vmatpush1.msra.mxu0 0.0
    %963 = vmatprep.subr.mxu0 0.0
    %964 = vmatpush1.msra.mxu0 0.0
    %965 = vmatprep.subr.mxu0 0.0
    %966 = vmatpush1.msra.mxu0 0.0
    %967 = vmatprep.subr.mxu0 0.0
    %968 = vmatpush1.msra.mxu0 0.0
    %969 = vmatprep.subr.mxu0 0.0
    %970 = vmatpush1.msra.mxu0 0.0
    %971 = vmatprep.subr.mxu0 0.0
    %972 = vmatpush1.msra.mxu0 0.0
    %973 = vmatprep.subr.mxu0 0.0
    %974 = vmatpush1.msra.mxu0 0.0
    %975 = vmatprep.subr.mxu0 0.0
    %976 = vmatpush1.msra.mxu0 0.0
    %977 = vmatprep.subr.mxu0 0.0
    %978 = vmatpush1.msra.mxu0 0.0
    %979 = vmatprep.subr.mxu0 0.0
    %980 = vmatpush1.msra.mxu0 0.0
    %981 = vmatprep.subr.mxu0 0.0
    %982 = vmatpush1.msra.mxu0 0.0
    %983 = vmatprep.subr.mxu0 0.0
    %984 = vmatpush1.msra.mxu0 0.0
    %985 = vmatprep.mubr.f32.mxu0 0.0
    %986 = vmatmul.mubr.f32.gmra.mrb[0].mxu0 %v919
    %v987 = vpop.f32.mrb[0].mxu0
    %v988 = vadd.f32 0.0, %v987
    %v989 = vpop.f32.mrb[0].mxu0
    %990 = vdwg.mxu0
    %v992 = vsel %vm229, %v915, 0
    %994 = vmatprep.subr.mxu0 0.0
    %995 = vmatpush1.msra.mxu0 %v212
    %996 = vmatprep.subr.mxu0 0.0
    %997 = vmatpush1.msra.mxu0 %v213
    %998 = vmatprep.subr.mxu0 0.0
    %999 = vmatpush1.msra.mxu0 %v214
    %1000 = vmatprep.subr.mxu0 0.0
    %1001 = vmatpush1.msra.mxu0 %v215
    %1002 = vmatprep.subr.mxu0 0.0
    %1003 = vmatpush1.msra.mxu0 0.0
    %1004 = vmatprep.subr.mxu0 0.0
    %1005 = vmatpush1.msra.mxu0 0.0
    %1006 = vmatprep.subr.mxu0 0.0
    %1007 = vmatpush1.msra.mxu0 0.0
    %1008 = vmatprep.subr.mxu0 0.0
    %1009 = vmatpush1.msra.mxu0 0.0
    %1010 = vmatprep.subr.mxu0 0.0
    %1011 = vmatpush1.msra.mxu0 0.0
    %1012 = vmatprep.subr.mxu0 0.0
    %1013 = vmatpush1.msra.mxu0 0.0
    %1014 = vmatprep.subr.mxu0 0.0
    %1015 = vmatpush1.msra.mxu0 0.0
    %1016 = vmatprep.subr.mxu0 0.0
    %1017 = vmatpush1.msra.mxu0 0.0
    %1018 = vmatprep.subr.mxu0 0.0
    %1019 = vmatpush1.msra.mxu0 0.0
    %1020 = vmatprep.subr.mxu0 0.0
    %1021 = vmatpush1.msra.mxu0 0.0
    %1022 = vmatprep.subr.mxu0 0.0
    %1023 = vmatpush1.msra.mxu0 0.0
    %1024 = vmatprep.subr.mxu0 0.0
    %1025 = vmatpush1.msra.mxu0 0.0
    %1026 = vmatprep.subr.mxu0 0.0
    %1027 = vmatpush1.msra.mxu0 0.0
    %1028 = vmatprep.subr.mxu0 0.0
    %1029 = vmatpush1.msra.mxu0 0.0
    %1030 = vmatprep.subr.mxu0 0.0
    %1031 = vmatpush1.msra.mxu0 0.0
    %1032 = vmatprep.subr.mxu0 0.0
    %1033 = vmatpush1.msra.mxu0 0.0
    %1034 = vmatprep.subr.mxu0 0.0
    %1035 = vmatpush1.msra.mxu0 0.0
    %1036 = vmatprep.subr.mxu0 0.0
    %1037 = vmatpush1.msra.mxu0 0.0
    %1038 = vmatprep.subr.mxu0 0.0
    %1039 = vmatpush1.msra.mxu0 0.0
    %1040 = vmatprep.subr.mxu0 0.0
    %1041 = vmatpush1.msra.mxu0 0.0
    %1042 = vmatprep.subr.mxu0 0.0
    %1043 = vmatpush1.msra.mxu0 0.0
    %1044 = vmatprep.subr.mxu0 0.0
    %1045 = vmatpush1.msra.mxu0 0.0
    %1046 = vmatprep.subr.mxu0 0.0
    %1047 = vmatpush1.msra.mxu0 0.0
    %1048 = vmatprep.subr.mxu0 0.0
    %1049 = vmatpush1.msra.mxu0 0.0
    %1050 = vmatprep.subr.mxu0 0.0
    %1051 = vmatpush1.msra.mxu0 0.0
    %1052 = vmatprep.subr.mxu0 0.0
    %1053 = vmatpush1.msra.mxu0 0.0
    %1054 = vmatprep.subr.mxu0 0.0
    %1055 = vmatpush1.msra.mxu0 0.0
    %1056 = vmatprep.subr.mxu0 0.0
    %1057 = vmatpush1.msra.mxu0 0.0
    %1058 = vmatprep.mubr.f32.mxu0 0.0
    %1059 = vmatmul.mubr.f32.gmra.mrb[0].mxu0 %v992
    %v1060 = vpop.f32.mrb[0].mxu0
    %v1061 = vadd.f32 0.0, %v1060
    %v1062 = vpop.f32.mrb[0].mxu0
    %1063 = vdwg.mxu0
    %v1064 = vrot.slane %v129, 3
    %v1066 = vrot.slane %v203, 2
    %v1068 = vsel %vm376, %v1064, %v1066
    %v1069 = vrot.slane %v129, 4
    %v1070 = vrot.slane %v131, 4
    %v1073 = vrot.slane %v203, 3
    %v1074 = vrot.slane %v205, 3
    %v1077 = vsel %vm376, %v1069, %v1073
    %v1078 = vsel %vm376, %v1070, %v1074
    %v1079 = vadd.f32 %v1068, %v988
    %v1080 = vxor.u32 %v1079, 2147483648
    %v1081 = vmul.f32 %v1080, 1.442695
    %v1082 = vpow.pop %v1081
    %v1083 = vadd.f32 %v1082, 1.0
    %v1084 = vrcp.pop %v1083
    %v1085 = vmul.f32 1.0, %v1084
    %v1086 = vadd.f32 %v988, %v399
    %1088 = vrot.lane.b32.xlu0 %v1086, 64
    %v1089 = vpop.permute.xlu0 %1088
    %v1091 = vmul.f32 %v1085, %v1089
    %1093 = vrot.lane.b32.xlu0 %v1091, 64
    %v1094 = vpop.permute.xlu0 %1093
    %v1096 = vadd.f32 %v1068, %v1094
    %v1097 = vtanh.pop %v1096
    %v1098 = vsub.f32 1.0, %v1085
    %1100 = vrot.lane.b32.xlu0 %v1097, 96
    %v1101 = vpop.permute.xlu0 %1100
    %v1103 = vmul.f32 %v1098, %v1101
    %v1104 = vmul.f32 %v1085, %v877
    %v1105 = vadd.f32 %v1103, %v1104
    %1107 = vrot.lane.b32.xlu0 %v1061, 96
    %v1108 = vpop.permute.xlu0 %1107
    %v1110 = vadd.f32 %v1077, %v1108
    %v1111 = vxor.u32 %v1110, 2147483648
    %v1112 = vmul.f32 %v1111, 1.442695
    %v1113 = vpow.pop %v1112
    %v1114 = vadd.f32 %v1113, 1.0
    %v1115 = vrcp.pop %v1114
    %v1116 = vmul.f32 1.0, %v1115
    %v1117 = vadd.f32 %v1078, %v1108
    %v1118 = vxor.u32 %v1117, 2147483648
    %v1119 = vmul.f32 %v1118, 1.442695
    %v1120 = vpow.pop %v1119
    %v1121 = vadd.f32 %v1120, 1.0
    %v1122 = vrcp.pop %v1121
    %v1123 = vmul.f32 1.0, %v1122
    %v1124 = vadd.f32 %v1061, %v440
    %1126 = vrot.lane.b32.xlu0 %v1124, 32
    %v1127 = vpop.permute.xlu0 %1126
    %v1129 = vmul.f32 %v1116, %v1127
    %1131 = vrot.lane.b32.xlu0 %v1129, 64
    %v1132 = vpop.permute.xlu0 %1131
    %v1134 = vadd.f32 %v1078, %v1132
    %v1135 = vtanh.pop %v1134
    %v1136 = vsub.f32 1.0, %v1123
    %1138 = vrot.lane.b32.xlu0 %v1135, 96
    %v1139 = vpop.permute.xlu0 %1138
    %v1141 = vmul.f32 %v1136, %v1139
    %v1142 = vmul.f32 %v1123, %v915
    %v1143 = vadd.f32 %v1141, %v1142
    %1145 = vrot.lane.b32.xlu0 %v1105, 96
    %v1146 = vpop.permute.xlu0 %1145
    %v1147 = vsel %vm229, %v1146, 0
    %1149 = vmatprep.subr.mxu0 0.0
    %1150 = vmatpush1.msra.mxu0 %v207
    %1151 = vmatprep.subr.mxu0 0.0
    %1152 = vmatpush1.msra.mxu0 %v208
    %1153 = vmatprep.subr.mxu0 0.0
    %1154 = vmatpush1.msra.mxu0 %v209
    %1155 = vmatprep.subr.mxu0 0.0
    %1156 = vmatpush1.msra.mxu0 %v210
    %1157 = vmatprep.subr.mxu0 0.0
    %1158 = vmatpush1.msra.mxu0 0.0
    %1159 = vmatprep.subr.mxu0 0.0
    %1160 = vmatpush1.msra.mxu0 0.0
    %1161 = vmatprep.subr.mxu0 0.0
    %1162 = vmatpush1.msra.mxu0 0.0
    %1163 = vmatprep.subr.mxu0 0.0
    %1164 = vmatpush1.msra.mxu0 0.0
    %1165 = vmatprep.subr.mxu0 0.0
    %1166 = vmatpush1.msra.mxu0 0.0
    %1167 = vmatprep.subr.mxu0 0.0
    %1168 = vmatpush1.msra.mxu0 0.0
    %1169 = vmatprep.subr.mxu0 0.0
    %1170 = vmatpush1.msra.mxu0 0.0
    %1171 = vmatprep.subr.mxu0 0.0
    %1172 = vmatpush1.msra.mxu0 0.0
    %1173 = vmatprep.subr.mxu0 0.0
    %1174 = vmatpush1.msra.mxu0 0.0
    %1175 = vmatprep.subr.mxu0 0.0
    %1176 = vmatpush1.msra.mxu0 0.0
    %1177 = vmatprep.subr.mxu0 0.0
    %1178 = vmatpush1.msra.mxu0 0.0
    %1179 = vmatprep.subr.mxu0 0.0
    %1180 = vmatpush1.msra.mxu0 0.0
    %1181 = vmatprep.subr.mxu0 0.0
    %1182 = vmatpush1.msra.mxu0 0.0
    %1183 = vmatprep.subr.mxu0 0.0
    %1184 = vmatpush1.msra.mxu0 0.0
    %1185 = vmatprep.subr.mxu0 0.0
    %1186 = vmatpush1.msra.mxu0 0.0
    %1187 = vmatprep.subr.mxu0 0.0
    %1188 = vmatpush1.msra.mxu0 0.0
    %1189 = vmatprep.subr.mxu0 0.0
    %1190 = vmatpush1.msra.mxu0 0.0
    %1191 = vmatprep.subr.mxu0 0.0
    %1192 = vmatpush1.msra.mxu0 0.0
    %1193 = vmatprep.subr.mxu0 0.0
    %1194 = vmatpush1.msra.mxu0 0.0
    %1195 = vmatprep.subr.mxu0 0.0
    %1196 = vmatpush1.msra.mxu0 0.0
    %1197 = vmatprep.subr.mxu0 0.0
    %1198 = vmatpush1.msra.mxu0 0.0
    %1199 = vmatprep.subr.mxu0 0.0
    %1200 = vmatpush1.msra.mxu0 0.0
    %1201 = vmatprep.subr.mxu0 0.0
    %1202 = vmatpush1.msra.mxu0 0.0
    %1203 = vmatprep.subr.mxu0 0.0
    %1204 = vmatpush1.msra.mxu0 0.0
    %1205 = vmatprep.subr.mxu0 0.0
    %1206 = vmatpush1.msra.mxu0 0.0
    %1207 = vmatprep.subr.mxu0 0.0
    %1208 = vmatpush1.msra.mxu0 0.0
    %1209 = vmatprep.subr.mxu0 0.0
    %1210 = vmatpush1.msra.mxu0 0.0
    %1211 = vmatprep.subr.mxu0 0.0
    %1212 = vmatpush1.msra.mxu0 0.0
    %1213 = vmatprep.mubr.f32.mxu0 0.0
    %1214 = vmatmul.mubr.f32.gmra.mrb[0].mxu0 %v1147
    %v1215 = vpop.f32.mrb[0].mxu0
    %v1216 = vadd.f32 0.0, %v1215
    %v1217 = vpop.f32.mrb[0].mxu0
    %1218 = vdwg.mxu0
    %v1220 = vsel %vm229, %v1143, 0
    %1222 = vmatprep.subr.mxu0 0.0
    %1223 = vmatpush1.msra.mxu0 %v212
    %1224 = vmatprep.subr.mxu0 0.0
    %1225 = vmatpush1.msra.mxu0 %v213
    %1226 = vmatprep.subr.mxu0 0.0
    %1227 = vmatpush1.msra.mxu0 %v214
    %1228 = vmatprep.subr.mxu0 0.0
    %1229 = vmatpush1.msra.mxu0 %v215
    %1230 = vmatprep.subr.mxu0 0.0
    %1231 = vmatpush1.msra.mxu0 0.0
    %1232 = vmatprep.subr.mxu0 0.0
    %1233 = vmatpush1.msra.mxu0 0.0
    %1234 = vmatprep.subr.mxu0 0.0
    %1235 = vmatpush1.msra.mxu0 0.0
    %1236 = vmatprep.subr.mxu0 0.0
    %1237 = vmatpush1.msra.mxu0 0.0
    %1238 = vmatprep.subr.mxu0 0.0
    %1239 = vmatpush1.msra.mxu0 0.0
    %1240 = vmatprep.subr.mxu0 0.0
    %1241 = vmatpush1.msra.mxu0 0.0
    %1242 = vmatprep.subr.mxu0 0.0
    %1243 = vmatpush1.msra.mxu0 0.0
    %1244 = vmatprep.subr.mxu0 0.0
    %1245 = vmatpush1.msra.mxu0 0.0
    %1246 = vmatprep.subr.mxu0 0.0
    %1247 = vmatpush1.msra.mxu0 0.0
    %1248 = vmatprep.subr.mxu0 0.0
    %1249 = vmatpush1.msra.mxu0 0.0
    %1250 = vmatprep.subr.mxu0 0.0
    %1251 = vmatpush1.msra.mxu0 0.0
    %1252 = vmatprep.subr.mxu0 0.0
    %1253 = vmatpush1.msra.mxu0 0.0
    %1254 = vmatprep.subr.mxu0 0.0
    %1255 = vmatpush1.msra.mxu0 0.0
    %1256 = vmatprep.subr.mxu0 0.0
    %1257 = vmatpush1.msra.mxu0 0.0
    %1258 = vmatprep.subr.mxu0 0.0
    %1259 = vmatpush1.msra.mxu0 0.0
    %1260 = vmatprep.subr.mxu0 0.0
    %1261 = vmatpush1.msra.mxu0 0.0
    %1262 = vmatprep.subr.mxu0 0.0
    %1263 = vmatpush1.msra.mxu0 0.0
    %1264 = vmatprep.subr.mxu0 0.0
    %1265 = vmatpush1.msra.mxu0 0.0
    %1266 = vmatprep.subr.mxu0 0.0
    %1267 = vmatpush1.msra.mxu0 0.0
    %1268 = vmatprep.subr.mxu0 0.0
    %1269 = vmatpush1.msra.mxu0 0.0
    %1270 = vmatprep.subr.mxu0 0.0
    %1271 = vmatpush1.msra.mxu0 0.0
    %1272 = vmatprep.subr.mxu0 0.0
    %1273 = vmatpush1.msra.mxu0 0.0
    %1274 = vmatprep.subr.mxu0 0.0
    %1275 = vmatpush1.msra.mxu0 0.0
    %1276 = vmatprep.subr.mxu0 0.0
    %1277 = vmatpush1.msra.mxu0 0.0
    %1278 = vmatprep.subr.mxu0 0.0
    %1279 = vmatpush1.msra.mxu0 0.0
    %1280 = vmatprep.subr.mxu0 0.0
    %1281 = vmatpush1.msra.mxu0 0.0
    %1282 = vmatprep.subr.mxu0 0.0
    %1283 = vmatpush1.msra.mxu0 0.0
    %1284 = vmatprep.subr.mxu0 0.0
    %1285 = vmatpush1.msra.mxu0 0.0
    %1286 = vmatprep.mubr.f32.mxu0 0.0
    %1287 = vmatmul.mubr.f32.gmra.mrb[0].mxu0 %v1220
    %v1288 = vpop.f32.mrb[0].mxu0
    %v1289 = vadd.f32 0.0, %v1288
    %v1290 = vpop.f32.mrb[0].mxu0
    %1291 = vdwg.mxu0
    %v1292 = vrot.slane %v131, 3
    %v1294 = vrot.slane %v205, 2
    %v1296 = vsel %vm376, %v1292, %v1294
    %v1297 = vadd.f32 %v1077, %v1216
    %v1298 = vxor.u32 %v1297, 2147483648
    %v1299 = vmul.f32 %v1298, 1.442695
    %v1300 = vpow.pop %v1299
    %v1301 = vadd.f32 %v1300, 1.0
    %v1302 = vrcp.pop %v1301
    %v1303 = vmul.f32 1.0, %v1302
    %v1304 = vadd.f32 %v1216, %v399
    %1306 = vrot.lane.b32.xlu0 %v1304, 64
    %v1307 = vpop.permute.xlu0 %1306
    %v1309 = vmul.f32 %v1303, %v1307
    %1311 = vrot.lane.b32.xlu0 %v1309, 64
    %v1312 = vpop.permute.xlu0 %1311
    %v1314 = vadd.f32 %v1077, %v1312
    %v1315 = vtanh.pop %v1314
    %v1316 = vsub.f32 1.0, %v1303
    %1318 = vrot.lane.b32.xlu0 %v1315, 96
    %v1319 = vpop.permute.xlu0 %1318
    %v1321 = vmul.f32 %v1316, %v1319
    %v1322 = vmul.f32 %v1303, %v1105
    %v1323 = vadd.f32 %v1321, %v1322
    %1325 = vrot.lane.b32.xlu0 %v1289, 96
    %v1326 = vpop.permute.xlu0 %1325
    %v1328 = vadd.f32 %v1068, %v1326
    %v1329 = vxor.u32 %v1328, 2147483648
    %v1330 = vmul.f32 %v1329, 1.442695
    %v1331 = vpow.pop %v1330
    %v1332 = vadd.f32 %v1331, 1.0
    %v1333 = vrcp.pop %v1332
    %v1334 = vmul.f32 1.0, %v1333
    %v1335 = vadd.f32 %v1296, %v1326
    %v1336 = vxor.u32 %v1335, 2147483648
    %v1337 = vmul.f32 %v1336, 1.442695
    %v1338 = vpow.pop %v1337
    %v1339 = vadd.f32 %v1338, 1.0
    %v1340 = vrcp.pop %v1339
    %v1341 = vmul.f32 1.0, %v1340
    %v1342 = vadd.f32 %v1289, %v440
    %1344 = vrot.lane.b32.xlu0 %v1342, 32
    %v1345 = vpop.permute.xlu0 %1344
    %v1347 = vmul.f32 %v1334, %v1345
    %1349 = vrot.lane.b32.xlu0 %v1347, 64
    %v1350 = vpop.permute.xlu0 %1349
    %v1352 = vadd.f32 %v1296, %v1350
    %v1353 = vtanh.pop %v1352
    %v1354 = vsub.f32 1.0, %v1341
    %1356 = vrot.lane.b32.xlu0 %v1353, 96
    %v1357 = vpop.permute.xlu0 %1356
    %v1359 = vmul.f32 %v1354, %v1357
    %v1360 = vmul.f32 %v1341, %v1143
    %v1361 = vadd.f32 %v1359, %v1360
    %1363 = vrot.lane.b32.xlu0 %v1323, 96
    %v1364 = vpop.permute.xlu0 %1363
    %v1365 = vsel %vm229, %v1364, 0
    %1367 = vmatprep.subr.mxu0 0.0
    %1368 = vmatpush1.msra.mxu0 %v207
    %1369 = vmatprep.subr.mxu0 0.0
    %1370 = vmatpush1.msra.mxu0 %v208
    %1371 = vmatprep.subr.mxu0 0.0
    %1372 = vmatpush1.msra.mxu0 %v209
    %1373 = vmatprep.subr.mxu0 0.0
    %1374 = vmatpush1.msra.mxu0 %v210
    %1375 = vmatprep.subr.mxu0 0.0
    %1376 = vmatpush1.msra.mxu0 0.0
    %1377 = vmatprep.subr.mxu0 0.0
    %1378 = vmatpush1.msra.mxu0 0.0
    %1379 = vmatprep.subr.mxu0 0.0
    %1380 = vmatpush1.msra.mxu0 0.0
    %1381 = vmatprep.subr.mxu0 0.0
    %1382 = vmatpush1.msra.mxu0 0.0
    %1383 = vmatprep.subr.mxu0 0.0
    %1384 = vmatpush1.msra.mxu0 0.0
    %1385 = vmatprep.subr.mxu0 0.0
    %1386 = vmatpush1.msra.mxu0 0.0
    %1387 = vmatprep.subr.mxu0 0.0
    %1388 = vmatpush1.msra.mxu0 0.0
    %1389 = vmatprep.subr.mxu0 0.0
    %1390 = vmatpush1.msra.mxu0 0.0
    %1391 = vmatprep.subr.mxu0 0.0
    %1392 = vmatpush1.msra.mxu0 0.0
    %1393 = vmatprep.subr.mxu0 0.0
    %1394 = vmatpush1.msra.mxu0 0.0
    %1395 = vmatprep.subr.mxu0 0.0
    %1396 = vmatpush1.msra.mxu0 0.0
    %1397 = vmatprep.subr.mxu0 0.0
    %1398 = vmatpush1.msra.mxu0 0.0
    %1399 = vmatprep.subr.mxu0 0.0
    %1400 = vmatpush1.msra.mxu0 0.0
    %1401 = vmatprep.subr.mxu0 0.0
    %1402 = vmatpush1.msra.mxu0 0.0
    %1403 = vmatprep.subr.mxu0 0.0
    %1404 = vmatpush1.msra.mxu0 0.0
    %1405 = vmatprep.subr.mxu0 0.0
    %1406 = vmatpush1.msra.mxu0 0.0
    %1407 = vmatprep.subr.mxu0 0.0
    %1408 = vmatpush1.msra.mxu0 0.0
    %1409 = vmatprep.subr.mxu0 0.0
    %1410 = vmatpush1.msra.mxu0 0.0
    %1411 = vmatprep.subr.mxu0 0.0
    %1412 = vmatpush1.msra.mxu0 0.0
    %1413 = vmatprep.subr.mxu0 0.0
    %1414 = vmatpush1.msra.mxu0 0.0
    %1415 = vmatprep.subr.mxu0 0.0
    %1416 = vmatpush1.msra.mxu0 0.0
    %1417 = vmatprep.subr.mxu0 0.0
    %1418 = vmatpush1.msra.mxu0 0.0
    %1419 = vmatprep.subr.mxu0 0.0
    %1420 = vmatpush1.msra.mxu0 0.0
    %1421 = vmatprep.subr.mxu0 0.0
    %1422 = vmatpush1.msra.mxu0 0.0
    %1423 = vmatprep.subr.mxu0 0.0
    %1424 = vmatpush1.msra.mxu0 0.0
    %1425 = vmatprep.subr.mxu0 0.0
    %1426 = vmatpush1.msra.mxu0 0.0
    %1427 = vmatprep.subr.mxu0 0.0
    %1428 = vmatpush1.msra.mxu0 0.0
    %1429 = vmatprep.subr.mxu0 0.0
    %1430 = vmatpush1.msra.mxu0 0.0
    %1431 = vmatprep.mubr.f32.mxu0 0.0
    %1432 = vmatmul.mubr.f32.gmra.mrb[0].mxu0 %v1365
    %v1433 = vpop.f32.mrb[0].mxu0
    %v1434 = vadd.f32 0.0, %v1433
    %v1435 = vpop.f32.mrb[0].mxu0
    %1436 = vdwg.mxu0
    %v1438 = vsel %vm229, %v1361, 0
    %1440 = vmatprep.subr.mxu0 0.0
    %1441 = vmatpush1.msra.mxu0 %v212
    %1442 = vmatprep.subr.mxu0 0.0
    %1443 = vmatpush1.msra.mxu0 %v213
    %1444 = vmatprep.subr.mxu0 0.0
    %1445 = vmatpush1.msra.mxu0 %v214
    %1446 = vmatprep.subr.mxu0 0.0
    %1447 = vmatpush1.msra.mxu0 %v215
    %1448 = vmatprep.subr.mxu0 0.0
    %1449 = vmatpush1.msra.mxu0 0.0
    %1450 = vmatprep.subr.mxu0 0.0
    %1451 = vmatpush1.msra.mxu0 0.0
    %1452 = vmatprep.subr.mxu0 0.0
    %1453 = vmatpush1.msra.mxu0 0.0
    %1454 = vmatprep.subr.mxu0 0.0
    %1455 = vmatpush1.msra.mxu0 0.0
    %1456 = vmatprep.subr.mxu0 0.0
    %1457 = vmatpush1.msra.mxu0 0.0
    %1458 = vmatprep.subr.mxu0 0.0
    %1459 = vmatpush1.msra.mxu0 0.0
    %1460 = vmatprep.subr.mxu0 0.0
    %1461 = vmatpush1.msra.mxu0 0.0
    %1462 = vmatprep.subr.mxu0 0.0
    %1463 = vmatpush1.msra.mxu0 0.0
    %1464 = vmatprep.subr.mxu0 0.0
    %1465 = vmatpush1.msra.mxu0 0.0
    %1466 = vmatprep.subr.mxu0 0.0
    %1467 = vmatpush1.msra.mxu0 0.0
    %1468 = vmatprep.subr.mxu0 0.0
    %1469 = vmatpush1.msra.mxu0 0.0
    %1470 = vmatprep.subr.mxu0 0.0
    %1471 = vmatpush1.msra.mxu0 0.0
    %1472 = vmatprep.subr.mxu0 0.0
    %1473 = vmatpush1.msra.mxu0 0.0
    %1474 = vmatprep.subr.mxu0 0.0
    %1475 = vmatpush1.msra.mxu0 0.0
    %1476 = vmatprep.subr.mxu0 0.0
    %1477 = vmatpush1.msra.mxu0 0.0
    %1478 = vmatprep.subr.mxu0 0.0
    %1479 = vmatpush1.msra.mxu0 0.0
    %1480 = vmatprep.subr.mxu0 0.0
    %1481 = vmatpush1.msra.mxu0 0.0
    %1482 = vmatprep.subr.mxu0 0.0
    %1483 = vmatpush1.msra.mxu0 0.0
    %1484 = vmatprep.subr.mxu0 0.0
    %1485 = vmatpush1.msra.mxu0 0.0
    %1486 = vmatprep.subr.mxu0 0.0
    %1487 = vmatpush1.msra.mxu0 0.0
    %1488 = vmatprep.subr.mxu0 0.0
    %1489 = vmatpush1.msra.mxu0 0.0
    %1490 = vmatprep.subr.mxu0 0.0
    %1491 = vmatpush1.msra.mxu0 0.0
    %1492 = vmatprep.subr.mxu0 0.0
    %1493 = vmatpush1.msra.mxu0 0.0
    %1494 = vmatprep.subr.mxu0 0.0
    %1495 = vmatpush1.msra.mxu0 0.0
    %1496 = vmatprep.subr.mxu0 0.0
    %1497 = vmatpush1.msra.mxu0 0.0
    %1498 = vmatprep.subr.mxu0 0.0
    %1499 = vmatpush1.msra.mxu0 0.0
    %1500 = vmatprep.subr.mxu0 0.0
    %1501 = vmatpush1.msra.mxu0 0.0
    %1502 = vmatprep.subr.mxu0 0.0
    %1503 = vmatpush1.msra.mxu0 0.0
    %1504 = vmatprep.mubr.f32.mxu0 0.0
    %1505 = vmatmul.mubr.f32.gmra.mrb[0].mxu0 %v1438
    %v1506 = vpop.f32.mrb[0].mxu0
    %v1507 = vadd.f32 0.0, %v1506
    %v1508 = vpop.f32.mrb[0].mxu0
    %1509 = vdwg.mxu0
    %v1510 = vrot.slane %v131, 2
    %v1512 = vrot.slane %v205, 1
    %v1514 = vsel %vm376, %v1510, %v1512
    %v1515 = vadd.f32 %v849, %v1434
    %v1516 = vxor.u32 %v1515, 2147483648
    %v1517 = vmul.f32 %v1516, 1.442695
    %v1518 = vpow.pop %v1517
    %v1519 = vadd.f32 %v1518, 1.0
    %v1520 = vrcp.pop %v1519
    %v1521 = vmul.f32 1.0, %v1520
    %v1522 = vadd.f32 %v1434, %v399
    %1524 = vrot.lane.b32.xlu0 %v1522, 64
    %v1525 = vpop.permute.xlu0 %1524
    %v1527 = vmul.f32 %v1521, %v1525
    %1529 = vrot.lane.b32.xlu0 %v1527, 64
    %v1530 = vpop.permute.xlu0 %1529
    %v1532 = vadd.f32 %v849, %v1530
    %v1533 = vtanh.pop %v1532
    %v1534 = vsub.f32 1.0, %v1521
    %1536 = vrot.lane.b32.xlu0 %v1533, 96
    %v1537 = vpop.permute.xlu0 %1536
    %v1539 = vmul.f32 %v1534, %v1537
    %v1540 = vmul.f32 %v1521, %v1323
    %v1541 = vadd.f32 %v1539, %v1540
    %1543 = vrot.lane.b32.xlu0 %v1507, 96
    %v1544 = vpop.permute.xlu0 %1543
    %v1546 = vadd.f32 %v840, %v1544
    %v1547 = vxor.u32 %v1546, 2147483648
    %v1548 = vmul.f32 %v1547, 1.442695
    %v1549 = vpow.pop %v1548
    %v1550 = vadd.f32 %v1549, 1.0
    %v1551 = vrcp.pop %v1550
    %v1552 = vmul.f32 1.0, %v1551
    %v1553 = vadd.f32 %v1514, %v1544
    %v1554 = vxor.u32 %v1553, 2147483648
    %v1555 = vmul.f32 %v1554, 1.442695
    %v1556 = vpow.pop %v1555
    %v1557 = vadd.f32 %v1556, 1.0
    %v1558 = vrcp.pop %v1557
    %v1559 = vmul.f32 1.0, %v1558
    %v1560 = vadd.f32 %v1507, %v440
    %1562 = vrot.lane.b32.xlu0 %v1560, 32
    %v1563 = vpop.permute.xlu0 %1562
    %v1565 = vmul.f32 %v1552, %v1563
    %1567 = vrot.lane.b32.xlu0 %v1565, 64
    %v1568 = vpop.permute.xlu0 %1567
    %v1570 = vadd.f32 %v1514, %v1568
    %v1571 = vtanh.pop %v1570
    %v1572 = vsub.f32 1.0, %v1559
    %1574 = vrot.lane.b32.xlu0 %v1571, 96
    %v1575 = vpop.permute.xlu0 %1574
    %v1577 = vmul.f32 %v1572, %v1575
    %v1578 = vmul.f32 %v1559, %v1361
    %v1579 = vadd.f32 %v1577, %v1578
    %1581 = vrot.lane.b32.xlu0 %v1541, 96
    %v1582 = vpop.permute.xlu0 %1581
    %v1583 = vsel %vm229, %v1582, 0
    %1585 = vmatprep.subr.mxu0 0.0
    %1586 = vmatpush1.msra.mxu0 %v207
    %1587 = vmatprep.subr.mxu0 0.0
    %1588 = vmatpush1.msra.mxu0 %v208
    %1589 = vmatprep.subr.mxu0 0.0
    %1590 = vmatpush1.msra.mxu0 %v209
    %1591 = vmatprep.subr.mxu0 0.0
    %1592 = vmatpush1.msra.mxu0 %v210
    %1593 = vmatprep.subr.mxu0 0.0
    %1594 = vmatpush1.msra.mxu0 0.0
    %1595 = vmatprep.subr.mxu0 0.0
    %1596 = vmatpush1.msra.mxu0 0.0
    %1597 = vmatprep.subr.mxu0 0.0
    %1598 = vmatpush1.msra.mxu0 0.0
    %1599 = vmatprep.subr.mxu0 0.0
    %1600 = vmatpush1.msra.mxu0 0.0
    %1601 = vmatprep.subr.mxu0 0.0
    %1602 = vmatpush1.msra.mxu0 0.0
    %1603 = vmatprep.subr.mxu0 0.0
    %1604 = vmatpush1.msra.mxu0 0.0
    %1605 = vmatprep.subr.mxu0 0.0
    %1606 = vmatpush1.msra.mxu0 0.0
    %1607 = vmatprep.subr.mxu0 0.0
    %1608 = vmatpush1.msra.mxu0 0.0
    %1609 = vmatprep.subr.mxu0 0.0
    %1610 = vmatpush1.msra.mxu0 0.0
    %1611 = vmatprep.subr.mxu0 0.0
    %1612 = vmatpush1.msra.mxu0 0.0
    %1613 = vmatprep.subr.mxu0 0.0
    %1614 = vmatpush1.msra.mxu0 0.0
    %1615 = vmatprep.subr.mxu0 0.0
    %1616 = vmatpush1.msra.mxu0 0.0
    %1617 = vmatprep.subr.mxu0 0.0
    %1618 = vmatpush1.msra.mxu0 0.0
    %1619 = vmatprep.subr.mxu0 0.0
    %1620 = vmatpush1.msra.mxu0 0.0
    %1621 = vmatprep.subr.mxu0 0.0
    %1622 = vmatpush1.msra.mxu0 0.0
    %1623 = vmatprep.subr.mxu0 0.0
    %1624 = vmatpush1.msra.mxu0 0.0
    %1625 = vmatprep.subr.mxu0 0.0
    %1626 = vmatpush1.msra.mxu0 0.0
    %1627 = vmatprep.subr.mxu0 0.0
    %1628 = vmatpush1.msra.mxu0 0.0
    %1629 = vmatprep.subr.mxu0 0.0
    %1630 = vmatpush1.msra.mxu0 0.0
    %1631 = vmatprep.subr.mxu0 0.0
    %1632 = vmatpush1.msra.mxu0 0.0
    %1633 = vmatprep.subr.mxu0 0.0
    %1634 = vmatpush1.msra.mxu0 0.0
    %1635 = vmatprep.subr.mxu0 0.0
    %1636 = vmatpush1.msra.mxu0 0.0
    %1637 = vmatprep.subr.mxu0 0.0
    %1638 = vmatpush1.msra.mxu0 0.0
    %1639 = vmatprep.subr.mxu0 0.0
    %1640 = vmatpush1.msra.mxu0 0.0
    %1641 = vmatprep.subr.mxu0 0.0
    %1642 = vmatpush1.msra.mxu0 0.0
    %1643 = vmatprep.subr.mxu0 0.0
    %1644 = vmatpush1.msra.mxu0 0.0
    %1645 = vmatprep.subr.mxu0 0.0
    %1646 = vmatpush1.msra.mxu0 0.0
    %1647 = vmatprep.subr.mxu0 0.0
    %1648 = vmatpush1.msra.mxu0 0.0
    %1649 = vmatprep.mubr.f32.mxu0 0.0
    %1650 = vmatmul.mubr.f32.gmra.mrb[0].mxu0 %v1583
    %v1651 = vpop.f32.mrb[0].mxu0
    %v1652 = vadd.f32 0.0, %v1651
    %v1653 = vpop.f32.mrb[0].mxu0
    %1654 = vdwg.mxu0
    %v1656 = vsel %vm229, %v1579, 0
    %1658 = vmatprep.subr.mxu0 0.0
    %1659 = vmatpush1.msra.mxu0 %v212
    %1660 = vmatprep.subr.mxu0 0.0
    %1661 = vmatpush1.msra.mxu0 %v213
    %1662 = vmatprep.subr.mxu0 0.0
    %1663 = vmatpush1.msra.mxu0 %v214
    %1664 = vmatprep.subr.mxu0 0.0
    %1665 = vmatpush1.msra.mxu0 %v215
    %1666 = vmatprep.subr.mxu0 0.0
    %1667 = vmatpush1.msra.mxu0 0.0
    %1668 = vmatprep.subr.mxu0 0.0
    %1669 = vmatpush1.msra.mxu0 0.0
    %1670 = vmatprep.subr.mxu0 0.0
    %1671 = vmatpush1.msra.mxu0 0.0
    %1672 = vmatprep.subr.mxu0 0.0
    %1673 = vmatpush1.msra.mxu0 0.0
    %1674 = vmatprep.subr.mxu0 0.0
    %1675 = vmatpush1.msra.mxu0 0.0
    %1676 = vmatprep.subr.mxu0 0.0
    %1677 = vmatpush1.msra.mxu0 0.0
    %1678 = vmatprep.subr.mxu0 0.0
    %1679 = vmatpush1.msra.mxu0 0.0
    %1680 = vmatprep.subr.mxu0 0.0
    %1681 = vmatpush1.msra.mxu0 0.0
    %1682 = vmatprep.subr.mxu0 0.0
    %1683 = vmatpush1.msra.mxu0 0.0
    %1684 = vmatprep.subr.mxu0 0.0
    %1685 = vmatpush1.msra.mxu0 0.0
    %1686 = vmatprep.subr.mxu0 0.0
    %1687 = vmatpush1.msra.mxu0 0.0
    %1688 = vmatprep.subr.mxu0 0.0
    %1689 = vmatpush1.msra.mxu0 0.0
    %1690 = vmatprep.subr.mxu0 0.0
    %1691 = vmatpush1.msra.mxu0 0.0
    %1692 = vmatprep.subr.mxu0 0.0
    %1693 = vmatpush1.msra.mxu0 0.0
    %1694 = vmatprep.subr.mxu0 0.0
    %1695 = vmatpush1.msra.mxu0 0.0
    %1696 = vmatprep.subr.mxu0 0.0
    %1697 = vmatpush1.msra.mxu0 0.0
    %1698 = vmatprep.subr.mxu0 0.0
    %1699 = vmatpush1.msra.mxu0 0.0
    %1700 = vmatprep.subr.mxu0 0.0
    %1701 = vmatpush1.msra.mxu0 0.0
    %1702 = vmatprep.subr.mxu0 0.0
    %1703 = vmatpush1.msra.mxu0 0.0
    %1704 = vmatprep.subr.mxu0 0.0
    %1705 = vmatpush1.msra.mxu0 0.0
    %1706 = vmatprep.subr.mxu0 0.0
    %1707 = vmatpush1.msra.mxu0 0.0
    %1708 = vmatprep.subr.mxu0 0.0
    %1709 = vmatpush1.msra.mxu0 0.0
    %1710 = vmatprep.subr.mxu0 0.0
    %1711 = vmatpush1.msra.mxu0 0.0
    %1712 = vmatprep.subr.mxu0 0.0
    %1713 = vmatpush1.msra.mxu0 0.0
    %1714 = vmatprep.subr.mxu0 0.0
    %1715 = vmatpush1.msra.mxu0 0.0
    %1716 = vmatprep.subr.mxu0 0.0
    %1717 = vmatpush1.msra.mxu0 0.0
    %1718 = vmatprep.subr.mxu0 0.0
    %1719 = vmatpush1.msra.mxu0 0.0
    %1720 = vmatprep.subr.mxu0 0.0
    %1721 = vmatpush1.msra.mxu0 0.0
    %1722 = vmatprep.mubr.f32.mxu0 0.0
    %1723 = vmatmul.mubr.f32.gmra.mrb[0].mxu0 %v1656
    %v1724 = vpop.f32.mrb[0].mxu0
    %v1725 = vadd.f32 0.0, %v1724
    %v1726 = vpop.f32.mrb[0].mxu0
    %1727 = vdwg.mxu0
    %v1728 = vrot.slane %v131, 1
    %v1730 = vsel %vm376, %v1728, %v205
    %v1731 = vadd.f32 %v621, %v1652
    %v1732 = vxor.u32 %v1731, 2147483648
    %v1733 = vmul.f32 %v1732, 1.442695
    %v1734 = vpow.pop %v1733
    %v1735 = vadd.f32 %v1734, 1.0
    %v1736 = vrcp.pop %v1735
    %v1737 = vmul.f32 1.0, %v1736
    %v1738 = vadd.f32 %v1652, %v399
    %1740 = vrot.lane.b32.xlu0 %v1738, 64
    %v1741 = vpop.permute.xlu0 %1740
    %v1743 = vmul.f32 %v1737, %v1741
    %1745 = vrot.lane.b32.xlu0 %v1743, 64
    %v1746 = vpop.permute.xlu0 %1745
    %v1748 = vadd.f32 %v621, %v1746
    %v1749 = vtanh.pop %v1748
    %v1750 = vsub.f32 1.0, %v1737
    %1752 = vrot.lane.b32.xlu0 %v1749, 96
    %v1753 = vpop.permute.xlu0 %1752
    %v1755 = vmul.f32 %v1750, %v1753
    %v1756 = vmul.f32 %v1737, %v1541
    %v1757 = vadd.f32 %v1755, %v1756
    %1759 = vrot.lane.b32.xlu0 %v1725, 96
    %v1760 = vpop.permute.xlu0 %1759
    %v1762 = vadd.f32 %v612, %v1760
    %v1763 = vxor.u32 %v1762, 2147483648
    %v1764 = vmul.f32 %v1763, 1.442695
    %v1765 = vpow.pop %v1764
    %v1766 = vadd.f32 %v1765, 1.0
    %v1767 = vrcp.pop %v1766
    %v1768 = vmul.f32 1.0, %v1767
    %v1769 = vadd.f32 %v1730, %v1760
    %v1770 = vxor.u32 %v1769, 2147483648
    %v1771 = vmul.f32 %v1770, 1.442695
    %v1772 = vpow.pop %v1771
    %v1773 = vadd.f32 %v1772, 1.0
    %v1774 = vrcp.pop %v1773
    %v1775 = vmul.f32 1.0, %v1774
    %v1776 = vadd.f32 %v1725, %v440
    %1778 = vrot.lane.b32.xlu0 %v1776, 32
    %v1779 = vpop.permute.xlu0 %1778
    %v1781 = vmul.f32 %v1768, %v1779
    %1783 = vrot.lane.b32.xlu0 %v1781, 64
    %v1784 = vpop.permute.xlu0 %1783
    %v1786 = vadd.f32 %v1730, %v1784
    %v1787 = vtanh.pop %v1786
    %v1788 = vsub.f32 1.0, %v1775
    %1790 = vrot.lane.b32.xlu0 %v1787, 96
    %v1791 = vpop.permute.xlu0 %1790
    %v1793 = vmul.f32 %v1788, %v1791
    %v1794 = vmul.f32 %v1775, %v1579
    %v1795 = vadd.f32 %v1793, %v1794
    %1797 = vrot.lane.b32.xlu0 %v1757, 96
    %v1798 = vpop.permute.xlu0 %1797
    %v1799 = vsel %vm229, %v1798, 0
    %1801 = vmatprep.subr.mxu0 0.0
    %1802 = vmatpush1.msra.mxu0 %v207
    %1803 = vmatprep.subr.mxu0 0.0
    %1804 = vmatpush1.msra.mxu0 %v208
    %1805 = vmatprep.subr.mxu0 0.0
    %1806 = vmatpush1.msra.mxu0 %v209
    %1807 = vmatprep.subr.mxu0 0.0
    %1808 = vmatpush1.msra.mxu0 %v210
    %1809 = vmatprep.subr.mxu0 0.0
    %1810 = vmatpush1.msra.mxu0 0.0
    %1811 = vmatprep.subr.mxu0 0.0
    %1812 = vmatpush1.msra.mxu0 0.0
    %1813 = vmatprep.subr.mxu0 0.0
    %1814 = vmatpush1.msra.mxu0 0.0
    %1815 = vmatprep.subr.mxu0 0.0
    %1816 = vmatpush1.msra.mxu0 0.0
    %1817 = vmatprep.subr.mxu0 0.0
    %1818 = vmatpush1.msra.mxu0 0.0
    %1819 = vmatprep.subr.mxu0 0.0
    %1820 = vmatpush1.msra.mxu0 0.0
    %1821 = vmatprep.subr.mxu0 0.0
    %1822 = vmatpush1.msra.mxu0 0.0
    %1823 = vmatprep.subr.mxu0 0.0
    %1824 = vmatpush1.msra.mxu0 0.0
    %1825 = vmatprep.subr.mxu0 0.0
    %1826 = vmatpush1.msra.mxu0 0.0
    %1827 = vmatprep.subr.mxu0 0.0
    %1828 = vmatpush1.msra.mxu0 0.0
    %1829 = vmatprep.subr.mxu0 0.0
    %1830 = vmatpush1.msra.mxu0 0.0
    %1831 = vmatprep.subr.mxu0 0.0
    %1832 = vmatpush1.msra.mxu0 0.0
    %1833 = vmatprep.subr.mxu0 0.0
    %1834 = vmatpush1.msra.mxu0 0.0
    %1835 = vmatprep.subr.mxu0 0.0
    %1836 = vmatpush1.msra.mxu0 0.0
    %1837 = vmatprep.subr.mxu0 0.0
    %1838 = vmatpush1.msra.mxu0 0.0
    %1839 = vmatprep.subr.mxu0 0.0
    %1840 = vmatpush1.msra.mxu0 0.0
    %1841 = vmatprep.subr.mxu0 0.0
    %1842 = vmatpush1.msra.mxu0 0.0
    %1843 = vmatprep.subr.mxu0 0.0
    %1844 = vmatpush1.msra.mxu0 0.0
    %1845 = vmatprep.subr.mxu0 0.0
    %1846 = vmatpush1.msra.mxu0 0.0
    %1847 = vmatprep.subr.mxu0 0.0
    %1848 = vmatpush1.msra.mxu0 0.0
    %1849 = vmatprep.subr.mxu0 0.0
    %1850 = vmatpush1.msra.mxu0 0.0
    %1851 = vmatprep.subr.mxu0 0.0
    %1852 = vmatpush1.msra.mxu0 0.0
    %1853 = vmatprep.subr.mxu0 0.0
    %1854 = vmatpush1.msra.mxu0 0.0
    %1855 = vmatprep.subr.mxu0 0.0
    %1856 = vmatpush1.msra.mxu0 0.0
    %1857 = vmatprep.subr.mxu0 0.0
    %1858 = vmatpush1.msra.mxu0 0.0
    %1859 = vmatprep.subr.mxu0 0.0
    %1860 = vmatpush1.msra.mxu0 0.0
    %1861 = vmatprep.subr.mxu0 0.0
    %1862 = vmatpush1.msra.mxu0 0.0
    %1863 = vmatprep.subr.mxu0 0.0
    %1864 = vmatpush1.msra.mxu0 0.0
    %1865 = vmatprep.mubr.f32.mxu0 0.0
    %1866 = vmatmul.mubr.f32.gmra.mrb[0].mxu0 %v1799
    %v1867 = vpop.f32.mrb[0].mxu0
    %v1868 = vadd.f32 0.0, %v1867
    %v1869 = vpop.f32.mrb[0].mxu0
    %1870 = vdwg.mxu0
    %v1872 = vsel %vm229, %v1795, 0
    %1874 = vmatprep.subr.mxu0 0.0
    %1875 = vmatpush1.msra.mxu0 %v212
    %1876 = vmatprep.subr.mxu0 0.0
    %1877 = vmatpush1.msra.mxu0 %v213
    %1878 = vmatprep.subr.mxu0 0.0
    %1879 = vmatpush1.msra.mxu0 %v214
    %1880 = vmatprep.subr.mxu0 0.0
    %1881 = vmatpush1.msra.mxu0 %v215
    %1882 = vmatprep.subr.mxu0 0.0
    %1883 = vmatpush1.msra.mxu0 0.0
    %1884 = vmatprep.subr.mxu0 0.0
    %1885 = vmatpush1.msra.mxu0 0.0
    %1886 = vmatprep.subr.mxu0 0.0
    %1887 = vmatpush1.msra.mxu0 0.0
    %1888 = vmatprep.subr.mxu0 0.0
    %1889 = vmatpush1.msra.mxu0 0.0
    %1890 = vmatprep.subr.mxu0 0.0
    %1891 = vmatpush1.msra.mxu0 0.0
    %1892 = vmatprep.subr.mxu0 0.0
    %1893 = vmatpush1.msra.mxu0 0.0
    %1894 = vmatprep.subr.mxu0 0.0
    %1895 = vmatpush1.msra.mxu0 0.0
    %1896 = vmatprep.subr.mxu0 0.0
    %1897 = vmatpush1.msra.mxu0 0.0
    %1898 = vmatprep.subr.mxu0 0.0
    %1899 = vmatpush1.msra.mxu0 0.0
    %1900 = vmatprep.subr.mxu0 0.0
    %1901 = vmatpush1.msra.mxu0 0.0
    %1902 = vmatprep.subr.mxu0 0.0
    %1903 = vmatpush1.msra.mxu0 0.0
    %1904 = vmatprep.subr.mxu0 0.0
    %1905 = vmatpush1.msra.mxu0 0.0
    %1906 = vmatprep.subr.mxu0 0.0
    %1907 = vmatpush1.msra.mxu0 0.0
    %1908 = vmatprep.subr.mxu0 0.0
    %1909 = vmatpush1.msra.mxu0 0.0
    %1910 = vmatprep.subr.mxu0 0.0
    %1911 = vmatpush1.msra.mxu0 0.0
    %1912 = vmatprep.subr.mxu0 0.0
    %1913 = vmatpush1.msra.mxu0 0.0
    %1914 = vmatprep.subr.mxu0 0.0
    %1915 = vmatpush1.msra.mxu0 0.0
    %1916 = vmatprep.subr.mxu0 0.0
    %1917 = vmatpush1.msra.mxu0 0.0
    %1918 = vmatprep.subr.mxu0 0.0
    %1919 = vmatpush1.msra.mxu0 0.0
    %1920 = vmatprep.subr.mxu0 0.0
    %1921 = vmatpush1.msra.mxu0 0.0
    %1922 = vmatprep.subr.mxu0 0.0
    %1923 = vmatpush1.msra.mxu0 0.0
    %1924 = vmatprep.subr.mxu0 0.0
    %1925 = vmatpush1.msra.mxu0 0.0
    %1926 = vmatprep.subr.mxu0 0.0
    %1927 = vmatpush1.msra.mxu0 0.0
    %1928 = vmatprep.subr.mxu0 0.0
    %1929 = vmatpush1.msra.mxu0 0.0
    %1930 = vmatprep.subr.mxu0 0.0
    %1931 = vmatpush1.msra.mxu0 0.0
    %1932 = vmatprep.subr.mxu0 0.0
    %1933 = vmatpush1.msra.mxu0 0.0
    %1934 = vmatprep.subr.mxu0 0.0
    %1935 = vmatpush1.msra.mxu0 0.0
    %1936 = vmatprep.subr.mxu0 0.0
    %1937 = vmatpush1.msra.mxu0 0.0
    %1938 = vmatprep.mubr.f32.mxu0 0.0
    %1939 = vmatmul.mubr.f32.gmra.mrb[0].mxu0 %v1872
    %v1940 = vpop.f32.mrb[0].mxu0
    %v1941 = vadd.f32 0.0, %v1940
    %v1942 = vpop.f32.mrb[0].mxu0
    %1943 = vdwg.mxu0
    %v1944 = vrot.slane %v205, 7
    %v1946 = vsel %vm376, %v131, %v1944
    %v1947 = vadd.f32 %v389, %v1868
    %v1948 = vxor.u32 %v1947, 2147483648
    %v1949 = vmul.f32 %v1948, 1.442695
    %v1950 = vpow.pop %v1949
    %v1951 = vadd.f32 %v1950, 1.0
    %v1952 = vrcp.pop %v1951
    %v1953 = vmul.f32 1.0, %v1952
    %v1954 = vadd.f32 %v1868, %v399
    %1956 = vrot.lane.b32.xlu0 %v1954, 64
    %v1957 = vpop.permute.xlu0 %1956
    %v1959 = vmul.f32 %v1953, %v1957
    %1961 = vrot.lane.b32.xlu0 %v1959, 64
    %v1962 = vpop.permute.xlu0 %1961
    %v1964 = vadd.f32 %v389, %v1962
    %v1965 = vtanh.pop %v1964
    %v1966 = vsub.f32 1.0, %v1953
    %1968 = vrot.lane.b32.xlu0 %v1965, 96
    %v1969 = vpop.permute.xlu0 %1968
    %v1971 = vmul.f32 %v1966, %v1969
    %v1972 = vmul.f32 %v1953, %v1757
    %v1973 = vadd.f32 %v1971, %v1972
    %1975 = vrot.lane.b32.xlu0 %v1941, 96
    %v1976 = vpop.permute.xlu0 %1975
    %v1978 = vadd.f32 %v377, %v1976
    %v1979 = vxor.u32 %v1978, 2147483648
    %v1980 = vmul.f32 %v1979, 1.442695
    %v1981 = vpow.pop %v1980
    %v1982 = vadd.f32 %v1981, 1.0
    %v1983 = vrcp.pop %v1982
    %v1984 = vmul.f32 1.0, %v1983
    %v1985 = vadd.f32 %v1946, %v1976
    %v1986 = vxor.u32 %v1985, 2147483648
    %v1987 = vmul.f32 %v1986, 1.442695
    %v1988 = vpow.pop %v1987
    %v1989 = vadd.f32 %v1988, 1.0
    %v1990 = vrcp.pop %v1989
    %v1991 = vmul.f32 1.0, %v1990
    %v1992 = vadd.f32 %v1941, %v440
    %1994 = vrot.lane.b32.xlu0 %v1992, 32
    %v1995 = vpop.permute.xlu0 %1994
    %v1997 = vmul.f32 %v1984, %v1995
    %1999 = vrot.lane.b32.xlu0 %v1997, 64
    %v2000 = vpop.permute.xlu0 %1999
    %v2002 = vadd.f32 %v1946, %v2000
    %v2003 = vtanh.pop %v2002
    %v2004 = vsub.f32 1.0, %v1991
    %2006 = vrot.lane.b32.xlu0 %v2003, 96
    %v2007 = vpop.permute.xlu0 %2006
    %v2009 = vmul.f32 %v2004, %v2007
    %v2010 = vmul.f32 %v1991, %v1795
    %v2011 = vadd.f32 %v2009, %v2010
    %2014 = vrot.lane.b32.xlu0 %v2011, 32
    %v2015 = vpop.permute.xlu0 %2014
    %v2017 = vsel %vm229, %v464, %v2015
    %2019 = vrot.lane.b32.xlu0 %v1795, 32
    %v2020 = vpop.permute.xlu0 %2019
    %v2022 = vsel %vm229, %v690, %v2020
    %2024 = vrot.lane.b32.xlu0 %v1579, 32
    %v2025 = vpop.permute.xlu0 %2024
    %v2027 = vsel %vm229, %v918, %v2025
    %2029 = vrot.lane.b32.xlu0 %v1361, 32
    %v2030 = vpop.permute.xlu0 %2029
    %v2032 = vsel %vm229, %v1146, %v2030
    %2034 = vrot.lane.b32.xlu0 %v1143, 32
    %v2035 = vpop.permute.xlu0 %2034
    %v2037 = vsel %vm229, %v1364, %v2035
    %2039 = vrot.lane.b32.xlu0 %v915, 32
    %v2040 = vpop.permute.xlu0 %2039
    %v2042 = vsel %vm229, %v1582, %v2040
    %2044 = vrot.lane.b32.xlu0 %v687, 32
    %v2045 = vpop.permute.xlu0 %2044
    %v2047 = vsel %vm229, %v1798, %v2045
    %2049 = vrot.lane.b32.xlu0 %v1973, 96
    %v2050 = vpop.permute.xlu0 %2049
    %2052 = vrot.lane.b32.xlu0 %v461, 32
    %v2053 = vpop.permute.xlu0 %2052
    %v2055 = vsel %vm229, %v2050, %v2053
    %v2057 = vrot.slane %v2022, 7
    %v2060 = vrot.slane %v2027, 6
    %v2063 = vrot.slane %v2032, 5
    %v2066 = vrot.slane %v2037, 4
    %v2069 = vrot.slane %v2042, 3
    %v2072 = vrot.slane %v2047, 2
    %v2075 = vrot.slane %v2055, 1
    %v2077 = vsel %vm376, %v2017, %v2057
    %vm2078 = vcmask 1041408
    %v2079 = vsel %vm2078, %v2077, %v2060
    %vm2080 = vcmask 1042432
    %v2081 = vsel %vm2080, %v2079, %v2063
    %vm2082 = vcmask 1043456
    %v2083 = vsel %vm2082, %v2081, %v2066
    %vm2084 = vcmask 1044480
    %v2085 = vsel %vm2084, %v2083, %v2069
    %vm2086 = vcmask 1045504
    %v2087 = vsel %vm2086, %v2085, %v2072
    %vm2088 = vcmask 1046528
    %v2089 = vsel %vm2088, %v2087, %v2075
    %v2091 = vrot.slane %v2017, 1
    %v2093 = vrot.slane %v2027, 7
    %v2095 = vrot.slane %v2032, 6
    %v2097 = vrot.slane %v2037, 5
    %v2099 = vrot.slane %v2042, 4
    %v2101 = vrot.slane %v2047, 3
    %v2103 = vrot.slane %v2055, 2
    %v2105 = vsel %vm376, %v2091, %v2022
    %v2106 = vsel %vm2078, %v2105, %v2093
    %v2107 = vsel %vm2080, %v2106, %v2095
    %v2108 = vsel %vm2082, %v2107, %v2097
    %v2109 = vsel %vm2084, %v2108, %v2099
    %v2110 = vsel %vm2086, %v2109, %v2101
    %v2111 = vsel %vm2088, %v2110, %v2103
    %s2112 = scalar_lea.vmem %s1, 128
    %v2113 = vld [vmem:[%s2112] sm:$0xff]
    %v2114 = vld [vmem:[%s2112 + $0x8] sm:$0xff]
    %v2115 = vld [vmem:[%s2112 + $0x10] sm:$0xff]
    %v2116 = vld [vmem:[%s2112 + $0x18] sm:$0xff]
    %v2117 = vld [vmem:[%s2112 + $0x20] sm:$0xff]
    %v2118 = vld [vmem:[%s2112 + $0x28] sm:$0xff]
    %v2119 = vld [vmem:[%s2112 + $0x30] sm:$0xff]
    %v2120 = vld [vmem:[%s2112 + $0x38] sm:$0xff]
    %v2121 = vld [vmem:[%s2112 + $0x40] sm:$0xff]
    %v2122 = vld [vmem:[%s2112 + $0x48] sm:$0xff]
    %v2123 = vld [vmem:[%s2112 + $0x50] sm:$0xff]
    %v2124 = vld [vmem:[%s2112 + $0x58] sm:$0xff]
    %v2125 = vld [vmem:[%s2112 + $0x60] sm:$0xff]
    %v2126 = vld [vmem:[%s2112 + $0x68] sm:$0xff]
    %v2127 = vld [vmem:[%s2112 + $0x70] sm:$0xff]
    %v2128 = vld [vmem:[%s2112 + $0x78] sm:$0xff]
    %s2129 = scalar_lea.vmem %s2, 2
    %v2130 = vld [vmem:[%s2129] sm:$0x3]
    %v2132 = vlaneseq
    %v2133 = vshrl.u32 %v2132, 7
    %v2134 = vsub.s32 0, %v2133
    %v2135 = vrot.slane %v2130, %v2134
    %v2136 = vlaneseq
    %v2137 = vshrl.u32 %v2136, 7
    %v2138 = vsub.s32 1, %v2137
    %v2139 = vrot.slane %v2130, %v2138
    %v2143 = vsel %vm58, %v2089, 0
    %2145 = vmatprep.subr.mxu0 %v2114
    %2146 = vmatpush1.msra.mxu0 %v2113
    %2147 = vmatprep.subr.mxu0 %v2116
    %2148 = vmatpush1.msra.mxu0 %v2115
    %2149 = vmatprep.subr.mxu0 %v2118
    %2150 = vmatpush1.msra.mxu0 %v2117
    %2151 = vmatprep.subr.mxu0 %v2120
    %2152 = vmatpush1.msra.mxu0 %v2119
    %2153 = vmatprep.subr.mxu0 %v2122
    %2154 = vmatpush1.msra.mxu0 %v2121
    %2155 = vmatprep.subr.mxu0 %v2124
    %2156 = vmatpush1.msra.mxu0 %v2123
    %2157 = vmatprep.subr.mxu0 %v2126
    %2158 = vmatpush1.msra.mxu0 %v2125
    %2159 = vmatprep.subr.mxu0 %v2128
    %2160 = vmatpush1.msra.mxu0 %v2127
    %2161 = vmatprep.subr.mxu0 0.0
    %2162 = vmatpush1.msra.mxu0 0.0
    %2163 = vmatprep.subr.mxu0 0.0
    %2164 = vmatpush1.msra.mxu0 0.0
    %2165 = vmatprep.subr.mxu0 0.0
    %2166 = vmatpush1.msra.mxu0 0.0
    %2167 = vmatprep.subr.mxu0 0.0
    %2168 = vmatpush1.msra.mxu0 0.0
    %2169 = vmatprep.subr.mxu0 0.0
    %2170 = vmatpush1.msra.mxu0 0.0
    %2171 = vmatprep.subr.mxu0 0.0
    %2172 = vmatpush1.msra.mxu0 0.0
    %2173 = vmatprep.subr.mxu0 0.0
    %2174 = vmatpush1.msra.mxu0 0.0
    %2175 = vmatprep.subr.mxu0 0.0
    %2176 = vmatpush1.msra.mxu0 0.0
    %2177 = vmatprep.subr.mxu0 0.0
    %2178 = vmatpush1.msra.mxu0 0.0
    %2179 = vmatprep.subr.mxu0 0.0
    %2180 = vmatpush1.msra.mxu0 0.0
    %2181 = vmatprep.subr.mxu0 0.0
    %2182 = vmatpush1.msra.mxu0 0.0
    %2183 = vmatprep.subr.mxu0 0.0
    %2184 = vmatpush1.msra.mxu0 0.0
    %2185 = vmatprep.subr.mxu0 0.0
    %2186 = vmatpush1.msra.mxu0 0.0
    %2187 = vmatprep.subr.mxu0 0.0
    %2188 = vmatpush1.msra.mxu0 0.0
    %2189 = vmatprep.subr.mxu0 0.0
    %2190 = vmatpush1.msra.mxu0 0.0
    %2191 = vmatprep.subr.mxu0 0.0
    %2192 = vmatpush1.msra.mxu0 0.0
    %2193 = vmatprep.subr.mxu0 0.0
    %2194 = vmatpush1.msra.mxu0 0.0
    %2195 = vmatprep.subr.mxu0 0.0
    %2196 = vmatpush1.msra.mxu0 0.0
    %2197 = vmatprep.subr.mxu0 0.0
    %2198 = vmatpush1.msra.mxu0 0.0
    %2199 = vmatprep.subr.mxu0 0.0
    %2200 = vmatpush1.msra.mxu0 0.0
    %2201 = vmatprep.subr.mxu0 0.0
    %2202 = vmatpush1.msra.mxu0 0.0
    %2203 = vmatprep.subr.mxu0 0.0
    %2204 = vmatpush1.msra.mxu0 0.0
    %2205 = vmatprep.subr.mxu0 0.0
    %2206 = vmatpush1.msra.mxu0 0.0
    %2207 = vmatprep.subr.mxu0 0.0
    %2208 = vmatpush1.msra.mxu0 0.0
    %2209 = vmatprep.mubr.f32.mxu0 0.0
    %2210 = vmatmul.mubr.f32.gmra.mrb[0].mxu0 %v2143
    %v2211 = vpop.f32.mrb[0].mxu0
    %v2212 = vadd.f32 %v2135, %v2211
    %v2213 = vpop.f32.mrb[0].mxu0
    %v2214 = vadd.f32 %v2139, %v2213
    %2215 = vdwg.mxu0
    %v2217 = vsel %vm58, %v2111, 0
    %2219 = vmatprep.subr.mxu0 %v2114
    %2220 = vmatpush1.msra.mxu0 %v2113
    %2221 = vmatprep.subr.mxu0 %v2116
    %2222 = vmatpush1.msra.mxu0 %v2115
    %2223 = vmatprep.subr.mxu0 %v2118
    %2224 = vmatpush1.msra.mxu0 %v2117
    %2225 = vmatprep.subr.mxu0 %v2120
    %2226 = vmatpush1.msra.mxu0 %v2119
    %2227 = vmatprep.subr.mxu0 %v2122
    %2228 = vmatpush1.msra.mxu0 %v2121
    %2229 = vmatprep.subr.mxu0 %v2124
    %2230 = vmatpush1.msra.mxu0 %v2123
    %2231 = vmatprep.subr.mxu0 %v2126
    %2232 = vmatpush1.msra.mxu0 %v2125
    %2233 = vmatprep.subr.mxu0 %v2128
    %2234 = vmatpush1.msra.mxu0 %v2127
    %2235 = vmatprep.subr.mxu0 0.0
    %2236 = vmatpush1.msra.mxu0 0.0
    %2237 = vmatprep.subr.mxu0 0.0
    %2238 = vmatpush1.msra.mxu0 0.0
    %2239 = vmatprep.subr.mxu0 0.0
    %2240 = vmatpush1.msra.mxu0 0.0
    %2241 = vmatprep.subr.mxu0 0.0
    %2242 = vmatpush1.msra.mxu0 0.0
    %2243 = vmatprep.subr.mxu0 0.0
    %2244 = vmatpush1.msra.mxu0 0.0
    %2245 = vmatprep.subr.mxu0 0.0
    %2246 = vmatpush1.msra.mxu0 0.0
    %2247 = vmatprep.subr.mxu0 0.0
    %2248 = vmatpush1.msra.mxu0 0.0
    %2249 = vmatprep.subr.mxu0 0.0
    %2250 = vmatpush1.msra.mxu0 0.0
    %2251 = vmatprep.subr.mxu0 0.0
    %2252 = vmatpush1.msra.mxu0 0.0
    %2253 = vmatprep.subr.mxu0 0.0
    %2254 = vmatpush1.msra.mxu0 0.0
    %2255 = vmatprep.subr.mxu0 0.0
    %2256 = vmatpush1.msra.mxu0 0.0
    %2257 = vmatprep.subr.mxu0 0.0
    %2258 = vmatpush1.msra.mxu0 0.0
    %2259 = vmatprep.subr.mxu0 0.0
    %2260 = vmatpush1.msra.mxu0 0.0
    %2261 = vmatprep.subr.mxu0 0.0
    %2262 = vmatpush1.msra.mxu0 0.0
    %2263 = vmatprep.subr.mxu0 0.0
    %2264 = vmatpush1.msra.mxu0 0.0
    %2265 = vmatprep.subr.mxu0 0.0
    %2266 = vmatpush1.msra.mxu0 0.0
    %2267 = vmatprep.subr.mxu0 0.0
    %2268 = vmatpush1.msra.mxu0 0.0
    %2269 = vmatprep.subr.mxu0 0.0
    %2270 = vmatpush1.msra.mxu0 0.0
    %2271 = vmatprep.subr.mxu0 0.0
    %2272 = vmatpush1.msra.mxu0 0.0
    %2273 = vmatprep.subr.mxu0 0.0
    %2274 = vmatpush1.msra.mxu0 0.0
    %2275 = vmatprep.subr.mxu0 0.0
    %2276 = vmatpush1.msra.mxu0 0.0
    %2277 = vmatprep.subr.mxu0 0.0
    %2278 = vmatpush1.msra.mxu0 0.0
    %2279 = vmatprep.subr.mxu0 0.0
    %2280 = vmatpush1.msra.mxu0 0.0
    %2281 = vmatprep.subr.mxu0 0.0
    %2282 = vmatpush1.msra.mxu0 0.0
    %2283 = vmatprep.mubr.f32.mxu0 0.0
    %2284 = vmatmul.mubr.f32.gmra.mrb[0].mxu0 %v2217
    %v2285 = vpop.f32.mrb[0].mxu0
    %v2286 = vadd.f32 %v2135, %v2285
    %v2287 = vpop.f32.mrb[0].mxu0
    %v2288 = vadd.f32 %v2139, %v2287
    %2289 = vdwg.mxu0
    %s2290 = scalar_lea.vmem %s3, 64
    %v2291 = vld [vmem:[%s2290] sm:$0xff]
    %v2292 = vld [vmem:[%s2290 + $0x8] sm:$0xff]
    %v2293 = vld [vmem:[%s2290 + $0x10] sm:$0xff]
    %v2294 = vld [vmem:[%s2290 + $0x18] sm:$0xff]
    %s2295 = scalar_lea.vmem %s3, 96
    %v2296 = vld [vmem:[%s2295] sm:$0xff]
    %v2297 = vld [vmem:[%s2295 + $0x8] sm:$0xff]
    %v2298 = vld [vmem:[%s2295 + $0x10] sm:$0xff]
    %v2299 = vld [vmem:[%s2295 + $0x18] sm:$0xff]
    %s2300 = scalar_lea.vmem %s4, 2
    %v2301 = vld [vmem:[%s2300] sm:$0x1]
    %v2303 = vlaneseq
    %v2304 = vshrl.u32 %v2303, 7
    %v2305 = vsub.s32 0, %v2304
    %v2306 = vrot.slane %v2301, %v2305
    %s2307 = scalar_lea.vmem %s4, 3
    %v2308 = vld [vmem:[%s2307] sm:$0x1]
    %v2310 = vlaneseq
    %v2311 = vshrl.u32 %v2310, 7
    %v2312 = vsub.s32 0, %v2311
    %v2313 = vrot.slane %v2308, %v2312
    %2314 = vmatprep.subr.mxu0 0.0
    %2315 = vmatpush1.msra.mxu0 %v2291
    %2316 = vmatprep.subr.mxu0 0.0
    %2317 = vmatpush1.msra.mxu0 %v2292
    %2318 = vmatprep.subr.mxu0 0.0
    %2319 = vmatpush1.msra.mxu0 %v2293
    %2320 = vmatprep.subr.mxu0 0.0
    %2321 = vmatpush1.msra.mxu0 %v2294
    %2322 = vmatprep.subr.mxu0 0.0
    %2323 = vmatpush1.msra.mxu0 0.0
    %2324 = vmatprep.subr.mxu0 0.0
    %2325 = vmatpush1.msra.mxu0 0.0
    %2326 = vmatprep.subr.mxu0 0.0
    %2327 = vmatpush1.msra.mxu0 0.0
    %2328 = vmatprep.subr.mxu0 0.0
    %2329 = vmatpush1.msra.mxu0 0.0
    %2330 = vmatprep.subr.mxu0 0.0
    %2331 = vmatpush1.msra.mxu0 0.0
    %2332 = vmatprep.subr.mxu0 0.0
    %2333 = vmatpush1.msra.mxu0 0.0
    %2334 = vmatprep.subr.mxu0 0.0
    %2335 = vmatpush1.msra.mxu0 0.0
    %2336 = vmatprep.subr.mxu0 0.0
    %2337 = vmatpush1.msra.mxu0 0.0
    %2338 = vmatprep.subr.mxu0 0.0
    %2339 = vmatpush1.msra.mxu0 0.0
    %2340 = vmatprep.subr.mxu0 0.0
    %2341 = vmatpush1.msra.mxu0 0.0
    %2342 = vmatprep.subr.mxu0 0.0
    %2343 = vmatpush1.msra.mxu0 0.0
    %2344 = vmatprep.subr.mxu0 0.0
    %2345 = vmatpush1.msra.mxu0 0.0
    %2346 = vmatprep.subr.mxu0 0.0
    %2347 = vmatpush1.msra.mxu0 0.0
    %2348 = vmatprep.subr.mxu0 0.0
    %2349 = vmatpush1.msra.mxu0 0.0
    %2350 = vmatprep.subr.mxu0 0.0
    %2351 = vmatpush1.msra.mxu0 0.0
    %2352 = vmatprep.subr.mxu0 0.0
    %2353 = vmatpush1.msra.mxu0 0.0
    %2354 = vmatprep.subr.mxu0 0.0
    %2355 = vmatpush1.msra.mxu0 0.0
    %2356 = vmatprep.subr.mxu0 0.0
    %2357 = vmatpush1.msra.mxu0 0.0
    %2358 = vmatprep.subr.mxu0 0.0
    %2359 = vmatpush1.msra.mxu0 0.0
    %2360 = vmatprep.subr.mxu0 0.0
    %2361 = vmatpush1.msra.mxu0 0.0
    %2362 = vmatprep.subr.mxu0 0.0
    %2363 = vmatpush1.msra.mxu0 0.0
    %2364 = vmatprep.subr.mxu0 0.0
    %2365 = vmatpush1.msra.mxu0 0.0
    %2366 = vmatprep.subr.mxu0 0.0
    %2367 = vmatpush1.msra.mxu0 0.0
    %2368 = vmatprep.subr.mxu0 0.0
    %2369 = vmatpush1.msra.mxu0 0.0
    %2370 = vmatprep.subr.mxu0 0.0
    %2371 = vmatpush1.msra.mxu0 0.0
    %2372 = vmatprep.subr.mxu0 0.0
    %2373 = vmatpush1.msra.mxu0 0.0
    %2374 = vmatprep.subr.mxu0 0.0
    %2375 = vmatpush1.msra.mxu0 0.0
    %2376 = vmatprep.subr.mxu0 0.0
    %2377 = vmatpush1.msra.mxu0 0.0
    %2378 = vmatprep.mubr.f32.mxu0 0.0
    %2379 = vmatmul.mubr.f32.gmra.mrb[0].mxu0 %v231
    %v2380 = vpop.f32.mrb[0].mxu0
    %v2381 = vadd.f32 0.0, %v2380
    %v2382 = vpop.f32.mrb[0].mxu0
    %2383 = vdwg.mxu0
    %2384 = vmatprep.subr.mxu0 0.0
    %2385 = vmatpush1.msra.mxu0 %v2296
    %2386 = vmatprep.subr.mxu0 0.0
    %2387 = vmatpush1.msra.mxu0 %v2297
    %2388 = vmatprep.subr.mxu0 0.0
    %2389 = vmatpush1.msra.mxu0 %v2298
    %2390 = vmatprep.subr.mxu0 0.0
    %2391 = vmatpush1.msra.mxu0 %v2299
    %2392 = vmatprep.subr.mxu0 0.0
    %2393 = vmatpush1.msra.mxu0 0.0
    %2394 = vmatprep.subr.mxu0 0.0
    %2395 = vmatpush1.msra.mxu0 0.0
    %2396 = vmatprep.subr.mxu0 0.0
    %2397 = vmatpush1.msra.mxu0 0.0
    %2398 = vmatprep.subr.mxu0 0.0
    %2399 = vmatpush1.msra.mxu0 0.0
    %2400 = vmatprep.subr.mxu0 0.0
    %2401 = vmatpush1.msra.mxu0 0.0
    %2402 = vmatprep.subr.mxu0 0.0
    %2403 = vmatpush1.msra.mxu0 0.0
    %2404 = vmatprep.subr.mxu0 0.0
    %2405 = vmatpush1.msra.mxu0 0.0
    %2406 = vmatprep.subr.mxu0 0.0
    %2407 = vmatpush1.msra.mxu0 0.0
    %2408 = vmatprep.subr.mxu0 0.0
    %2409 = vmatpush1.msra.mxu0 0.0
    %2410 = vmatprep.subr.mxu0 0.0
    %2411 = vmatpush1.msra.mxu0 0.0
    %2412 = vmatprep.subr.mxu0 0.0
    %2413 = vmatpush1.msra.mxu0 0.0
    %2414 = vmatprep.subr.mxu0 0.0
    %2415 = vmatpush1.msra.mxu0 0.0
    %2416 = vmatprep.subr.mxu0 0.0
    %2417 = vmatpush1.msra.mxu0 0.0
    %2418 = vmatprep.subr.mxu0 0.0
    %2419 = vmatpush1.msra.mxu0 0.0
    %2420 = vmatprep.subr.mxu0 0.0
    %2421 = vmatpush1.msra.mxu0 0.0
    %2422 = vmatprep.subr.mxu0 0.0
    %2423 = vmatpush1.msra.mxu0 0.0
    %2424 = vmatprep.subr.mxu0 0.0
    %2425 = vmatpush1.msra.mxu0 0.0
    %2426 = vmatprep.subr.mxu0 0.0
    %2427 = vmatpush1.msra.mxu0 0.0
    %2428 = vmatprep.subr.mxu0 0.0
    %2429 = vmatpush1.msra.mxu0 0.0
    %2430 = vmatprep.subr.mxu0 0.0
    %2431 = vmatpush1.msra.mxu0 0.0
    %2432 = vmatprep.subr.mxu0 0.0
    %2433 = vmatpush1.msra.mxu0 0.0
    %2434 = vmatprep.subr.mxu0 0.0
    %2435 = vmatpush1.msra.mxu0 0.0
    %2436 = vmatprep.subr.mxu0 0.0
    %2437 = vmatpush1.msra.mxu0 0.0
    %2438 = vmatprep.subr.mxu0 0.0
    %2439 = vmatpush1.msra.mxu0 0.0
    %2440 = vmatprep.subr.mxu0 0.0
    %2441 = vmatpush1.msra.mxu0 0.0
    %2442 = vmatprep.subr.mxu0 0.0
    %2443 = vmatpush1.msra.mxu0 0.0
    %2444 = vmatprep.subr.mxu0 0.0
    %2445 = vmatpush1.msra.mxu0 0.0
    %2446 = vmatprep.subr.mxu0 0.0
    %2447 = vmatpush1.msra.mxu0 0.0
    %2448 = vmatprep.mubr.f32.mxu0 0.0
    %2449 = vmatmul.mubr.f32.gmra.mrb[0].mxu0 %v231
    %v2450 = vpop.f32.mrb[0].mxu0
    %v2451 = vadd.f32 0.0, %v2450
    %v2452 = vpop.f32.mrb[0].mxu0
    %2453 = vdwg.mxu0
    %v2455 = vrot.slane %v2286, 7
    %v2457 = vsel %vm376, %v2212, %v2455
    %v2460 = vrot.slane %v2212, 7
    %v2461 = vrot.slane %v2214, 7
    %v2465 = vrot.slane %v2286, 6
    %v2466 = vrot.slane %v2288, 6
    %v2469 = vsel %vm376, %v2460, %v2465
    %v2470 = vsel %vm376, %v2461, %v2466
    %v2471 = vadd.f32 %v2457, %v2381
    %v2472 = vxor.u32 %v2471, 2147483648
    %v2473 = vmul.f32 %v2472, 1.442695
    %v2474 = vpow.pop %v2473
    %v2475 = vadd.f32 %v2474, 1.0
    %v2476 = vrcp.pop %v2475
    %v2477 = vmul.f32 1.0, %v2476
    %2478 = vrot.lane.b32.xlu0 %v2306, 64
    %v2479 = vpop.permute.xlu0 %2478
    %v2481 = vadd.f32 %v2381, %v2479
    %2483 = vrot.lane.b32.xlu0 %v2481, 64
    %v2484 = vpop.permute.xlu0 %2483
    %v2486 = vmul.f32 %v2477, %v2484
    %2488 = vrot.lane.b32.xlu0 %v2486, 64
    %v2489 = vpop.permute.xlu0 %2488
    %v2491 = vadd.f32 %v2457, %v2489
    %v2492 = vtanh.pop %v2491
    %v2493 = vsub.f32 1.0, %v2477
    %2495 = vrot.lane.b32.xlu0 %v2492, 96
    %v2496 = vpop.permute.xlu0 %2495
    %v2498 = vmul.f32 %v2493, %v2496
    %v2499 = vmul.f32 %v2477, 0.0
    %v2500 = vadd.f32 %v2498, %v2499
    %2502 = vrot.lane.b32.xlu0 %v2451, 96
    %v2503 = vpop.permute.xlu0 %2502
    %v2505 = vadd.f32 %v2469, %v2503
    %v2506 = vxor.u32 %v2505, 2147483648
    %v2507 = vmul.f32 %v2506, 1.442695
    %v2508 = vpow.pop %v2507
    %v2509 = vadd.f32 %v2508, 1.0
    %v2510 = vrcp.pop %v2509
    %v2511 = vmul.f32 1.0, %v2510
    %v2512 = vadd.f32 %v2470, %v2503
    %v2513 = vxor.u32 %v2512, 2147483648
    %v2514 = vmul.f32 %v2513, 1.442695
    %v2515 = vpow.pop %v2514
    %v2516 = vadd.f32 %v2515, 1.0
    %v2517 = vrcp.pop %v2516
    %v2518 = vmul.f32 1.0, %v2517
    %2519 = vrot.lane.b32.xlu0 %v2313, 64
    %v2520 = vpop.permute.xlu0 %2519
    %v2522 = vadd.f32 %v2451, %v2520
    %2524 = vrot.lane.b32.xlu0 %v2522, 32
    %v2525 = vpop.permute.xlu0 %2524
    %v2527 = vmul.f32 %v2511, %v2525
    %2529 = vrot.lane.b32.xlu0 %v2527, 64
    %v2530 = vpop.permute.xlu0 %2529
    %v2532 = vadd.f32 %v2470, %v2530
    %v2533 = vtanh.pop %v2532
    %v2534 = vsub.f32 1.0, %v2518
    %2536 = vrot.lane.b32.xlu0 %v2533, 96
    %v2537 = vpop.permute.xlu0 %2536
    %v2539 = vmul.f32 %v2534, %v2537
    %v2540 = vmul.f32 %v2518, 0.0
    %v2541 = vadd.f32 %v2539, %v2540
    %2543 = vrot.lane.b32.xlu0 %v2500, 96
    %v2544 = vpop.permute.xlu0 %2543
    %v2545 = vsel %vm229, %v2544, 0
    %2547 = vmatprep.subr.mxu0 0.0
    %2548 = vmatpush1.msra.mxu0 %v2291
    %2549 = vmatprep.subr.mxu0 0.0
    %2550 = vmatpush1.msra.mxu0 %v2292
    %2551 = vmatprep.subr.mxu0 0.0
    %2552 = vmatpush1.msra.mxu0 %v2293
    %2553 = vmatprep.subr.mxu0 0.0
    %2554 = vmatpush1.msra.mxu0 %v2294
    %2555 = vmatprep.subr.mxu0 0.0
    %2556 = vmatpush1.msra.mxu0 0.0
    %2557 = vmatprep.subr.mxu0 0.0
    %2558 = vmatpush1.msra.mxu0 0.0
    %2559 = vmatprep.subr.mxu0 0.0
    %2560 = vmatpush1.msra.mxu0 0.0
    %2561 = vmatprep.subr.mxu0 0.0
    %2562 = vmatpush1.msra.mxu0 0.0
    %2563 = vmatprep.subr.mxu0 0.0
    %2564 = vmatpush1.msra.mxu0 0.0
    %2565 = vmatprep.subr.mxu0 0.0
    %2566 = vmatpush1.msra.mxu0 0.0
    %2567 = vmatprep.subr.mxu0 0.0
    %2568 = vmatpush1.msra.mxu0 0.0
    %2569 = vmatprep.subr.mxu0 0.0
    %2570 = vmatpush1.msra.mxu0 0.0
    %2571 = vmatprep.subr.mxu0 0.0
    %2572 = vmatpush1.msra.mxu0 0.0
    %2573 = vmatprep.subr.mxu0 0.0
    %2574 = vmatpush1.msra.mxu0 0.0
    %2575 = vmatprep.subr.mxu0 0.0
    %2576 = vmatpush1.msra.mxu0 0.0
    %2577 = vmatprep.subr.mxu0 0.0
    %2578 = vmatpush1.msra.mxu0 0.0
    %2579 = vmatprep.subr.mxu0 0.0
    %2580 = vmatpush1.msra.mxu0 0.0
    %2581 = vmatprep.subr.mxu0 0.0
    %2582 = vmatpush1.msra.mxu0 0.0
    %2583 = vmatprep.subr.mxu0 0.0
    %2584 = vmatpush1.msra.mxu0 0.0
    %2585 = vmatprep.subr.mxu0 0.0
    %2586 = vmatpush1.msra.mxu0 0.0
    %2587 = vmatprep.subr.mxu0 0.0
    %2588 = vmatpush1.msra.mxu0 0.0
    %2589 = vmatprep.subr.mxu0 0.0
    %2590 = vmatpush1.msra.mxu0 0.0
    %2591 = vmatprep.subr.mxu0 0.0
    %2592 = vmatpush1.msra.mxu0 0.0
    %2593 = vmatprep.subr.mxu0 0.0
    %2594 = vmatpush1.msra.mxu0 0.0
    %2595 = vmatprep.subr.mxu0 0.0
    %2596 = vmatpush1.msra.mxu0 0.0
    %2597 = vmatprep.subr.mxu0 0.0
    %2598 = vmatpush1.msra.mxu0 0.0
    %2599 = vmatprep.subr.mxu0 0.0
    %2600 = vmatpush1.msra.mxu0 0.0
    %2601 = vmatprep.subr.mxu0 0.0
    %2602 = vmatpush1.msra.mxu0 0.0
    %2603 = vmatprep.subr.mxu0 0.0
    %2604 = vmatpush1.msra.mxu0 0.0
    %2605 = vmatprep.subr.mxu0 0.0
    %2606 = vmatpush1.msra.mxu0 0.0
    %2607 = vmatprep.subr.mxu0 0.0
    %2608 = vmatpush1.msra.mxu0 0.0
    %2609 = vmatprep.subr.mxu0 0.0
    %2610 = vmatpush1.msra.mxu0 0.0
    %2611 = vmatprep.mubr.f32.mxu0 0.0
    %2612 = vmatmul.mubr.f32.gmra.mrb[0].mxu0 %v2545
    %v2613 = vpop.f32.mrb[0].mxu0
    %v2614 = vadd.f32 0.0, %v2613
    %v2615 = vpop.f32.mrb[0].mxu0
    %2616 = vdwg.mxu0
    %v2618 = vsel %vm229, %v2541, 0
    %2620 = vmatprep.subr.mxu0 0.0
    %2621 = vmatpush1.msra.mxu0 %v2296
    %2622 = vmatprep.subr.mxu0 0.0
    %2623 = vmatpush1.msra.mxu0 %v2297
    %2624 = vmatprep.subr.mxu0 0.0
    %2625 = vmatpush1.msra.mxu0 %v2298
    %2626 = vmatprep.subr.mxu0 0.0
    %2627 = vmatpush1.msra.mxu0 %v2299
    %2628 = vmatprep.subr.mxu0 0.0
    %2629 = vmatpush1.msra.mxu0 0.0
    %2630 = vmatprep.subr.mxu0 0.0
    %2631 = vmatpush1.msra.mxu0 0.0
    %2632 = vmatprep.subr.mxu0 0.0
    %2633 = vmatpush1.msra.mxu0 0.0
    %2634 = vmatprep.subr.mxu0 0.0
    %2635 = vmatpush1.msra.mxu0 0.0
    %2636 = vmatprep.subr.mxu0 0.0
    %2637 = vmatpush1.msra.mxu0 0.0
    %2638 = vmatprep.subr.mxu0 0.0
    %2639 = vmatpush1.msra.mxu0 0.0
    %2640 = vmatprep.subr.mxu0 0.0
    %2641 = vmatpush1.msra.mxu0 0.0
    %2642 = vmatprep.subr.mxu0 0.0
    %2643 = vmatpush1.msra.mxu0 0.0
    %2644 = vmatprep.subr.mxu0 0.0
    %2645 = vmatpush1.msra.mxu0 0.0
    %2646 = vmatprep.subr.mxu0 0.0
    %2647 = vmatpush1.msra.mxu0 0.0
    %2648 = vmatprep.subr.mxu0 0.0
    %2649 = vmatpush1.msra.mxu0 0.0
    %2650 = vmatprep.subr.mxu0 0.0
    %2651 = vmatpush1.msra.mxu0 0.0
    %2652 = vmatprep.subr.mxu0 0.0
    %2653 = vmatpush1.msra.mxu0 0.0
    %2654 = vmatprep.subr.mxu0 0.0
    %2655 = vmatpush1.msra.mxu0 0.0
    %2656 = vmatprep.subr.mxu0 0.0
    %2657 = vmatpush1.msra.mxu0 0.0
    %2658 = vmatprep.subr.mxu0 0.0
    %2659 = vmatpush1.msra.mxu0 0.0
    %2660 = vmatprep.subr.mxu0 0.0
    %2661 = vmatpush1.msra.mxu0 0.0
    %2662 = vmatprep.subr.mxu0 0.0
    %2663 = vmatpush1.msra.mxu0 0.0
    %2664 = vmatprep.subr.mxu0 0.0
    %2665 = vmatpush1.msra.mxu0 0.0
    %2666 = vmatprep.subr.mxu0 0.0
    %2667 = vmatpush1.msra.mxu0 0.0
    %2668 = vmatprep.subr.mxu0 0.0
    %2669 = vmatpush1.msra.mxu0 0.0
    %2670 = vmatprep.subr.mxu0 0.0
    %2671 = vmatpush1.msra.mxu0 0.0
    %2672 = vmatprep.subr.mxu0 0.0
    %2673 = vmatpush1.msra.mxu0 0.0
    %2674 = vmatprep.subr.mxu0 0.0
    %2675 = vmatpush1.msra.mxu0 0.0
    %2676 = vmatprep.subr.mxu0 0.0
    %2677 = vmatpush1.msra.mxu0 0.0
    %2678 = vmatprep.subr.mxu0 0.0
    %2679 = vmatpush1.msra.mxu0 0.0
    %2680 = vmatprep.subr.mxu0 0.0
    %2681 = vmatpush1.msra.mxu0 0.0
    %2682 = vmatprep.subr.mxu0 0.0
    %2683 = vmatpush1.msra.mxu0 0.0
    %2684 = vmatprep.mubr.f32.mxu0 0.0
    %2685 = vmatmul.mubr.f32.gmra.mrb[0].mxu0 %v2618
    %v2686 = vpop.f32.mrb[0].mxu0
    %v2687 = vadd.f32 0.0, %v2686
    %v2688 = vpop.f32.mrb[0].mxu0
    %2689 = vdwg.mxu0
    %v2690 = vrot.slane %v2212, 1
    %v2692 = vsel %vm376, %v2690, %v2286
    %v2693 = vrot.slane %v2212, 6
    %v2694 = vrot.slane %v2214, 6
    %v2697 = vrot.slane %v2286, 5
    %v2698 = vrot.slane %v2288, 5
    %v2701 = vsel %vm376, %v2693, %v2697
    %v2702 = vsel %vm376, %v2694, %v2698
    %v2703 = vadd.f32 %v2692, %v2614
    %v2704 = vxor.u32 %v2703, 2147483648
    %v2705 = vmul.f32 %v2704, 1.442695
    %v2706 = vpow.pop %v2705
    %v2707 = vadd.f32 %v2706, 1.0
    %v2708 = vrcp.pop %v2707
    %v2709 = vmul.f32 1.0, %v2708
    %v2710 = vadd.f32 %v2614, %v2479
    %2712 = vrot.lane.b32.xlu0 %v2710, 64
    %v2713 = vpop.permute.xlu0 %2712
    %v2715 = vmul.f32 %v2709, %v2713
    %2717 = vrot.lane.b32.xlu0 %v2715, 64
    %v2718 = vpop.permute.xlu0 %2717
    %v2720 = vadd.f32 %v2692, %v2718
    %v2721 = vtanh.pop %v2720
    %v2722 = vsub.f32 1.0, %v2709
    %2724 = vrot.lane.b32.xlu0 %v2721, 96
    %v2725 = vpop.permute.xlu0 %2724
    %v2727 = vmul.f32 %v2722, %v2725
    %v2728 = vmul.f32 %v2709, %v2500
    %v2729 = vadd.f32 %v2727, %v2728
    %2731 = vrot.lane.b32.xlu0 %v2687, 96
    %v2732 = vpop.permute.xlu0 %2731
    %v2734 = vadd.f32 %v2701, %v2732
    %v2735 = vxor.u32 %v2734, 2147483648
    %v2736 = vmul.f32 %v2735, 1.442695
    %v2737 = vpow.pop %v2736
    %v2738 = vadd.f32 %v2737, 1.0
    %v2739 = vrcp.pop %v2738
    %v2740 = vmul.f32 1.0, %v2739
    %v2741 = vadd.f32 %v2702, %v2732
    %v2742 = vxor.u32 %v2741, 2147483648
    %v2743 = vmul.f32 %v2742, 1.442695
    %v2744 = vpow.pop %v2743
    %v2745 = vadd.f32 %v2744, 1.0
    %v2746 = vrcp.pop %v2745
    %v2747 = vmul.f32 1.0, %v2746
    %v2748 = vadd.f32 %v2687, %v2520
    %2750 = vrot.lane.b32.xlu0 %v2748, 32
    %v2751 = vpop.permute.xlu0 %2750
    %v2753 = vmul.f32 %v2740, %v2751
    %2755 = vrot.lane.b32.xlu0 %v2753, 64
    %v2756 = vpop.permute.xlu0 %2755
    %v2758 = vadd.f32 %v2702, %v2756
    %v2759 = vtanh.pop %v2758
    %v2760 = vsub.f32 1.0, %v2747
    %2762 = vrot.lane.b32.xlu0 %v2759, 96
    %v2763 = vpop.permute.xlu0 %2762
    %v2765 = vmul.f32 %v2760, %v2763
    %v2766 = vmul.f32 %v2747, %v2541
    %v2767 = vadd.f32 %v2765, %v2766
    %2769 = vrot.lane.b32.xlu0 %v2729, 96
    %v2770 = vpop.permute.xlu0 %2769
    %v2771 = vsel %vm229, %v2770, 0
    %2773 = vmatprep.subr.mxu0 0.0
    %2774 = vmatpush1.msra.mxu0 %v2291
    %2775 = vmatprep.subr.mxu0 0.0
    %2776 = vmatpush1.msra.mxu0 %v2292
    %2777 = vmatprep.subr.mxu0 0.0
    %2778 = vmatpush1.msra.mxu0 %v2293
    %2779 = vmatprep.subr.mxu0 0.0
    %2780 = vmatpush1.msra.mxu0 %v2294
    %2781 = vmatprep.subr.mxu0 0.0
    %2782 = vmatpush1.msra.mxu0 0.0
    %2783 = vmatprep.subr.mxu0 0.0
    %2784 = vmatpush1.msra.mxu0 0.0
    %2785 = vmatprep.subr.mxu0 0.0
    %2786 = vmatpush1.msra.mxu0 0.0
    %2787 = vmatprep.subr.mxu0 0.0
    %2788 = vmatpush1.msra.mxu0 0.0
    %2789 = vmatprep.subr.mxu0 0.0
    %2790 = vmatpush1.msra.mxu0 0.0
    %2791 = vmatprep.subr.mxu0 0.0
    %2792 = vmatpush1.msra.mxu0 0.0
    %2793 = vmatprep.subr.mxu0 0.0
    %2794 = vmatpush1.msra.mxu0 0.0
    %2795 = vmatprep.subr.mxu0 0.0
    %2796 = vmatpush1.msra.mxu0 0.0
    %2797 = vmatprep.subr.mxu0 0.0
    %2798 = vmatpush1.msra.mxu0 0.0
    %2799 = vmatprep.subr.mxu0 0.0
    %2800 = vmatpush1.msra.mxu0 0.0
    %2801 = vmatprep.subr.mxu0 0.0
    %2802 = vmatpush1.msra.mxu0 0.0
    %2803 = vmatprep.subr.mxu0 0.0
    %2804 = vmatpush1.msra.mxu0 0.0
    %2805 = vmatprep.subr.mxu0 0.0
    %2806 = vmatpush1.msra.mxu0 0.0
    %2807 = vmatprep.subr.mxu0 0.0
    %2808 = vmatpush1.msra.mxu0 0.0
    %2809 = vmatprep.subr.mxu0 0.0
    %2810 = vmatpush1.msra.mxu0 0.0
    %2811 = vmatprep.subr.mxu0 0.0
    %2812 = vmatpush1.msra.mxu0 0.0
    %2813 = vmatprep.subr.mxu0 0.0
    %2814 = vmatpush1.msra.mxu0 0.0
    %2815 = vmatprep.subr.mxu0 0.0
    %2816 = vmatpush1.msra.mxu0 0.0
    %2817 = vmatprep.subr.mxu0 0.0
    %2818 = vmatpush1.msra.mxu0 0.0
    %2819 = vmatprep.subr.mxu0 0.0
    %2820 = vmatpush1.msra.mxu0 0.0
    %2821 = vmatprep.subr.mxu0 0.0
    %2822 = vmatpush1.msra.mxu0 0.0
    %2823 = vmatprep.subr.mxu0 0.0
    %2824 = vmatpush1.msra.mxu0 0.0
    %2825 = vmatprep.subr.mxu0 0.0
    %2826 = vmatpush1.msra.mxu0 0.0
    %2827 = vmatprep.subr.mxu0 0.0
    %2828 = vmatpush1.msra.mxu0 0.0
    %2829 = vmatprep.subr.mxu0 0.0
    %2830 = vmatpush1.msra.mxu0 0.0
    %2831 = vmatprep.subr.mxu0 0.0
    %2832 = vmatpush1.msra.mxu0 0.0
    %2833 = vmatprep.subr.mxu0 0.0
    %2834 = vmatpush1.msra.mxu0 0.0
    %2835 = vmatprep.subr.mxu0 0.0
    %2836 = vmatpush1.msra.mxu0 0.0
    %2837 = vmatprep.mubr.f32.mxu0 0.0
    %2838 = vmatmul.mubr.f32.gmra.mrb[0].mxu0 %v2771
    %v2839 = vpop.f32.mrb[0].mxu0
    %v2840 = vadd.f32 0.0, %v2839
    %v2841 = vpop.f32.mrb[0].mxu0
    %2842 = vdwg.mxu0
    %v2844 = vsel %vm229, %v2767, 0
    %2846 = vmatprep.subr.mxu0 0.0
    %2847 = vmatpush1.msra.mxu0 %v2296
    %2848 = vmatprep.subr.mxu0 0.0
    %2849 = vmatpush1.msra.mxu0 %v2297
    %2850 = vmatprep.subr.mxu0 0.0
    %2851 = vmatpush1.msra.mxu0 %v2298
    %2852 = vmatprep.subr.mxu0 0.0
    %2853 = vmatpush1.msra.mxu0 %v2299
    %2854 = vmatprep.subr.mxu0 0.0
    %2855 = vmatpush1.msra.mxu0 0.0
    %2856 = vmatprep.subr.mxu0 0.0
    %2857 = vmatpush1.msra.mxu0 0.0
    %2858 = vmatprep.subr.mxu0 0.0
    %2859 = vmatpush1.msra.mxu0 0.0
    %2860 = vmatprep.subr.mxu0 0.0
    %2861 = vmatpush1.msra.mxu0 0.0
    %2862 = vmatprep.subr.mxu0 0.0
    %2863 = vmatpush1.msra.mxu0 0.0
    %2864 = vmatprep.subr.mxu0 0.0
    %2865 = vmatpush1.msra.mxu0 0.0
    %2866 = vmatprep.subr.mxu0 0.0
    %2867 = vmatpush1.msra.mxu0 0.0
    %2868 = vmatprep.subr.mxu0 0.0
    %2869 = vmatpush1.msra.mxu0 0.0
    %2870 = vmatprep.subr.mxu0 0.0
    %2871 = vmatpush1.msra.mxu0 0.0
    %2872 = vmatprep.subr.mxu0 0.0
    %2873 = vmatpush1.msra.mxu0 0.0
    %2874 = vmatprep.subr.mxu0 0.0
    %2875 = vmatpush1.msra.mxu0 0.0
    %2876 = vmatprep.subr.mxu0 0.0
    %2877 = vmatpush1.msra.mxu0 0.0
    %2878 = vmatprep.subr.mxu0 0.0
    %2879 = vmatpush1.msra.mxu0 0.0
    %2880 = vmatprep.subr.mxu0 0.0
    %2881 = vmatpush1.msra.mxu0 0.0
    %2882 = vmatprep.subr.mxu0 0.0
    %2883 = vmatpush1.msra.mxu0 0.0
    %2884 = vmatprep.subr.mxu0 0.0
    %2885 = vmatpush1.msra.mxu0 0.0
    %2886 = vmatprep.subr.mxu0 0.0
    %2887 = vmatpush1.msra.mxu0 0.0
    %2888 = vmatprep.subr.mxu0 0.0
    %2889 = vmatpush1.msra.mxu0 0.0
    %2890 = vmatprep.subr.mxu0 0.0
    %2891 = vmatpush1.msra.mxu0 0.0
    %2892 = vmatprep.subr.mxu0 0.0
    %2893 = vmatpush1.msra.mxu0 0.0
    %2894 = vmatprep.subr.mxu0 0.0
    %2895 = vmatpush1.msra.mxu0 0.0
    %2896 = vmatprep.subr.mxu0 0.0
    %2897 = vmatpush1.msra.mxu0 0.0
    %2898 = vmatprep.subr.mxu0 0.0
    %2899 = vmatpush1.msra.mxu0 0.0
    %2900 = vmatprep.subr.mxu0 0.0
    %2901 = vmatpush1.msra.mxu0 0.0
    %2902 = vmatprep.subr.mxu0 0.0
    %2903 = vmatpush1.msra.mxu0 0.0
    %2904 = vmatprep.subr.mxu0 0.0
    %2905 = vmatpush1.msra.mxu0 0.0
    %2906 = vmatprep.subr.mxu0 0.0
    %2907 = vmatpush1.msra.mxu0 0.0
    %2908 = vmatprep.subr.mxu0 0.0
    %2909 = vmatpush1.msra.mxu0 0.0
    %2910 = vmatprep.mubr.f32.mxu0 0.0
    %2911 = vmatmul.mubr.f32.gmra.mrb[0].mxu0 %v2844
    %v2912 = vpop.f32.mrb[0].mxu0
    %v2913 = vadd.f32 0.0, %v2912
    %v2914 = vpop.f32.mrb[0].mxu0
    %2915 = vdwg.mxu0
    %v2916 = vrot.slane %v2212, 2
    %v2918 = vrot.slane %v2286, 1
    %v2920 = vsel %vm376, %v2916, %v2918
    %v2921 = vrot.slane %v2212, 5
    %v2922 = vrot.slane %v2214, 5
    %v2925 = vrot.slane %v2286, 4
    %v2926 = vrot.slane %v2288, 4
    %v2929 = vsel %vm376, %v2921, %v2925
    %v2930 = vsel %vm376, %v2922, %v2926
    %v2931 = vadd.f32 %v2920, %v2840
    %v2932 = vxor.u32 %v2931, 2147483648
    %v2933 = vmul.f32 %v2932, 1.442695
    %v2934 = vpow.pop %v2933
    %v2935 = vadd.f32 %v2934, 1.0
    %v2936 = vrcp.pop %v2935
    %v2937 = vmul.f32 1.0, %v2936
    %v2938 = vadd.f32 %v2840, %v2479
    %2940 = vrot.lane.b32.xlu0 %v2938, 64
    %v2941 = vpop.permute.xlu0 %2940
    %v2943 = vmul.f32 %v2937, %v2941
    %2945 = vrot.lane.b32.xlu0 %v2943, 64
    %v2946 = vpop.permute.xlu0 %2945
    %v2948 = vadd.f32 %v2920, %v2946
    %v2949 = vtanh.pop %v2948
    %v2950 = vsub.f32 1.0, %v2937
    %2952 = vrot.lane.b32.xlu0 %v2949, 96
    %v2953 = vpop.permute.xlu0 %2952
    %v2955 = vmul.f32 %v2950, %v2953
    %v2956 = vmul.f32 %v2937, %v2729
    %v2957 = vadd.f32 %v2955, %v2956
    %2959 = vrot.lane.b32.xlu0 %v2913, 96
    %v2960 = vpop.permute.xlu0 %2959
    %v2962 = vadd.f32 %v2929, %v2960
    %v2963 = vxor.u32 %v2962, 2147483648
    %v2964 = vmul.f32 %v2963, 1.442695
    %v2965 = vpow.pop %v2964
    %v2966 = vadd.f32 %v2965, 1.0
    %v2967 = vrcp.pop %v2966
    %v2968 = vmul.f32 1.0, %v2967
    %v2969 = vadd.f32 %v2930, %v2960
    %v2970 = vxor.u32 %v2969, 2147483648
    %v2971 = vmul.f32 %v2970, 1.442695
    %v2972 = vpow.pop %v2971
    %v2973 = vadd.f32 %v2972, 1.0
    %v2974 = vrcp.pop %v2973
    %v2975 = vmul.f32 1.0, %v2974
    %v2976 = vadd.f32 %v2913, %v2520
    %2978 = vrot.lane.b32.xlu0 %v2976, 32
    %v2979 = vpop.permute.xlu0 %2978
    %v2981 = vmul.f32 %v2968, %v2979
    %2983 = vrot.lane.b32.xlu0 %v2981, 64
    %v2984 = vpop.permute.xlu0 %2983
    %v2986 = vadd.f32 %v2930, %v2984
    %v2987 = vtanh.pop %v2986
    %v2988 = vsub.f32 1.0, %v2975
    %2990 = vrot.lane.b32.xlu0 %v2987, 96
    %v2991 = vpop.permute.xlu0 %2990
    %v2993 = vmul.f32 %v2988, %v2991
    %v2994 = vmul.f32 %v2975, %v2767
    %v2995 = vadd.f32 %v2993, %v2994
    %2997 = vrot.lane.b32.xlu0 %v2957, 96
    %v2998 = vpop.permute.xlu0 %2997
    %v2999 = vsel %vm229, %v2998, 0
    %3001 = vmatprep.subr.mxu0 0.0
    %3002 = vmatpush1.msra.mxu0 %v2291
    %3003 = vmatprep.subr.mxu0 0.0
    %3004 = vmatpush1.msra.mxu0 %v2292
    %3005 = vmatprep.subr.mxu0 0.0
    %3006 = vmatpush1.msra.mxu0 %v2293
    %3007 = vmatprep.subr.mxu0 0.0
    %3008 = vmatpush1.msra.mxu0 %v2294
    %3009 = vmatprep.subr.mxu0 0.0
    %3010 = vmatpush1.msra.mxu0 0.0
    %3011 = vmatprep.subr.mxu0 0.0
    %3012 = vmatpush1.msra.mxu0 0.0
    %3013 = vmatprep.subr.mxu0 0.0
    %3014 = vmatpush1.msra.mxu0 0.0
    %3015 = vmatprep.subr.mxu0 0.0
    %3016 = vmatpush1.msra.mxu0 0.0
    %3017 = vmatprep.subr.mxu0 0.0
    %3018 = vmatpush1.msra.mxu0 0.0
    %3019 = vmatprep.subr.mxu0 0.0
    %3020 = vmatpush1.msra.mxu0 0.0
    %3021 = vmatprep.subr.mxu0 0.0
    %3022 = vmatpush1.msra.mxu0 0.0
    %3023 = vmatprep.subr.mxu0 0.0
    %3024 = vmatpush1.msra.mxu0 0.0
    %3025 = vmatprep.subr.mxu0 0.0
    %3026 = vmatpush1.msra.mxu0 0.0
    %3027 = vmatprep.subr.mxu0 0.0
    %3028 = vmatpush1.msra.mxu0 0.0
    %3029 = vmatprep.subr.mxu0 0.0
    %3030 = vmatpush1.msra.mxu0 0.0
    %3031 = vmatprep.subr.mxu0 0.0
    %3032 = vmatpush1.msra.mxu0 0.0
    %3033 = vmatprep.subr.mxu0 0.0
    %3034 = vmatpush1.msra.mxu0 0.0
    %3035 = vmatprep.subr.mxu0 0.0
    %3036 = vmatpush1.msra.mxu0 0.0
    %3037 = vmatprep.subr.mxu0 0.0
    %3038 = vmatpush1.msra.mxu0 0.0
    %3039 = vmatprep.subr.mxu0 0.0
    %3040 = vmatpush1.msra.mxu0 0.0
    %3041 = vmatprep.subr.mxu0 0.0
    %3042 = vmatpush1.msra.mxu0 0.0
    %3043 = vmatprep.subr.mxu0 0.0
    %3044 = vmatpush1.msra.mxu0 0.0
    %3045 = vmatprep.subr.mxu0 0.0
    %3046 = vmatpush1.msra.mxu0 0.0
    %3047 = vmatprep.subr.mxu0 0.0
    %3048 = vmatpush1.msra.mxu0 0.0
    %3049 = vmatprep.subr.mxu0 0.0
    %3050 = vmatpush1.msra.mxu0 0.0
    %3051 = vmatprep.subr.mxu0 0.0
    %3052 = vmatpush1.msra.mxu0 0.0
    %3053 = vmatprep.subr.mxu0 0.0
    %3054 = vmatpush1.msra.mxu0 0.0
    %3055 = vmatprep.subr.mxu0 0.0
    %3056 = vmatpush1.msra.mxu0 0.0
    %3057 = vmatprep.subr.mxu0 0.0
    %3058 = vmatpush1.msra.mxu0 0.0
    %3059 = vmatprep.subr.mxu0 0.0
    %3060 = vmatpush1.msra.mxu0 0.0
    %3061 = vmatprep.subr.mxu0 0.0
    %3062 = vmatpush1.msra.mxu0 0.0
    %3063 = vmatprep.subr.mxu0 0.0
    %3064 = vmatpush1.msra.mxu0 0.0
    %3065 = vmatprep.mubr.f32.mxu0 0.0
    %3066 = vmatmul.mubr.f32.gmra.mrb[0].mxu0 %v2999
    %v3067 = vpop.f32.mrb[0].mxu0
    %v3068 = vadd.f32 0.0, %v3067
    %v3069 = vpop.f32.mrb[0].mxu0
    %3070 = vdwg.mxu0
    %v3072 = vsel %vm229, %v2995, 0
    %3074 = vmatprep.subr.mxu0 0.0
    %3075 = vmatpush1.msra.mxu0 %v2296
    %3076 = vmatprep.subr.mxu0 0.0
    %3077 = vmatpush1.msra.mxu0 %v2297
    %3078 = vmatprep.subr.mxu0 0.0
    %3079 = vmatpush1.msra.mxu0 %v2298
    %3080 = vmatprep.subr.mxu0 0.0
    %3081 = vmatpush1.msra.mxu0 %v2299
    %3082 = vmatprep.subr.mxu0 0.0
    %3083 = vmatpush1.msra.mxu0 0.0
    %3084 = vmatprep.subr.mxu0 0.0
    %3085 = vmatpush1.msra.mxu0 0.0
    %3086 = vmatprep.subr.mxu0 0.0
    %3087 = vmatpush1.msra.mxu0 0.0
    %3088 = vmatprep.subr.mxu0 0.0
    %3089 = vmatpush1.msra.mxu0 0.0
    %3090 = vmatprep.subr.mxu0 0.0
    %3091 = vmatpush1.msra.mxu0 0.0
    %3092 = vmatprep.subr.mxu0 0.0
    %3093 = vmatpush1.msra.mxu0 0.0
    %3094 = vmatprep.subr.mxu0 0.0
    %3095 = vmatpush1.msra.mxu0 0.0
    %3096 = vmatprep.subr.mxu0 0.0
    %3097 = vmatpush1.msra.mxu0 0.0
    %3098 = vmatprep.subr.mxu0 0.0
    %3099 = vmatpush1.msra.mxu0 0.0
    %3100 = vmatprep.subr.mxu0 0.0
    %3101 = vmatpush1.msra.mxu0 0.0
    %3102 = vmatprep.subr.mxu0 0.0
    %3103 = vmatpush1.msra.mxu0 0.0
    %3104 = vmatprep.subr.mxu0 0.0
    %3105 = vmatpush1.msra.mxu0 0.0
    %3106 = vmatprep.subr.mxu0 0.0
    %3107 = vmatpush1.msra.mxu0 0.0
    %3108 = vmatprep.subr.mxu0 0.0
    %3109 = vmatpush1.msra.mxu0 0.0
    %3110 = vmatprep.subr.mxu0 0.0
    %3111 = vmatpush1.msra.mxu0 0.0
    %3112 = vmatprep.subr.mxu0 0.0
    %3113 = vmatpush1.msra.mxu0 0.0
    %3114 = vmatprep.subr.mxu0 0.0
    %3115 = vmatpush1.msra.mxu0 0.0
    %3116 = vmatprep.subr.mxu0 0.0
    %3117 = vmatpush1.msra.mxu0 0.0
    %3118 = vmatprep.subr.mxu0 0.0
    %3119 = vmatpush1.msra.mxu0 0.0
    %3120 = vmatprep.subr.mxu0 0.0
    %3121 = vmatpush1.msra.mxu0 0.0
    %3122 = vmatprep.subr.mxu0 0.0
    %3123 = vmatpush1.msra.mxu0 0.0
    %3124 = vmatprep.subr.mxu0 0.0
    %3125 = vmatpush1.msra.mxu0 0.0
    %3126 = vmatprep.subr.mxu0 0.0
    %3127 = vmatpush1.msra.mxu0 0.0
    %3128 = vmatprep.subr.mxu0 0.0
    %3129 = vmatpush1.msra.mxu0 0.0
    %3130 = vmatprep.subr.mxu0 0.0
    %3131 = vmatpush1.msra.mxu0 0.0
    %3132 = vmatprep.subr.mxu0 0.0
    %3133 = vmatpush1.msra.mxu0 0.0
    %3134 = vmatprep.subr.mxu0 0.0
    %3135 = vmatpush1.msra.mxu0 0.0
    %3136 = vmatprep.subr.mxu0 0.0
    %3137 = vmatpush1.msra.mxu0 0.0
    %3138 = vmatprep.mubr.f32.mxu0 0.0
    %3139 = vmatmul.mubr.f32.gmra.mrb[0].mxu0 %v3072
    %v3140 = vpop.f32.mrb[0].mxu0
    %v3141 = vadd.f32 0.0, %v3140
    %v3142 = vpop.f32.mrb[0].mxu0
    %3143 = vdwg.mxu0
    %v3144 = vrot.slane %v2212, 3
    %v3146 = vrot.slane %v2286, 2
    %v3148 = vsel %vm376, %v3144, %v3146
    %v3149 = vrot.slane %v2212, 4
    %v3150 = vrot.slane %v2214, 4
    %v3153 = vrot.slane %v2286, 3
    %v3154 = vrot.slane %v2288, 3
    %v3157 = vsel %vm376, %v3149, %v3153
    %v3158 = vsel %vm376, %v3150, %v3154
    %v3159 = vadd.f32 %v3148, %v3068
    %v3160 = vxor.u32 %v3159, 2147483648
    %v3161 = vmul.f32 %v3160, 1.442695
    %v3162 = vpow.pop %v3161
    %v3163 = vadd.f32 %v3162, 1.0
    %v3164 = vrcp.pop %v3163
    %v3165 = vmul.f32 1.0, %v3164
    %v3166 = vadd.f32 %v3068, %v2479
    %3168 = vrot.lane.b32.xlu0 %v3166, 64
    %v3169 = vpop.permute.xlu0 %3168
    %v3171 = vmul.f32 %v3165, %v3169
    %3173 = vrot.lane.b32.xlu0 %v3171, 64
    %v3174 = vpop.permute.xlu0 %3173
    %v3176 = vadd.f32 %v3148, %v3174
    %v3177 = vtanh.pop %v3176
    %v3178 = vsub.f32 1.0, %v3165
    %3180 = vrot.lane.b32.xlu0 %v3177, 96
    %v3181 = vpop.permute.xlu0 %3180
    %v3183 = vmul.f32 %v3178, %v3181
    %v3184 = vmul.f32 %v3165, %v2957
    %v3185 = vadd.f32 %v3183, %v3184
    %3187 = vrot.lane.b32.xlu0 %v3141, 96
    %v3188 = vpop.permute.xlu0 %3187
    %v3190 = vadd.f32 %v3157, %v3188
    %v3191 = vxor.u32 %v3190, 2147483648
    %v3192 = vmul.f32 %v3191, 1.442695
    %v3193 = vpow.pop %v3192
    %v3194 = vadd.f32 %v3193, 1.0
    %v3195 = vrcp.pop %v3194
    %v3196 = vmul.f32 1.0, %v3195
    %v3197 = vadd.f32 %v3158, %v3188
    %v3198 = vxor.u32 %v3197, 2147483648
    %v3199 = vmul.f32 %v3198, 1.442695
    %v3200 = vpow.pop %v3199
    %v3201 = vadd.f32 %v3200, 1.0
    %v3202 = vrcp.pop %v3201
    %v3203 = vmul.f32 1.0, %v3202
    %v3204 = vadd.f32 %v3141, %v2520
    %3206 = vrot.lane.b32.xlu0 %v3204, 32
    %v3207 = vpop.permute.xlu0 %3206
    %v3209 = vmul.f32 %v3196, %v3207
    %3211 = vrot.lane.b32.xlu0 %v3209, 64
    %v3212 = vpop.permute.xlu0 %3211
    %v3214 = vadd.f32 %v3158, %v3212
    %v3215 = vtanh.pop %v3214
    %v3216 = vsub.f32 1.0, %v3203
    %3218 = vrot.lane.b32.xlu0 %v3215, 96
    %v3219 = vpop.permute.xlu0 %3218
    %v3221 = vmul.f32 %v3216, %v3219
    %v3222 = vmul.f32 %v3203, %v2995
    %v3223 = vadd.f32 %v3221, %v3222
    %3225 = vrot.lane.b32.xlu0 %v3185, 96
    %v3226 = vpop.permute.xlu0 %3225
    %v3227 = vsel %vm229, %v3226, 0
    %3229 = vmatprep.subr.mxu0 0.0
    %3230 = vmatpush1.msra.mxu0 %v2291
    %3231 = vmatprep.subr.mxu0 0.0
    %3232 = vmatpush1.msra.mxu0 %v2292
    %3233 = vmatprep.subr.mxu0 0.0
    %3234 = vmatpush1.msra.mxu0 %v2293
    %3235 = vmatprep.subr.mxu0 0.0
    %3236 = vmatpush1.msra.mxu0 %v2294
    %3237 = vmatprep.subr.mxu0 0.0
    %3238 = vmatpush1.msra.mxu0 0.0
    %3239 = vmatprep.subr.mxu0 0.0
    %3240 = vmatpush1.msra.mxu0 0.0
    %3241 = vmatprep.subr.mxu0 0.0
    %3242 = vmatpush1.msra.mxu0 0.0
    %3243 = vmatprep.subr.mxu0 0.0
    %3244 = vmatpush1.msra.mxu0 0.0
    %3245 = vmatprep.subr.mxu0 0.0
    %3246 = vmatpush1.msra.mxu0 0.0
    %3247 = vmatprep.subr.mxu0 0.0
    %3248 = vmatpush1.msra.mxu0 0.0
    %3249 = vmatprep.subr.mxu0 0.0
    %3250 = vmatpush1.msra.mxu0 0.0
    %3251 = vmatprep.subr.mxu0 0.0
    %3252 = vmatpush1.msra.mxu0 0.0
    %3253 = vmatprep.subr.mxu0 0.0
    %3254 = vmatpush1.msra.mxu0 0.0
    %3255 = vmatprep.subr.mxu0 0.0
    %3256 = vmatpush1.msra.mxu0 0.0
    %3257 = vmatprep.subr.mxu0 0.0
    %3258 = vmatpush1.msra.mxu0 0.0
    %3259 = vmatprep.subr.mxu0 0.0
    %3260 = vmatpush1.msra.mxu0 0.0
    %3261 = vmatprep.subr.mxu0 0.0
    %3262 = vmatpush1.msra.mxu0 0.0
    %3263 = vmatprep.subr.mxu0 0.0
    %3264 = vmatpush1.msra.mxu0 0.0
    %3265 = vmatprep.subr.mxu0 0.0
    %3266 = vmatpush1.msra.mxu0 0.0
    %3267 = vmatprep.subr.mxu0 0.0
    %3268 = vmatpush1.msra.mxu0 0.0
    %3269 = vmatprep.subr.mxu0 0.0
    %3270 = vmatpush1.msra.mxu0 0.0
    %3271 = vmatprep.subr.mxu0 0.0
    %3272 = vmatpush1.msra.mxu0 0.0
    %3273 = vmatprep.subr.mxu0 0.0
    %3274 = vmatpush1.msra.mxu0 0.0
    %3275 = vmatprep.subr.mxu0 0.0
    %3276 = vmatpush1.msra.mxu0 0.0
    %3277 = vmatprep.subr.mxu0 0.0
    %3278 = vmatpush1.msra.mxu0 0.0
    %3279 = vmatprep.subr.mxu0 0.0
    %3280 = vmatpush1.msra.mxu0 0.0
    %3281 = vmatprep.subr.mxu0 0.0
    %3282 = vmatpush1.msra.mxu0 0.0
    %3283 = vmatprep.subr.mxu0 0.0
    %3284 = vmatpush1.msra.mxu0 0.0
    %3285 = vmatprep.subr.mxu0 0.0
    %3286 = vmatpush1.msra.mxu0 0.0
    %3287 = vmatprep.subr.mxu0 0.0
    %3288 = vmatpush1.msra.mxu0 0.0
    %3289 = vmatprep.subr.mxu0 0.0
    %3290 = vmatpush1.msra.mxu0 0.0
    %3291 = vmatprep.subr.mxu0 0.0
    %3292 = vmatpush1.msra.mxu0 0.0
    %3293 = vmatprep.mubr.f32.mxu0 0.0
    %3294 = vmatmul.mubr.f32.gmra.mrb[0].mxu0 %v3227
    %v3295 = vpop.f32.mrb[0].mxu0
    %v3296 = vadd.f32 0.0, %v3295
    %v3297 = vpop.f32.mrb[0].mxu0
    %3298 = vdwg.mxu0
    %v3300 = vsel %vm229, %v3223, 0
    %3302 = vmatprep.subr.mxu0 0.0
    %3303 = vmatpush1.msra.mxu0 %v2296
    %3304 = vmatprep.subr.mxu0 0.0
    %3305 = vmatpush1.msra.mxu0 %v2297
    %3306 = vmatprep.subr.mxu0 0.0
    %3307 = vmatpush1.msra.mxu0 %v2298
    %3308 = vmatprep.subr.mxu0 0.0
    %3309 = vmatpush1.msra.mxu0 %v2299
    %3310 = vmatprep.subr.mxu0 0.0
    %3311 = vmatpush1.msra.mxu0 0.0
    %3312 = vmatprep.subr.mxu0 0.0
    %3313 = vmatpush1.msra.mxu0 0.0
    %3314 = vmatprep.subr.mxu0 0.0
    %3315 = vmatpush1.msra.mxu0 0.0
    %3316 = vmatprep.subr.mxu0 0.0
    %3317 = vmatpush1.msra.mxu0 0.0
    %3318 = vmatprep.subr.mxu0 0.0
    %3319 = vmatpush1.msra.mxu0 0.0
    %3320 = vmatprep.subr.mxu0 0.0
    %3321 = vmatpush1.msra.mxu0 0.0
    %3322 = vmatprep.subr.mxu0 0.0
    %3323 = vmatpush1.msra.mxu0 0.0
    %3324 = vmatprep.subr.mxu0 0.0
    %3325 = vmatpush1.msra.mxu0 0.0
    %3326 = vmatprep.subr.mxu0 0.0
    %3327 = vmatpush1.msra.mxu0 0.0
    %3328 = vmatprep.subr.mxu0 0.0
    %3329 = vmatpush1.msra.mxu0 0.0
    %3330 = vmatprep.subr.mxu0 0.0
    %3331 = vmatpush1.msra.mxu0 0.0
    %3332 = vmatprep.subr.mxu0 0.0
    %3333 = vmatpush1.msra.mxu0 0.0
    %3334 = vmatprep.subr.mxu0 0.0
    %3335 = vmatpush1.msra.mxu0 0.0
    %3336 = vmatprep.subr.mxu0 0.0
    %3337 = vmatpush1.msra.mxu0 0.0
    %3338 = vmatprep.subr.mxu0 0.0
    %3339 = vmatpush1.msra.mxu0 0.0
    %3340 = vmatprep.subr.mxu0 0.0
    %3341 = vmatpush1.msra.mxu0 0.0
    %3342 = vmatprep.subr.mxu0 0.0
    %3343 = vmatpush1.msra.mxu0 0.0
    %3344 = vmatprep.subr.mxu0 0.0
    %3345 = vmatpush1.msra.mxu0 0.0
    %3346 = vmatprep.subr.mxu0 0.0
    %3347 = vmatpush1.msra.mxu0 0.0
    %3348 = vmatprep.subr.mxu0 0.0
    %3349 = vmatpush1.msra.mxu0 0.0
    %3350 = vmatprep.subr.mxu0 0.0
    %3351 = vmatpush1.msra.mxu0 0.0
    %3352 = vmatprep.subr.mxu0 0.0
    %3353 = vmatpush1.msra.mxu0 0.0
    %3354 = vmatprep.subr.mxu0 0.0
    %3355 = vmatpush1.msra.mxu0 0.0
    %3356 = vmatprep.subr.mxu0 0.0
    %3357 = vmatpush1.msra.mxu0 0.0
    %3358 = vmatprep.subr.mxu0 0.0
    %3359 = vmatpush1.msra.mxu0 0.0
    %3360 = vmatprep.subr.mxu0 0.0
    %3361 = vmatpush1.msra.mxu0 0.0
    %3362 = vmatprep.subr.mxu0 0.0
    %3363 = vmatpush1.msra.mxu0 0.0
    %3364 = vmatprep.subr.mxu0 0.0
    %3365 = vmatpush1.msra.mxu0 0.0
    %3366 = vmatprep.mubr.f32.mxu0 0.0
    %3367 = vmatmul.mubr.f32.gmra.mrb[0].mxu0 %v3300
    %v3368 = vpop.f32.mrb[0].mxu0
    %v3369 = vadd.f32 0.0, %v3368
    %v3370 = vpop.f32.mrb[0].mxu0
    %3371 = vdwg.mxu0
    %v3372 = vrot.slane %v2214, 3
    %v3374 = vrot.slane %v2288, 2
    %v3376 = vsel %vm376, %v3372, %v3374
    %v3377 = vadd.f32 %v3157, %v3296
    %v3378 = vxor.u32 %v3377, 2147483648
    %v3379 = vmul.f32 %v3378, 1.442695
    %v3380 = vpow.pop %v3379
    %v3381 = vadd.f32 %v3380, 1.0
    %v3382 = vrcp.pop %v3381
    %v3383 = vmul.f32 1.0, %v3382
    %v3384 = vadd.f32 %v3296, %v2479
    %3386 = vrot.lane.b32.xlu0 %v3384, 64
    %v3387 = vpop.permute.xlu0 %3386
    %v3389 = vmul.f32 %v3383, %v3387
    %3391 = vrot.lane.b32.xlu0 %v3389, 64
    %v3392 = vpop.permute.xlu0 %3391
    %v3394 = vadd.f32 %v3157, %v3392
    %v3395 = vtanh.pop %v3394
    %v3396 = vsub.f32 1.0, %v3383
    %3398 = vrot.lane.b32.xlu0 %v3395, 96
    %v3399 = vpop.permute.xlu0 %3398
    %v3401 = vmul.f32 %v3396, %v3399
    %v3402 = vmul.f32 %v3383, %v3185
    %v3403 = vadd.f32 %v3401, %v3402
    %3405 = vrot.lane.b32.xlu0 %v3369, 96
    %v3406 = vpop.permute.xlu0 %3405
    %v3408 = vadd.f32 %v3148, %v3406
    %v3409 = vxor.u32 %v3408, 2147483648
    %v3410 = vmul.f32 %v3409, 1.442695
    %v3411 = vpow.pop %v3410
    %v3412 = vadd.f32 %v3411, 1.0
    %v3413 = vrcp.pop %v3412
    %v3414 = vmul.f32 1.0, %v3413
    %v3415 = vadd.f32 %v3376, %v3406
    %v3416 = vxor.u32 %v3415, 2147483648
    %v3417 = vmul.f32 %v3416, 1.442695
    %v3418 = vpow.pop %v3417
    %v3419 = vadd.f32 %v3418, 1.0
    %v3420 = vrcp.pop %v3419
    %v3421 = vmul.f32 1.0, %v3420
    %v3422 = vadd.f32 %v3369, %v2520
    %3424 = vrot.lane.b32.xlu0 %v3422, 32
    %v3425 = vpop.permute.xlu0 %3424
    %v3427 = vmul.f32 %v3414, %v3425
    %3429 = vrot.lane.b32.xlu0 %v3427, 64
    %v3430 = vpop.permute.xlu0 %3429
    %v3432 = vadd.f32 %v3376, %v3430
    %v3433 = vtanh.pop %v3432
    %v3434 = vsub.f32 1.0, %v3421
    %3436 = vrot.lane.b32.xlu0 %v3433, 96
    %v3437 = vpop.permute.xlu0 %3436
    %v3439 = vmul.f32 %v3434, %v3437
    %v3440 = vmul.f32 %v3421, %v3223
    %v3441 = vadd.f32 %v3439, %v3440
    %3443 = vrot.lane.b32.xlu0 %v3403, 96
    %v3444 = vpop.permute.xlu0 %3443
    %v3445 = vsel %vm229, %v3444, 0
    %3447 = vmatprep.subr.mxu0 0.0
    %3448 = vmatpush1.msra.mxu0 %v2291
    %3449 = vmatprep.subr.mxu0 0.0
    %3450 = vmatpush1.msra.mxu0 %v2292
    %3451 = vmatprep.subr.mxu0 0.0
    %3452 = vmatpush1.msra.mxu0 %v2293
    %3453 = vmatprep.subr.mxu0 0.0
    %3454 = vmatpush1.msra.mxu0 %v2294
    %3455 = vmatprep.subr.mxu0 0.0
    %3456 = vmatpush1.msra.mxu0 0.0
    %3457 = vmatprep.subr.mxu0 0.0
    %3458 = vmatpush1.msra.mxu0 0.0
    %3459 = vmatprep.subr.mxu0 0.0
    %3460 = vmatpush1.msra.mxu0 0.0
    %3461 = vmatprep.subr.mxu0 0.0
    %3462 = vmatpush1.msra.mxu0 0.0
    %3463 = vmatprep.subr.mxu0 0.0
    %3464 = vmatpush1.msra.mxu0 0.0
    %3465 = vmatprep.subr.mxu0 0.0
    %3466 = vmatpush1.msra.mxu0 0.0
    %3467 = vmatprep.subr.mxu0 0.0
    %3468 = vmatpush1.msra.mxu0 0.0
    %3469 = vmatprep.subr.mxu0 0.0
    %3470 = vmatpush1.msra.mxu0 0.0
    %3471 = vmatprep.subr.mxu0 0.0
    %3472 = vmatpush1.msra.mxu0 0.0
    %3473 = vmatprep.subr.mxu0 0.0
    %3474 = vmatpush1.msra.mxu0 0.0
    %3475 = vmatprep.subr.mxu0 0.0
    %3476 = vmatpush1.msra.mxu0 0.0
    %3477 = vmatprep.subr.mxu0 0.0
    %3478 = vmatpush1.msra.mxu0 0.0
    %3479 = vmatprep.subr.mxu0 0.0
    %3480 = vmatpush1.msra.mxu0 0.0
    %3481 = vmatprep.subr.mxu0 0.0
    %3482 = vmatpush1.msra.mxu0 0.0
    %3483 = vmatprep.subr.mxu0 0.0
    %3484 = vmatpush1.msra.mxu0 0.0
    %3485 = vmatprep.subr.mxu0 0.0
    %3486 = vmatpush1.msra.mxu0 0.0
    %3487 = vmatprep.subr.mxu0 0.0
    %3488 = vmatpush1.msra.mxu0 0.0
    %3489 = vmatprep.subr.mxu0 0.0
    %3490 = vmatpush1.msra.mxu0 0.0
    %3491 = vmatprep.subr.mxu0 0.0
    %3492 = vmatpush1.msra.mxu0 0.0
    %3493 = vmatprep.subr.mxu0 0.0
    %3494 = vmatpush1.msra.mxu0 0.0
    %3495 = vmatprep.subr.mxu0 0.0
    %3496 = vmatpush1.msra.mxu0 0.0
    %3497 = vmatprep.subr.mxu0 0.0
    %3498 = vmatpush1.msra.mxu0 0.0
    %3499 = vmatprep.subr.mxu0 0.0
    %3500 = vmatpush1.msra.mxu0 0.0
    %3501 = vmatprep.subr.mxu0 0.0
    %3502 = vmatpush1.msra.mxu0 0.0
    %3503 = vmatprep.subr.mxu0 0.0
    %3504 = vmatpush1.msra.mxu0 0.0
    %3505 = vmatprep.subr.mxu0 0.0
    %3506 = vmatpush1.msra.mxu0 0.0
    %3507 = vmatprep.subr.mxu0 0.0
    %3508 = vmatpush1.msra.mxu0 0.0
    %3509 = vmatprep.subr.mxu0 0.0
    %3510 = vmatpush1.msra.mxu0 0.0
    %3511 = vmatprep.mubr.f32.mxu0 0.0
    %3512 = vmatmul.mubr.f32.gmra.mrb[0].mxu0 %v3445
    %v3513 = vpop.f32.mrb[0].mxu0
    %v3514 = vadd.f32 0.0, %v3513
    %v3515 = vpop.f32.mrb[0].mxu0
    %3516 = vdwg.mxu0
    %v3518 = vsel %vm229, %v3441, 0
    %3520 = vmatprep.subr.mxu0 0.0
    %3521 = vmatpush1.msra.mxu0 %v2296
    %3522 = vmatprep.subr.mxu0 0.0
    %3523 = vmatpush1.msra.mxu0 %v2297
    %3524 = vmatprep.subr.mxu0 0.0
    %3525 = vmatpush1.msra.mxu0 %v2298
    %3526 = vmatprep.subr.mxu0 0.0
    %3527 = vmatpush1.msra.mxu0 %v2299
    %3528 = vmatprep.subr.mxu0 0.0
    %3529 = vmatpush1.msra.mxu0 0.0
    %3530 = vmatprep.subr.mxu0 0.0
    %3531 = vmatpush1.msra.mxu0 0.0
    %3532 = vmatprep.subr.mxu0 0.0
    %3533 = vmatpush1.msra.mxu0 0.0
    %3534 = vmatprep.subr.mxu0 0.0
    %3535 = vmatpush1.msra.mxu0 0.0
    %3536 = vmatprep.subr.mxu0 0.0
    %3537 = vmatpush1.msra.mxu0 0.0
    %3538 = vmatprep.subr.mxu0 0.0
    %3539 = vmatpush1.msra.mxu0 0.0
    %3540 = vmatprep.subr.mxu0 0.0
    %3541 = vmatpush1.msra.mxu0 0.0
    %3542 = vmatprep.subr.mxu0 0.0
    %3543 = vmatpush1.msra.mxu0 0.0
    %3544 = vmatprep.subr.mxu0 0.0
    %3545 = vmatpush1.msra.mxu0 0.0
    %3546 = vmatprep.subr.mxu0 0.0
    %3547 = vmatpush1.msra.mxu0 0.0
    %3548 = vmatprep.subr.mxu0 0.0
    %3549 = vmatpush1.msra.mxu0 0.0
    %3550 = vmatprep.subr.mxu0 0.0
    %3551 = vmatpush1.msra.mxu0 0.0
    %3552 = vmatprep.subr.mxu0 0.0
    %3553 = vmatpush1.msra.mxu0 0.0
    %3554 = vmatprep.subr.mxu0 0.0
    %3555 = vmatpush1.msra.mxu0 0.0
    %3556 = vmatprep.subr.mxu0 0.0
    %3557 = vmatpush1.msra.mxu0 0.0
    %3558 = vmatprep.subr.mxu0 0.0
    %3559 = vmatpush1.msra.mxu0 0.0
    %3560 = vmatprep.subr.mxu0 0.0
    %3561 = vmatpush1.msra.mxu0 0.0
    %3562 = vmatprep.subr.mxu0 0.0
    %3563 = vmatpush1.msra.mxu0 0.0
    %3564 = vmatprep.subr.mxu0 0.0
    %3565 = vmatpush1.msra.mxu0 0.0
    %3566 = vmatprep.subr.mxu0 0.0
    %3567 = vmatpush1.msra.mxu0 0.0
    %3568 = vmatprep.subr.mxu0 0.0
    %3569 = vmatpush1.msra.mxu0 0.0
    %3570 = vmatprep.subr.mxu0 0.0
    %3571 = vmatpush1.msra.mxu0 0.0
    %3572 = vmatprep.subr.mxu0 0.0
    %3573 = vmatpush1.msra.mxu0 0.0
    %3574 = vmatprep.subr.mxu0 0.0
    %3575 = vmatpush1.msra.mxu0 0.0
    %3576 = vmatprep.subr.mxu0 0.0
    %3577 = vmatpush1.msra.mxu0 0.0
    %3578 = vmatprep.subr.mxu0 0.0
    %3579 = vmatpush1.msra.mxu0 0.0
    %3580 = vmatprep.subr.mxu0 0.0
    %3581 = vmatpush1.msra.mxu0 0.0
    %3582 = vmatprep.subr.mxu0 0.0
    %3583 = vmatpush1.msra.mxu0 0.0
    %3584 = vmatprep.mubr.f32.mxu0 0.0
    %3585 = vmatmul.mubr.f32.gmra.mrb[0].mxu0 %v3518
    %v3586 = vpop.f32.mrb[0].mxu0
    %v3587 = vadd.f32 0.0, %v3586
    %v3588 = vpop.f32.mrb[0].mxu0
    %3589 = vdwg.mxu0
    %v3590 = vrot.slane %v2214, 2
    %v3592 = vrot.slane %v2288, 1
    %v3594 = vsel %vm376, %v3590, %v3592
    %v3595 = vadd.f32 %v2929, %v3514
    %v3596 = vxor.u32 %v3595, 2147483648
    %v3597 = vmul.f32 %v3596, 1.442695
    %v3598 = vpow.pop %v3597
    %v3599 = vadd.f32 %v3598, 1.0
    %v3600 = vrcp.pop %v3599
    %v3601 = vmul.f32 1.0, %v3600
    %v3602 = vadd.f32 %v3514, %v2479
    %3604 = vrot.lane.b32.xlu0 %v3602, 64
    %v3605 = vpop.permute.xlu0 %3604
    %v3607 = vmul.f32 %v3601, %v3605
    %3609 = vrot.lane.b32.xlu0 %v3607, 64
    %v3610 = vpop.permute.xlu0 %3609
    %v3612 = vadd.f32 %v2929, %v3610
    %v3613 = vtanh.pop %v3612
    %v3614 = vsub.f32 1.0, %v3601
    %3616 = vrot.lane.b32.xlu0 %v3613, 96
    %v3617 = vpop.permute.xlu0 %3616
    %v3619 = vmul.f32 %v3614, %v3617
    %v3620 = vmul.f32 %v3601, %v3403
    %v3621 = vadd.f32 %v3619, %v3620
    %3623 = vrot.lane.b32.xlu0 %v3587, 96
    %v3624 = vpop.permute.xlu0 %3623
    %v3626 = vadd.f32 %v2920, %v3624
    %v3627 = vxor.u32 %v3626, 2147483648
    %v3628 = vmul.f32 %v3627, 1.442695
    %v3629 = vpow.pop %v3628
    %v3630 = vadd.f32 %v3629, 1.0
    %v3631 = vrcp.pop %v3630
    %v3632 = vmul.f32 1.0, %v3631
    %v3633 = vadd.f32 %v3594, %v3624
    %v3634 = vxor.u32 %v3633, 2147483648
    %v3635 = vmul.f32 %v3634, 1.442695
    %v3636 = vpow.pop %v3635
    %v3637 = vadd.f32 %v3636, 1.0
    %v3638 = vrcp.pop %v3637
    %v3639 = vmul.f32 1.0, %v3638
    %v3640 = vadd.f32 %v3587, %v2520
    %3642 = vrot.lane.b32.xlu0 %v3640, 32
    %v3643 = vpop.permute.xlu0 %3642
    %v3645 = vmul.f32 %v3632, %v3643
    %3647 = vrot.lane.b32.xlu0 %v3645, 64
    %v3648 = vpop.permute.xlu0 %3647
    %v3650 = vadd.f32 %v3594, %v3648
    %v3651 = vtanh.pop %v3650
    %v3652 = vsub.f32 1.0, %v3639
    %3654 = vrot.lane.b32.xlu0 %v3651, 96
    %v3655 = vpop.permute.xlu0 %3654
    %v3657 = vmul.f32 %v3652, %v3655
    %v3658 = vmul.f32 %v3639, %v3441
    %v3659 = vadd.f32 %v3657, %v3658
    %3661 = vrot.lane.b32.xlu0 %v3621, 96
    %v3662 = vpop.permute.xlu0 %3661
    %v3663 = vsel %vm229, %v3662, 0
    %3665 = vmatprep.subr.mxu0 0.0
    %3666 = vmatpush1.msra.mxu0 %v2291
    %3667 = vmatprep.subr.mxu0 0.0
    %3668 = vmatpush1.msra.mxu0 %v2292
    %3669 = vmatprep.subr.mxu0 0.0
    %3670 = vmatpush1.msra.mxu0 %v2293
    %3671 = vmatprep.subr.mxu0 0.0
    %3672 = vmatpush1.msra.mxu0 %v2294
    %3673 = vmatprep.subr.mxu0 0.0
    %3674 = vmatpush1.msra.mxu0 0.0
    %3675 = vmatprep.subr.mxu0 0.0
    %3676 = vmatpush1.msra.mxu0 0.0
    %3677 = vmatprep.subr.mxu0 0.0
    %3678 = vmatpush1.msra.mxu0 0.0
    %3679 = vmatprep.subr.mxu0 0.0
    %3680 = vmatpush1.msra.mxu0 0.0
    %3681 = vmatprep.subr.mxu0 0.0
    %3682 = vmatpush1.msra.mxu0 0.0
    %3683 = vmatprep.subr.mxu0 0.0
    %3684 = vmatpush1.msra.mxu0 0.0
    %3685 = vmatprep.subr.mxu0 0.0
    %3686 = vmatpush1.msra.mxu0 0.0
    %3687 = vmatprep.subr.mxu0 0.0
    %3688 = vmatpush1.msra.mxu0 0.0
    %3689 = vmatprep.subr.mxu0 0.0
    %3690 = vmatpush1.msra.mxu0 0.0
    %3691 = vmatprep.subr.mxu0 0.0
    %3692 = vmatpush1.msra.mxu0 0.0
    %3693 = vmatprep.subr.mxu0 0.0
    %3694 = vmatpush1.msra.mxu0 0.0
    %3695 = vmatprep.subr.mxu0 0.0
    %3696 = vmatpush1.msra.mxu0 0.0
    %3697 = vmatprep.subr.mxu0 0.0
    %3698 = vmatpush1.msra.mxu0 0.0
    %3699 = vmatprep.subr.mxu0 0.0
    %3700 = vmatpush1.msra.mxu0 0.0
    %3701 = vmatprep.subr.mxu0 0.0
    %3702 = vmatpush1.msra.mxu0 0.0
    %3703 = vmatprep.subr.mxu0 0.0
    %3704 = vmatpush1.msra.mxu0 0.0
    %3705 = vmatprep.subr.mxu0 0.0
    %3706 = vmatpush1.msra.mxu0 0.0
    %3707 = vmatprep.subr.mxu0 0.0
    %3708 = vmatpush1.msra.mxu0 0.0
    %3709 = vmatprep.subr.mxu0 0.0
    %3710 = vmatpush1.msra.mxu0 0.0
    %3711 = vmatprep.subr.mxu0 0.0
    %3712 = vmatpush1.msra.mxu0 0.0
    %3713 = vmatprep.subr.mxu0 0.0
    %3714 = vmatpush1.msra.mxu0 0.0
    %3715 = vmatprep.subr.mxu0 0.0
    %3716 = vmatpush1.msra.mxu0 0.0
    %3717 = vmatprep.subr.mxu0 0.0
    %3718 = vmatpush1.msra.mxu0 0.0
    %3719 = vmatprep.subr.mxu0 0.0
    %3720 = vmatpush1.msra.mxu0 0.0
    %3721 = vmatprep.subr.mxu0 0.0
    %3722 = vmatpush1.msra.mxu0 0.0
    %3723 = vmatprep.subr.mxu0 0.0
    %3724 = vmatpush1.msra.mxu0 0.0
    %3725 = vmatprep.subr.mxu0 0.0
    %3726 = vmatpush1.msra.mxu0 0.0
    %3727 = vmatprep.subr.mxu0 0.0
    %3728 = vmatpush1.msra.mxu0 0.0
    %3729 = vmatprep.mubr.f32.mxu0 0.0
    %3730 = vmatmul.mubr.f32.gmra.mrb[0].mxu0 %v3663
    %v3731 = vpop.f32.mrb[0].mxu0
    %v3732 = vadd.f32 0.0, %v3731
    %v3733 = vpop.f32.mrb[0].mxu0
    %3734 = vdwg.mxu0
    %v3736 = vsel %vm229, %v3659, 0
    %3738 = vmatprep.subr.mxu0 0.0
    %3739 = vmatpush1.msra.mxu0 %v2296
    %3740 = vmatprep.subr.mxu0 0.0
    %3741 = vmatpush1.msra.mxu0 %v2297
    %3742 = vmatprep.subr.mxu0 0.0
    %3743 = vmatpush1.msra.mxu0 %v2298
    %3744 = vmatprep.subr.mxu0 0.0
    %3745 = vmatpush1.msra.mxu0 %v2299
    %3746 = vmatprep.subr.mxu0 0.0
    %3747 = vmatpush1.msra.mxu0 0.0
    %3748 = vmatprep.subr.mxu0 0.0
    %3749 = vmatpush1.msra.mxu0 0.0
    %3750 = vmatprep.subr.mxu0 0.0
    %3751 = vmatpush1.msra.mxu0 0.0
    %3752 = vmatprep.subr.mxu0 0.0
    %3753 = vmatpush1.msra.mxu0 0.0
    %3754 = vmatprep.subr.mxu0 0.0
    %3755 = vmatpush1.msra.mxu0 0.0
    %3756 = vmatprep.subr.mxu0 0.0
    %3757 = vmatpush1.msra.mxu0 0.0
    %3758 = vmatprep.subr.mxu0 0.0
    %3759 = vmatpush1.msra.mxu0 0.0
    %3760 = vmatprep.subr.mxu0 0.0
    %3761 = vmatpush1.msra.mxu0 0.0
    %3762 = vmatprep.subr.mxu0 0.0
    %3763 = vmatpush1.msra.mxu0 0.0
    %3764 = vmatprep.subr.mxu0 0.0
    %3765 = vmatpush1.msra.mxu0 0.0
    %3766 = vmatprep.subr.mxu0 0.0
    %3767 = vmatpush1.msra.mxu0 0.0
    %3768 = vmatprep.subr.mxu0 0.0
    %3769 = vmatpush1.msra.mxu0 0.0
    %3770 = vmatprep.subr.mxu0 0.0
    %3771 = vmatpush1.msra.mxu0 0.0
    %3772 = vmatprep.subr.mxu0 0.0
    %3773 = vmatpush1.msra.mxu0 0.0
    %3774 = vmatprep.subr.mxu0 0.0
    %3775 = vmatpush1.msra.mxu0 0.0
    %3776 = vmatprep.subr.mxu0 0.0
    %3777 = vmatpush1.msra.mxu0 0.0
    %3778 = vmatprep.subr.mxu0 0.0
    %3779 = vmatpush1.msra.mxu0 0.0
    %3780 = vmatprep.subr.mxu0 0.0
    %3781 = vmatpush1.msra.mxu0 0.0
    %3782 = vmatprep.subr.mxu0 0.0
    %3783 = vmatpush1.msra.mxu0 0.0
    %3784 = vmatprep.subr.mxu0 0.0
    %3785 = vmatpush1.msra.mxu0 0.0
    %3786 = vmatprep.subr.mxu0 0.0
    %3787 = vmatpush1.msra.mxu0 0.0
    %3788 = vmatprep.subr.mxu0 0.0
    %3789 = vmatpush1.msra.mxu0 0.0
    %3790 = vmatprep.subr.mxu0 0.0
    %3791 = vmatpush1.msra.mxu0 0.0
    %3792 = vmatprep.subr.mxu0 0.0
    %3793 = vmatpush1.msra.mxu0 0.0
    %3794 = vmatprep.subr.mxu0 0.0
    %3795 = vmatpush1.msra.mxu0 0.0
    %3796 = vmatprep.subr.mxu0 0.0
    %3797 = vmatpush1.msra.mxu0 0.0
    %3798 = vmatprep.subr.mxu0 0.0
    %3799 = vmatpush1.msra.mxu0 0.0
    %3800 = vmatprep.subr.mxu0 0.0
    %3801 = vmatpush1.msra.mxu0 0.0
    %3802 = vmatprep.mubr.f32.mxu0 0.0
    %3803 = vmatmul.mubr.f32.gmra.mrb[0].mxu0 %v3736
    %v3804 = vpop.f32.mrb[0].mxu0
    %v3805 = vadd.f32 0.0, %v3804
    %v3806 = vpop.f32.mrb[0].mxu0
    %3807 = vdwg.mxu0
    %v3808 = vrot.slane %v2214, 1
    %v3810 = vsel %vm376, %v3808, %v2288
    %v3811 = vadd.f32 %v2701, %v3732
    %v3812 = vxor.u32 %v3811, 2147483648
    %v3813 = vmul.f32 %v3812, 1.442695
    %v3814 = vpow.pop %v3813
    %v3815 = vadd.f32 %v3814, 1.0
    %v3816 = vrcp.pop %v3815
    %v3817 = vmul.f32 1.0, %v3816
    %v3818 = vadd.f32 %v3732, %v2479
    %3820 = vrot.lane.b32.xlu0 %v3818, 64
    %v3821 = vpop.permute.xlu0 %3820
    %v3823 = vmul.f32 %v3817, %v3821
    %3825 = vrot.lane.b32.xlu0 %v3823, 64
    %v3826 = vpop.permute.xlu0 %3825
    %v3828 = vadd.f32 %v2701, %v3826
    %v3829 = vtanh.pop %v3828
    %v3830 = vsub.f32 1.0, %v3817
    %3832 = vrot.lane.b32.xlu0 %v3829, 96
    %v3833 = vpop.permute.xlu0 %3832
    %v3835 = vmul.f32 %v3830, %v3833
    %v3836 = vmul.f32 %v3817, %v3621
    %v3837 = vadd.f32 %v3835, %v3836
    %3839 = vrot.lane.b32.xlu0 %v3805, 96
    %v3840 = vpop.permute.xlu0 %3839
    %v3842 = vadd.f32 %v2692, %v3840
    %v3843 = vxor.u32 %v3842, 2147483648
    %v3844 = vmul.f32 %v3843, 1.442695
    %v3845 = vpow.pop %v3844
    %v3846 = vadd.f32 %v3845, 1.0
    %v3847 = vrcp.pop %v3846
    %v3848 = vmul.f32 1.0, %v3847
    %v3849 = vadd.f32 %v3810, %v3840
    %v3850 = vxor.u32 %v3849, 2147483648
    %v3851 = vmul.f32 %v3850, 1.442695
    %v3852 = vpow.pop %v3851
    %v3853 = vadd.f32 %v3852, 1.0
    %v3854 = vrcp.pop %v3853
    %v3855 = vmul.f32 1.0, %v3854
    %v3856 = vadd.f32 %v3805, %v2520
    %3858 = vrot.lane.b32.xlu0 %v3856, 32
    %v3859 = vpop.permute.xlu0 %3858
    %v3861 = vmul.f32 %v3848, %v3859
    %3863 = vrot.lane.b32.xlu0 %v3861, 64
    %v3864 = vpop.permute.xlu0 %3863
    %v3866 = vadd.f32 %v3810, %v3864
    %v3867 = vtanh.pop %v3866
    %v3868 = vsub.f32 1.0, %v3855
    %3870 = vrot.lane.b32.xlu0 %v3867, 96
    %v3871 = vpop.permute.xlu0 %3870
    %v3873 = vmul.f32 %v3868, %v3871
    %v3874 = vmul.f32 %v3855, %v3659
    %v3875 = vadd.f32 %v3873, %v3874
    %3877 = vrot.lane.b32.xlu0 %v3837, 96
    %v3878 = vpop.permute.xlu0 %3877
    %v3879 = vsel %vm229, %v3878, 0
    %3881 = vmatprep.subr.mxu0 0.0
    %3882 = vmatpush1.msra.mxu0 %v2291
    %3883 = vmatprep.subr.mxu0 0.0
    %3884 = vmatpush1.msra.mxu0 %v2292
    %3885 = vmatprep.subr.mxu0 0.0
    %3886 = vmatpush1.msra.mxu0 %v2293
    %3887 = vmatprep.subr.mxu0 0.0
    %3888 = vmatpush1.msra.mxu0 %v2294
    %3889 = vmatprep.subr.mxu0 0.0
    %3890 = vmatpush1.msra.mxu0 0.0
    %3891 = vmatprep.subr.mxu0 0.0
    %3892 = vmatpush1.msra.mxu0 0.0
    %3893 = vmatprep.subr.mxu0 0.0
    %3894 = vmatpush1.msra.mxu0 0.0
    %3895 = vmatprep.subr.mxu0 0.0
    %3896 = vmatpush1.msra.mxu0 0.0
    %3897 = vmatprep.subr.mxu0 0.0
    %3898 = vmatpush1.msra.mxu0 0.0
    %3899 = vmatprep.subr.mxu0 0.0
    %3900 = vmatpush1.msra.mxu0 0.0
    %3901 = vmatprep.subr.mxu0 0.0
    %3902 = vmatpush1.msra.mxu0 0.0
    %3903 = vmatprep.subr.mxu0 0.0
    %3904 = vmatpush1.msra.mxu0 0.0
    %3905 = vmatprep.subr.mxu0 0.0
    %3906 = vmatpush1.msra.mxu0 0.0
    %3907 = vmatprep.subr.mxu0 0.0
    %3908 = vmatpush1.msra.mxu0 0.0
    %3909 = vmatprep.subr.mxu0 0.0
    %3910 = vmatpush1.msra.mxu0 0.0
    %3911 = vmatprep.subr.mxu0 0.0
    %3912 = vmatpush1.msra.mxu0 0.0
    %3913 = vmatprep.subr.mxu0 0.0
    %3914 = vmatpush1.msra.mxu0 0.0
    %3915 = vmatprep.subr.mxu0 0.0
    %3916 = vmatpush1.msra.mxu0 0.0
    %3917 = vmatprep.subr.mxu0 0.0
    %3918 = vmatpush1.msra.mxu0 0.0
    %3919 = vmatprep.subr.mxu0 0.0
    %3920 = vmatpush1.msra.mxu0 0.0
    %3921 = vmatprep.subr.mxu0 0.0
    %3922 = vmatpush1.msra.mxu0 0.0
    %3923 = vmatprep.subr.mxu0 0.0
    %3924 = vmatpush1.msra.mxu0 0.0
    %3925 = vmatprep.subr.mxu0 0.0
    %3926 = vmatpush1.msra.mxu0 0.0
    %3927 = vmatprep.subr.mxu0 0.0
    %3928 = vmatpush1.msra.mxu0 0.0
    %3929 = vmatprep.subr.mxu0 0.0
    %3930 = vmatpush1.msra.mxu0 0.0
    %3931 = vmatprep.subr.mxu0 0.0
    %3932 = vmatpush1.msra.mxu0 0.0
    %3933 = vmatprep.subr.mxu0 0.0
    %3934 = vmatpush1.msra.mxu0 0.0
    %3935 = vmatprep.subr.mxu0 0.0
    %3936 = vmatpush1.msra.mxu0 0.0
    %3937 = vmatprep.subr.mxu0 0.0
    %3938 = vmatpush1.msra.mxu0 0.0
    %3939 = vmatprep.subr.mxu0 0.0
    %3940 = vmatpush1.msra.mxu0 0.0
    %3941 = vmatprep.subr.mxu0 0.0
    %3942 = vmatpush1.msra.mxu0 0.0
    %3943 = vmatprep.subr.mxu0 0.0
    %3944 = vmatpush1.msra.mxu0 0.0
    %3945 = vmatprep.mubr.f32.mxu0 0.0
    %3946 = vmatmul.mubr.f32.gmra.mrb[0].mxu0 %v3879
    %v3947 = vpop.f32.mrb[0].mxu0
    %v3948 = vadd.f32 0.0, %v3947
    %v3949 = vpop.f32.mrb[0].mxu0
    %3950 = vdwg.mxu0
    %v3952 = vsel %vm229, %v3875, 0
    %3954 = vmatprep.subr.mxu0 0.0
    %3955 = vmatpush1.msra.mxu0 %v2296
    %3956 = vmatprep.subr.mxu0 0.0
    %3957 = vmatpush1.msra.mxu0 %v2297
    %3958 = vmatprep.subr.mxu0 0.0
    %3959 = vmatpush1.msra.mxu0 %v2298
    %3960 = vmatprep.subr.mxu0 0.0
    %3961 = vmatpush1.msra.mxu0 %v2299
    %3962 = vmatprep.subr.mxu0 0.0
    %3963 = vmatpush1.msra.mxu0 0.0
    %3964 = vmatprep.subr.mxu0 0.0
    %3965 = vmatpush1.msra.mxu0 0.0
    %3966 = vmatprep.subr.mxu0 0.0
    %3967 = vmatpush1.msra.mxu0 0.0
    %3968 = vmatprep.subr.mxu0 0.0
    %3969 = vmatpush1.msra.mxu0 0.0
    %3970 = vmatprep.subr.mxu0 0.0
    %3971 = vmatpush1.msra.mxu0 0.0
    %3972 = vmatprep.subr.mxu0 0.0
    %3973 = vmatpush1.msra.mxu0 0.0
    %3974 = vmatprep.subr.mxu0 0.0
    %3975 = vmatpush1.msra.mxu0 0.0
    %3976 = vmatprep.subr.mxu0 0.0
    %3977 = vmatpush1.msra.mxu0 0.0
    %3978 = vmatprep.subr.mxu0 0.0
    %3979 = vmatpush1.msra.mxu0 0.0
    %3980 = vmatprep.subr.mxu0 0.0
    %3981 = vmatpush1.msra.mxu0 0.0
    %3982 = vmatprep.subr.mxu0 0.0
    %3983 = vmatpush1.msra.mxu0 0.0
    %3984 = vmatprep.subr.mxu0 0.0
    %3985 = vmatpush1.msra.mxu0 0.0
    %3986 = vmatprep.subr.mxu0 0.0
    %3987 = vmatpush1.msra.mxu0 0.0
    %3988 = vmatprep.subr.mxu0 0.0
    %3989 = vmatpush1.msra.mxu0 0.0
    %3990 = vmatprep.subr.mxu0 0.0
    %3991 = vmatpush1.msra.mxu0 0.0
    %3992 = vmatprep.subr.mxu0 0.0
    %3993 = vmatpush1.msra.mxu0 0.0
    %3994 = vmatprep.subr.mxu0 0.0
    %3995 = vmatpush1.msra.mxu0 0.0
    %3996 = vmatprep.subr.mxu0 0.0
    %3997 = vmatpush1.msra.mxu0 0.0
    %3998 = vmatprep.subr.mxu0 0.0
    %3999 = vmatpush1.msra.mxu0 0.0
    %4000 = vmatprep.subr.mxu0 0.0
    %4001 = vmatpush1.msra.mxu0 0.0
    %4002 = vmatprep.subr.mxu0 0.0
    %4003 = vmatpush1.msra.mxu0 0.0
    %4004 = vmatprep.subr.mxu0 0.0
    %4005 = vmatpush1.msra.mxu0 0.0
    %4006 = vmatprep.subr.mxu0 0.0
    %4007 = vmatpush1.msra.mxu0 0.0
    %4008 = vmatprep.subr.mxu0 0.0
    %4009 = vmatpush1.msra.mxu0 0.0
    %4010 = vmatprep.subr.mxu0 0.0
    %4011 = vmatpush1.msra.mxu0 0.0
    %4012 = vmatprep.subr.mxu0 0.0
    %4013 = vmatpush1.msra.mxu0 0.0
    %4014 = vmatprep.subr.mxu0 0.0
    %4015 = vmatpush1.msra.mxu0 0.0
    %4016 = vmatprep.subr.mxu0 0.0
    %4017 = vmatpush1.msra.mxu0 0.0
    %4018 = vmatprep.mubr.f32.mxu0 0.0
    %4019 = vmatmul.mubr.f32.gmra.mrb[0].mxu0 %v3952
    %v4020 = vpop.f32.mrb[0].mxu0
    %v4021 = vadd.f32 0.0, %v4020
    %v4022 = vpop.f32.mrb[0].mxu0
    %4023 = vdwg.mxu0
    %v4024 = vrot.slane %v2288, 7
    %v4026 = vsel %vm376, %v2214, %v4024
    %v4027 = vadd.f32 %v2469, %v3948
    %v4028 = vxor.u32 %v4027, 2147483648
    %v4029 = vmul.f32 %v4028, 1.442695
    %v4030 = vpow.pop %v4029
    %v4031 = vadd.f32 %v4030, 1.0
    %v4032 = vrcp.pop %v4031
    %v4033 = vmul.f32 1.0, %v4032
    %v4034 = vadd.f32 %v3948, %v2479
    %4036 = vrot.lane.b32.xlu0 %v4034, 64
    %v4037 = vpop.permute.xlu0 %4036
    %v4039 = vmul.f32 %v4033, %v4037
    %4041 = vrot.lane.b32.xlu0 %v4039, 64
    %v4042 = vpop.permute.xlu0 %4041
    %v4044 = vadd.f32 %v2469, %v4042
    %v4045 = vtanh.pop %v4044
    %v4046 = vsub.f32 1.0, %v4033
    %4048 = vrot.lane.b32.xlu0 %v4045, 96
    %v4049 = vpop.permute.xlu0 %4048
    %v4051 = vmul.f32 %v4046, %v4049
    %v4052 = vmul.f32 %v4033, %v3837
    %v4053 = vadd.f32 %v4051, %v4052
    %4055 = vrot.lane.b32.xlu0 %v4021, 96
    %v4056 = vpop.permute.xlu0 %4055
    %v4058 = vadd.f32 %v2457, %v4056
    %v4059 = vxor.u32 %v4058, 2147483648
    %v4060 = vmul.f32 %v4059, 1.442695
    %v4061 = vpow.pop %v4060
    %v4062 = vadd.f32 %v4061, 1.0
    %v4063 = vrcp.pop %v4062
    %v4064 = vmul.f32 1.0, %v4063
    %v4065 = vadd.f32 %v4026, %v4056
    %v4066 = vxor.u32 %v4065, 2147483648
    %v4067 = vmul.f32 %v4066, 1.442695
    %v4068 = vpow.pop %v4067
    %v4069 = vadd.f32 %v4068, 1.0
    %v4070 = vrcp.pop %v4069
    %v4071 = vmul.f32 1.0, %v4070
    %v4072 = vadd.f32 %v4021, %v2520
    %4074 = vrot.lane.b32.xlu0 %v4072, 32
    %v4075 = vpop.permute.xlu0 %4074
    %v4077 = vmul.f32 %v4064, %v4075
    %4079 = vrot.lane.b32.xlu0 %v4077, 64
    %v4080 = vpop.permute.xlu0 %4079
    %v4082 = vadd.f32 %v4026, %v4080
    %v4083 = vtanh.pop %v4082
    %v4084 = vsub.f32 1.0, %v4071
    %4086 = vrot.lane.b32.xlu0 %v4083, 96
    %v4087 = vpop.permute.xlu0 %4086
    %v4089 = vmul.f32 %v4084, %v4087
    %v4090 = vmul.f32 %v4071, %v3875
    %v4091 = vadd.f32 %v4089, %v4090
    %4093 = vrot.lane.b32.xlu0 %v4053, 96
    %v4094 = vpop.permute.xlu0 %4093
    %4097 = vrot.lane.b32.xlu0 %v4091, 32
    %v4098 = vpop.permute.xlu0 %4097
    %v4100 = vsel %vm229, %v4094, %v4098
    %v4101 = vld [vmem:[%s5] sm:$0xff]
    %v4102 = vld [vmem:[%s5 + $0x8] sm:$0xff]
    %v4103 = vld [vmem:[%s5 + $0x10] sm:$0xff]
    %v4104 = vld [vmem:[%s5 + $0x18] sm:$0xff]
    %v4105 = vld [vmem:[%s5 + $0x20] sm:$0xff]
    %v4106 = vld [vmem:[%s5 + $0x28] sm:$0xff]
    %v4107 = vld [vmem:[%s5 + $0x30] sm:$0xff]
    %v4108 = vld [vmem:[%s5 + $0x38] sm:$0xff]
    %v4109 = vld [vmem:[%s6] sm:$0x1]
    %v4111 = vlaneseq
    %v4112 = vshrl.u32 %v4111, 7
    %v4113 = vsub.s32 0, %v4112
    %v4114 = vrot.slane %v4109, %v4113
    %v4117 = vsel %vm58, %v4100, 0
    %4119 = vmatprep.subr.mxu0 0.0
    %4120 = vmatpush1.msra.mxu0 %v4101
    %4121 = vmatprep.subr.mxu0 0.0
    %4122 = vmatpush1.msra.mxu0 %v4102
    %4123 = vmatprep.subr.mxu0 0.0
    %4124 = vmatpush1.msra.mxu0 %v4103
    %4125 = vmatprep.subr.mxu0 0.0
    %4126 = vmatpush1.msra.mxu0 %v4104
    %4127 = vmatprep.subr.mxu0 0.0
    %4128 = vmatpush1.msra.mxu0 %v4105
    %4129 = vmatprep.subr.mxu0 0.0
    %4130 = vmatpush1.msra.mxu0 %v4106
    %4131 = vmatprep.subr.mxu0 0.0
    %4132 = vmatpush1.msra.mxu0 %v4107
    %4133 = vmatprep.subr.mxu0 0.0
    %4134 = vmatpush1.msra.mxu0 %v4108
    %4135 = vmatprep.subr.mxu0 0.0
    %4136 = vmatpush1.msra.mxu0 0.0
    %4137 = vmatprep.subr.mxu0 0.0
    %4138 = vmatpush1.msra.mxu0 0.0
    %4139 = vmatprep.subr.mxu0 0.0
    %4140 = vmatpush1.msra.mxu0 0.0
    %4141 = vmatprep.subr.mxu0 0.0
    %4142 = vmatpush1.msra.mxu0 0.0
    %4143 = vmatprep.subr.mxu0 0.0
    %4144 = vmatpush1.msra.mxu0 0.0
    %4145 = vmatprep.subr.mxu0 0.0
    %4146 = vmatpush1.msra.mxu0 0.0
    %4147 = vmatprep.subr.mxu0 0.0
    %4148 = vmatpush1.msra.mxu0 0.0
    %4149 = vmatprep.subr.mxu0 0.0
    %4150 = vmatpush1.msra.mxu0 0.0
    %4151 = vmatprep.subr.mxu0 0.0
    %4152 = vmatpush1.msra.mxu0 0.0
    %4153 = vmatprep.subr.mxu0 0.0
    %4154 = vmatpush1.msra.mxu0 0.0
    %4155 = vmatprep.subr.mxu0 0.0
    %4156 = vmatpush1.msra.mxu0 0.0
    %4157 = vmatprep.subr.mxu0 0.0
    %4158 = vmatpush1.msra.mxu0 0.0
    %4159 = vmatprep.subr.mxu0 0.0
    %4160 = vmatpush1.msra.mxu0 0.0
    %4161 = vmatprep.subr.mxu0 0.0
    %4162 = vmatpush1.msra.mxu0 0.0
    %4163 = vmatprep.subr.mxu0 0.0
    %4164 = vmatpush1.msra.mxu0 0.0
    %4165 = vmatprep.subr.mxu0 0.0
    %4166 = vmatpush1.msra.mxu0 0.0
    %4167 = vmatprep.subr.mxu0 0.0
    %4168 = vmatpush1.msra.mxu0 0.0
    %4169 = vmatprep.subr.mxu0 0.0
    %4170 = vmatpush1.msra.mxu0 0.0
    %4171 = vmatprep.subr.mxu0 0.0
    %4172 = vmatpush1.msra.mxu0 0.0
    %4173 = vmatprep.subr.mxu0 0.0
    %4174 = vmatpush1.msra.mxu0 0.0
    %4175 = vmatprep.subr.mxu0 0.0
    %4176 = vmatpush1.msra.mxu0 0.0
    %4177 = vmatprep.subr.mxu0 0.0
    %4178 = vmatpush1.msra.mxu0 0.0
    %4179 = vmatprep.subr.mxu0 0.0
    %4180 = vmatpush1.msra.mxu0 0.0
    %4181 = vmatprep.subr.mxu0 0.0
    %4182 = vmatpush1.msra.mxu0 0.0
    %4183 = vmatprep.mubr.f32.mxu0 0.0
    %4184 = vmatmul.mubr.f32.gmra.mrb[0].mxu0 %v4117
    %v4185 = vpop.f32.mrb[0].mxu0
    %v4186 = vadd.f32 %v4114, %v4185
    %v4187 = vpop.f32.mrb[0].mxu0
    %4188 = vdwg.mxu0
    %vm4189 = vcmask 9216
    %4190 = vst.msk [vmem:[#allocation2] sm:$0x3] %vm4189, %v4186
    // Predicated region
    $region30: #{bert_gru_sentiment.1} parent=1 // pred_check
      _
    $region31: #{bert_gru_sentiment.1} parent=1 // pred_check_branch
      %4192 = sbr.rel (0) target = $region33
    $region32: #{bert_gru_sentiment.1} parent=1 // pred_region
      %s4194 = ssub.s32 32, 32
      %4195 = vsyncadd [#allocation3], %s4194
      %s4197 = sshll.u32 [#allocation2], 4
      %s4198 = int_to_ptr.vmem [resolvable:$true] %s4197
      %4200 = dma.vmem_to_hbm [thread:$0]  %s4198, 32, %s7, [#allocation3]
    $region33: #{bert_gru_sentiment.1} parent=1 // pred_fallthru
      _
    // Predicated region
    $region34: #{bert_gru_sentiment.1} parent=1 // pred_check
      _
    $region35: #{bert_gru_sentiment.1} parent=1 // pred_check_branch
      %4202 = sbr.rel (0) target = $region37
    $region36: #{bert_gru_sentiment.1} parent=1 // pred_region
      %4203 = dma.done [#allocation3], 32
    $region37: #{bert_gru_sentiment.1} parent=1 // pred_fallthru
      _
    %4204 = vsyncpa [#allocation3], 1

</llo_original>
